<compile_context>
chip_gen: v7x
topology: tpu7x:2x2x1
jax: 0.10.0
libtpu: 0.0.40
codegen_flags: <defaults>
</compile_context>

<pallas_src>
import jax
import jax.numpy as jnp
from jax.experimental import pallas as pl
from jax.experimental.pallas import tpu as pltpu


MAX_CONV_TILE_ROWS = 1024   # multiple of 8; ~9 MiB VMEM peak incl. double-buffer
MAX_MLP_TILE_ROWS = 512     # multiple of 8


def _round_up(n, m):
    return (n + m - 1) // m * m


# -----------------------------------------------------------------------------
# Pallas kernels
# -----------------------------------------------------------------------------
def conv_tanh_pool_kernel(p_ref, w_ref, b_ref, o_ref):
    """Fused (im2col-conv @ W) -> 2x2 maxpool -> (+bias) -> tanh.

    p_ref: (4, T, KKC)  window-major patches: p_ref[wi] is the (T, KKC) patch
                        slab for element wi of each 2x2 pooling window.
    w_ref: (KKC, Cout)  VMEM-resident weights.
    b_ref: (1, Cout)
    o_ref: (T, Cout)    one output row per pooling window.
    """
    w = w_ref[...]
    # Raw conv outputs for the 4 pool-window elements (static unroll; each
    # operand is a contiguous, sublane-packed slab).
    d0 = jnp.dot(p_ref[0], w, preferred_element_type=jnp.float32)
    d1 = jnp.dot(p_ref[1], w, preferred_element_type=jnp.float32)
    d2 = jnp.dot(p_ref[2], w, preferred_element_type=jnp.float32)
    d3 = jnp.dot(p_ref[3], w, preferred_element_type=jnp.float32)
    # Balanced max tree; bias/tanh hoisted out of the pool reduction
    # (tanh is monotonically increasing, so this matches tanh->pool exactly).
    m = jnp.maximum(jnp.maximum(d0, d1), jnp.maximum(d2, d3))
    o_ref[...] = jnp.tanh(m + b_ref[...]).astype(o_ref.dtype)


def mlp_kernel(x_ref, w1_ref, b1_ref, w2_ref, b2_ref, w3_ref, b3_ref, o_ref):
    """Fused fc1 -> tanh -> fc2 -> tanh -> fc3 on one batch tile."""
    h = jnp.tanh(jnp.dot(x_ref[...], w1_ref[...],
                         preferred_element_type=jnp.float32) + b1_ref[...])
    h = jnp.tanh(jnp.dot(h, w2_ref[...],
                         preferred_element_type=jnp.float32) + b2_ref[...])
    o_ref[...] = (jnp.dot(h, w3_ref[...],
                          preferred_element_type=jnp.float32)
                  + b3_ref[...]).astype(o_ref.dtype)


# -----------------------------------------------------------------------------
# Pallas call wrappers
# -----------------------------------------------------------------------------
def conv_tanh_pool(p, w, b):
    """p: (4, N_pad, KKC) with N_pad % 8 == 0 -> (N_pad, Cout)."""
    _, n_pad, kkc = p.shape
    cout = w.shape[1]
    tile_n = n_pad if n_pad <= MAX_CONV_TILE_ROWS else MAX_CONV_TILE_ROWS
    return pl.pallas_call(
        conv_tanh_pool_kernel,
        out_shape=jax.ShapeDtypeStruct((n_pad, cout), jnp.float32),
        grid=(pl.cdiv(n_pad, tile_n),),
        in_specs=[
            pl.BlockSpec((4, tile_n, kkc), lambda i: (0, i, 0)),
            pl.BlockSpec((kkc, cout), lambda i: (0, 0)),   # resident
            pl.BlockSpec((1, cout), lambda i: (0, 0)),     # resident
        ],
        out_specs=pl.BlockSpec((tile_n, cout), lambda i: (i, 0)),
        compiler_params=pltpu.CompilerParams(
            dimension_semantics=("parallel",)),
    )(p, w, b)


def mlp(x, w1, b1, w2, b2, w3, b3):
    bsz, d_in = x.shape
    h1, h2, d_out = w1.shape[1], w2.shape[1], w3.shape[1]
    tile_b = bsz if bsz <= MAX_MLP_TILE_ROWS else MAX_MLP_TILE_ROWS
    return pl.pallas_call(
        mlp_kernel,
        out_shape=jax.ShapeDtypeStruct((bsz, d_out), jnp.float32),
        grid=(pl.cdiv(bsz, tile_b),),
        in_specs=[
            pl.BlockSpec((tile_b, d_in), lambda i: (i, 0)),
            pl.BlockSpec((d_in, h1), lambda i: (0, 0)),    # resident
            pl.BlockSpec((1, h1), lambda i: (0, 0)),
            pl.BlockSpec((h1, h2), lambda i: (0, 0)),
            pl.BlockSpec((1, h2), lambda i: (0, 0)),
            pl.BlockSpec((h2, d_out), lambda i: (0, 0)),
            pl.BlockSpec((1, d_out), lambda i: (0, 0)),
        ],
        out_specs=pl.BlockSpec((tile_b, d_out), lambda i: (i, 0)),
        compiler_params=pltpu.CompilerParams(
            dimension_semantics=("parallel",)),
    )(x, w1, b1, w2, b2, w3, b3)


# -----------------------------------------------------------------------------
# Glue: window-major im2col (plain JAX, no compute; strided slices, no big
# transpose).  Patch feature order is (kh, kw, cin); rows ordered (b, i, j).
# -----------------------------------------------------------------------------
def im2col_pool_grouped(x_nhwc, k):
    """x: (B, H, W, C) -> (4, N_pad, k*k*C), plus (ph, pw, N_valid).

    Axis 0 indexes the 2x2 maxpool window element; row (b, i, j) of slab wi is
    the conv patch producing conv-output (2i+dy, 2j+dx) for wi = 2*dy + dx.
    Rows are zero-padded up to a multiple of 8.
    """
    b, h, w, c = x_nhwc.shape
    oh, ow = h - k + 1, w - k + 1
    ph, pw = oh // 2, ow // 2
    n = b * ph * pw
    n_pad = _round_up(n, 8)
    groups = []
    for dy in range(2):
        for dx in range(2):
            cols = []
            for kh in range(k):
                for kw in range(k):
                    sl = x_nhwc[:, dy + kh::2, dx + kw::2, :][:, :ph, :pw, :]
                    cols.append(sl)                              # (B,ph,pw,C)
            g = jnp.stack(cols, axis=3).reshape(n, k * k * c)    # (N, KKC)
            groups.append(g)
    p = jnp.stack(groups, axis=0)                                # (4, N, KKC)
    if n_pad != n:
        p = jnp.pad(p, ((0, 0), (0, n_pad - n), (0, 0)))
    return p, ph, pw, n


# -----------------------------------------------------------------------------
# Parameters (deterministic, PyTorch-default-style uniform init) and one-time
# conversion to kernel layout.
# -----------------------------------------------------------------------------
def init_params(key):
    def uniform(key, shape, fan_in):
        bound = 1.0 / jnp.sqrt(jnp.float32(fan_in))
        return jax.random.uniform(key, shape, jnp.float32, -bound, bound)

    ks = jax.random.split(key, 10)
    return {
        # conv weights in PyTorch OIHW layout
        "conv1_w": uniform(ks[0], (6, 3, 5, 5), 3 * 5 * 5),
        "conv1_b": uniform(ks[1], (6,), 3 * 5 * 5),
        "conv2_w": uniform(ks[2], (16, 6, 5, 5), 6 * 5 * 5),
        "conv2_b": uniform(ks[3], (16,), 6 * 5 * 5),
        # linear weights in PyTorch (out, in) layout
        "fc1_w": uniform(ks[4], (120, 400), 400),
        "fc1_b": uniform(ks[5], (120,), 400),
        "fc2_w": uniform(ks[6], (84, 120), 120),
        "fc2_b": uniform(ks[7], (84,), 120),
        "fc3_w": uniform(ks[8], (10, 84), 84),
        "fc3_b": uniform(ks[9], (10,), 84),
    }


def prepare_params(params):
    """One-time conversion of PyTorch-layout weights to kernel layout."""
    kp = {}
    # conv: OIHW -> (kh, kw, cin, cout) -> (KKC, Cout)
    kp["conv1_w"] = params["conv1_w"].transpose(2, 3, 1, 0).reshape(75, 6)
    kp["conv1_b"] = params["conv1_b"].reshape(1, 6)
    kp["conv2_w"] = params["conv2_w"].transpose(2, 3, 1, 0).reshape(150, 16)
    kp["conv2_b"] = params["conv2_b"].reshape(1, 16)
    # fc1: store (in, out) AND permute input rows from torch's CHW flatten to
    # HWC flatten, so the NHWC conv2 output flattens directly (exact permute,
    # no numerics change, removes the activation transpose from the forward).
    kp["fc1_w"] = (params["fc1_w"].reshape(120, 16, 5, 5)
                   .transpose(2, 3, 1, 0).reshape(400, 120))
    kp["fc1_b"] = params["fc1_b"].reshape(1, 120)
    kp["fc2_w"] = params["fc2_w"].T                      # (120, 84)
    kp["fc2_b"] = params["fc2_b"].reshape(1, 84)
    kp["fc3_w"] = params["fc3_w"].T                      # (84, 10)
    kp["fc3_b"] = params["fc3_b"].reshape(1, 10)
    return kp


# -----------------------------------------------------------------------------
# Full forward (Pallas) and pure-JAX reference
# -----------------------------------------------------------------------------
@jax.jit
def mode11_forward_pallas(x_nchw, kp):
    b = x_nchw.shape[0]
    x = jnp.transpose(x_nchw, (0, 2, 3, 1))                       # NCHW -> NHWC

    # stage 1: conv1(3->6, 5x5) -> tanh -> maxpool 2x2
    p1, ph1, pw1, n1 = im2col_pool_grouped(x, 5)                  # (4, B*196p, 75)
    y1 = conv_tanh_pool(p1, kp["conv1_w"], kp["conv1_b"])[:n1]    # (B*196, 6)
    y1 = y1.reshape(b, ph1, pw1, 6)                               # NHWC (B,14,14,6)

    # stage 2: conv2(6->16, 5x5) -> tanh -> maxpool 2x2
    p2, ph2, pw2, n2 = im2col_pool_grouped(y1, 5)                 # (4, B*25p, 150)
    y2 = conv_tanh_pool(p2, kp["conv2_w"], kp["conv2_b"])[:n2]    # (B*25, 16)

    # HWC flatten (fc1 rows were pre-permuted to match torch's CHW flatten)
    flat = y2.reshape(b, ph2 * pw2 * 16)                          # (B, 400)

    # fused MLP: fc1 -> tanh -> fc2 -> tanh -> fc3
    return mlp(flat, kp["fc1_w"], kp["fc1_b"], kp["fc2_w"], kp["fc2_b"],
               kp["fc3_w"], kp["fc3_b"])


def mode11_forward_reference(x_nchw, params):
    def conv(x, w, bias):
        y = jax.lax.conv_general_dilated(
            x, w, (1, 1), "VALID",
            dimension_numbers=("NCHW", "OIHW", "NCHW"))
        return y + bias[None, :, None, None]

    def maxpool2(x):
        return jax.lax.reduce_window(
            x, -jnp.inf, jax.lax.max, (1, 1, 2, 2), (1, 1, 2, 2), "VALID")

    y = maxpool2(jnp.tanh(conv(x_nchw, params["conv1_w"], params["conv1_b"])))
    y = maxpool2(jnp.tanh(conv(y, params["conv2_w"], params["conv2_b"])))
    y = y.reshape(y.shape[0], -1)
    y = jnp.tanh(y @ params["fc1_w"].T + params["fc1_b"])
    y = jnp.tanh(y @ params["fc2_w"].T + params["fc2_b"])
    return y @ params["fc3_w"].T + params["fc3_b"]


if __name__ == "__main__":
    key = jax.random.PRNGKey(0)
    pkey, xkey = jax.random.split(key)
    params = init_params(pkey)
    kparams = prepare_params(params)   # one-time layout conversion (outside jit)

    # Module implies 32x32 RGB input (16*5*5 flatten after two conv+pool).
    x = jax.random.normal(xkey, (2, 3, 32, 32), dtype=jnp.float32)

    out = jax.block_until_ready(mode11_forward_pallas(x, kparams))
    ref = jax.block_until_ready(mode11_forward_reference(x, params))

    assert out.shape == (2, 10), out.shape
    max_err = float(jnp.max(jnp.abs(out - ref)))
    assert jnp.allclose(out, ref, atol=1e-4, rtol=1e-4), max_err
    print("KERNEL_OK")
</pallas_src>

<mosaic_0001>
module attributes {stable_mosaic.version = 11 : i64} {
  func.func @conv_tanh_pool_kernel(%arg0: i32, %arg1: memref<4x392x75xf32, #tpu.memory_space<vmem>>, %arg2: memref<75x6xf32, #tpu.memory_space<vmem>>, %arg3: memref<1x6xf32, #tpu.memory_space<vmem>>, %arg4: memref<392x6xf32, #tpu.memory_space<vmem>>) attributes {dimension_semantics = [#tpu.dimension_semantics<parallel>], iteration_bounds = array<i64: 1>, scalar_prefetch = 0 : i64, scratch_operands = 0 : i64, tpu.core_type = #tpu.core_type<tc>, window_params = [{transform_indices = @transform_0, window_bounds = array<i64: 4, 392, 75>}, {pipeline_mode = #tpu.pipeline_mode<synchronous>, transform_indices = @transform_1, window_bounds = array<i64: 75, 6>}, {pipeline_mode = #tpu.pipeline_mode<synchronous>, transform_indices = @transform_2, window_bounds = array<i64: 1, 6>}, {transform_indices = @transform_3, window_bounds = array<i64: 392, 6>}]} {
    %c0 = arith.constant 0 : index
    %c0_0 = arith.constant 0 : index
    %0 = vector.load %arg2[%c0, %c0_0] : memref<75x6xf32, #tpu.memory_space<vmem>>, vector<75x6xf32>
    %c0_1 = arith.constant 0 : index
    %c0_2 = arith.constant 0 : index
    %c0_3 = arith.constant 0 : index
    %1 = vector.load %arg1[%c0_1, %c0_2, %c0_3] : memref<4x392x75xf32, #tpu.memory_space<vmem>>, vector<1x392x75xf32>
    %2 = vector.shape_cast %1 : vector<1x392x75xf32> to vector<392x75xf32>
    %cst = arith.constant dense<0.000000e+00> : vector<392x6xf32>
    %3 = tpu.matmul %2, %0, %cst {dimension_numbers = #tpu.dot_dimension_numbers<[1], [0], [0], [1], [0, 0, 1, 1], [], []>} : vector<392x75xf32>, vector<75x6xf32>, vector<392x6xf32> -> vector<392x6xf32>
    %c1 = arith.constant 1 : index
    %c0_4 = arith.constant 0 : index
    %c0_5 = arith.constant 0 : index
    %4 = vector.load %arg1[%c1, %c0_4, %c0_5] : memref<4x392x75xf32, #tpu.memory_space<vmem>>, vector<1x392x75xf32>
    %5 = vector.shape_cast %4 : vector<1x392x75xf32> to vector<392x75xf32>
    %cst_6 = arith.constant dense<0.000000e+00> : vector<392x6xf32>
    %6 = tpu.matmul %5, %0, %cst_6 {dimension_numbers = #tpu.dot_dimension_numbers<[1], [0], [0], [1], [0, 0, 1, 1], [], []>} : vector<392x75xf32>, vector<75x6xf32>, vector<392x6xf32> -> vector<392x6xf32>
    %c2 = arith.constant 2 : index
    %c0_7 = arith.constant 0 : index
    %c0_8 = arith.constant 0 : index
    %7 = vector.load %arg1[%c2, %c0_7, %c0_8] : memref<4x392x75xf32, #tpu.memory_space<vmem>>, vector<1x392x75xf32>
    %8 = vector.shape_cast %7 : vector<1x392x75xf32> to vector<392x75xf32>
    %cst_9 = arith.constant dense<0.000000e+00> : vector<392x6xf32>
    %9 = tpu.matmul %8, %0, %cst_9 {dimension_numbers = #tpu.dot_dimension_numbers<[1], [0], [0], [1], [0, 0, 1, 1], [], []>} : vector<392x75xf32>, vector<75x6xf32>, vector<392x6xf32> -> vector<392x6xf32>
    %c3 = arith.constant 3 : index
    %c0_10 = arith.constant 0 : index
    %c0_11 = arith.constant 0 : index
    %10 = vector.load %arg1[%c3, %c0_10, %c0_11] : memref<4x392x75xf32, #tpu.memory_space<vmem>>, vector<1x392x75xf32>
    %11 = vector.shape_cast %10 : vector<1x392x75xf32> to vector<392x75xf32>
    %cst_12 = arith.constant dense<0.000000e+00> : vector<392x6xf32>
    %12 = tpu.matmul %11, %0, %cst_12 {dimension_numbers = #tpu.dot_dimension_numbers<[1], [0], [0], [1], [0, 0, 1, 1], [], []>} : vector<392x75xf32>, vector<75x6xf32>, vector<392x6xf32> -> vector<392x6xf32>
    %13 = arith.maximumf %3, %6 : vector<392x6xf32>
    %14 = arith.maximumf %9, %12 : vector<392x6xf32>
    %15 = arith.maximumf %13, %14 : vector<392x6xf32>
    %c0_13 = arith.constant 0 : index
    %c0_14 = arith.constant 0 : index
    %16 = vector.load %arg3[%c0_13, %c0_14] : memref<1x6xf32, #tpu.memory_space<vmem>>, vector<1x6xf32>
    %17 = vector.broadcast %16 : vector<1x6xf32> to vector<392x6xf32>
    %18 = arith.addf %15, %17 : vector<392x6xf32>
    %19 = math.tanh %18 : vector<392x6xf32>
    %c0_15 = arith.constant 0 : index
    %c0_16 = arith.constant 0 : index
    %20 = vector.load %arg4[%c0_15, %c0_16] : memref<392x6xf32, #tpu.memory_space<vmem>>, vector<392x6xf32>
    tpu.vector_store %arg4[%c0_15, %c0_16], %19 {strides = array<i32>} : memref<392x6xf32, #tpu.memory_space<vmem>>, vector<392x6xf32>,
    return
  }
  func.func @transform_0(%arg0: i32) -> (i32, i32, i32) {
    %c0_i32 = arith.constant 0 : i32
    %c0_i32_0 = arith.constant 0 : i32
    %c0_i32_1 = arith.constant 0 : i32
    return %c0_i32, %arg0, %c0_i32_0 : i32, i32, i32
  }
  func.func @transform_1(%arg0: i32) -> (i32, i32) {
    %c0_i32 = arith.constant 0 : i32
    %c0_i32_0 = arith.constant 0 : i32
    %c0_i32_1 = arith.constant 0 : i32
    return %c0_i32, %c0_i32_0 : i32, i32
  }
  func.func @transform_2(%arg0: i32) -> (i32, i32) {
    %c0_i32 = arith.constant 0 : i32
    %c0_i32_0 = arith.constant 0 : i32
    %c0_i32_1 = arith.constant 0 : i32
    return %c0_i32, %c0_i32_0 : i32, i32
  }
  func.func @transform_3(%arg0: i32) -> (i32, i32) {
    %c0_i32 = arith.constant 0 : i32
    %c0_i32_0 = arith.constant 0 : i32
    return %arg0, %c0_i32 : i32, i32
  }
}

module attributes {stable_mosaic.version = 11 : i64} {
  func.func @conv_tanh_pool_kernel(%arg0: i32, %arg1: memref<4x56x150xf32, #tpu.memory_space<vmem>>, %arg2: memref<150x16xf32, #tpu.memory_space<vmem>>, %arg3: memref<1x16xf32, #tpu.memory_space<vmem>>, %arg4: memref<56x16xf32, #tpu.memory_space<vmem>>) attributes {dimension_semantics = [#tpu.dimension_semantics<parallel>], iteration_bounds = array<i64: 1>, scalar_prefetch = 0 : i64, scratch_operands = 0 : i64, tpu.core_type = #tpu.core_type<tc>, window_params = [{transform_indices = @transform_0, window_bounds = array<i64: 4, 56, 150>}, {pipeline_mode = #tpu.pipeline_mode<synchronous>, transform_indices = @transform_1, window_bounds = array<i64: 150, 16>}, {pipeline_mode = #tpu.pipeline_mode<synchronous>, transform_indices = @transform_2, window_bounds = array<i64: 1, 16>}, {transform_indices = @transform_3, window_bounds = array<i64: 56, 16>}]} {
    %c0 = arith.constant 0 : index
    %c0_0 = arith.constant 0 : index
    %0 = vector.load %arg2[%c0, %c0_0] : memref<150x16xf32, #tpu.memory_space<vmem>>, vector<150x16xf32>
    %c0_1 = arith.constant 0 : index
    %c0_2 = arith.constant 0 : index
    %c0_3 = arith.constant 0 : index
    %1 = vector.load %arg1[%c0_1, %c0_2, %c0_3] : memref<4x56x150xf32, #tpu.memory_space<vmem>>, vector<1x56x150xf32>
    %2 = vector.shape_cast %1 : vector<1x56x150xf32> to vector<56x150xf32>
    %cst = arith.constant dense<0.000000e+00> : vector<56x16xf32>
    %3 = tpu.matmul %2, %0, %cst {dimension_numbers = #tpu.dot_dimension_numbers<[1], [0], [0], [1], [0, 0, 1, 1], [], []>} : vector<56x150xf32>, vector<150x16xf32>, vector<56x16xf32> -> vector<56x16xf32>
    %c1 = arith.constant 1 : index
    %c0_4 = arith.constant 0 : index
    %c0_5 = arith.constant 0 : index
    %4 = vector.load %arg1[%c1, %c0_4, %c0_5] : memref<4x56x150xf32, #tpu.memory_space<vmem>>, vector<1x56x150xf32>
    %5 = vector.shape_cast %4 : vector<1x56x150xf32> to vector<56x150xf32>
    %cst_6 = arith.constant dense<0.000000e+00> : vector<56x16xf32>
    %6 = tpu.matmul %5, %0, %cst_6 {dimension_numbers = #tpu.dot_dimension_numbers<[1], [0], [0], [1], [0, 0, 1, 1], [], []>} : vector<56x150xf32>, vector<150x16xf32>, vector<56x16xf32> -> vector<56x16xf32>
    %c2 = arith.constant 2 : index
    %c0_7 = arith.constant 0 : index
    %c0_8 = arith.constant 0 : index
    %7 = vector.load %arg1[%c2, %c0_7, %c0_8] : memref<4x56x150xf32, #tpu.memory_space<vmem>>, vector<1x56x150xf32>
    %8 = vector.shape_cast %7 : vector<1x56x150xf32> to vector<56x150xf32>
    %cst_9 = arith.constant dense<0.000000e+00> : vector<56x16xf32>
    %9 = tpu.matmul %8, %0, %cst_9 {dimension_numbers = #tpu.dot_dimension_numbers<[1], [0], [0], [1], [0, 0, 1, 1], [], []>} : vector<56x150xf32>, vector<150x16xf32>, vector<56x16xf32> -> vector<56x16xf32>
    %c3 = arith.constant 3 : index
    %c0_10 = arith.constant 0 : index
    %c0_11 = arith.constant 0 : index
    %10 = vector.load %arg1[%c3, %c0_10, %c0_11] : memref<4x56x150xf32, #tpu.memory_space<vmem>>, vector<1x56x150xf32>
    %11 = vector.shape_cast %10 : vector<1x56x150xf32> to vector<56x150xf32>
    %cst_12 = arith.constant dense<0.000000e+00> : vector<56x16xf32>
    %12 = tpu.matmul %11, %0, %cst_12 {dimension_numbers = #tpu.dot_dimension_numbers<[1], [0], [0], [1], [0, 0, 1, 1], [], []>} : vector<56x150xf32>, vector<150x16xf32>, vector<56x16xf32> -> vector<56x16xf32>
    %13 = arith.maximumf %3, %6 : vector<56x16xf32>
    %14 = arith.maximumf %9, %12 : vector<56x16xf32>
    %15 = arith.maximumf %13, %14 : vector<56x16xf32>
    %c0_13 = arith.constant 0 : index
    %c0_14 = arith.constant 0 : index
    %16 = vector.load %arg3[%c0_13, %c0_14] : memref<1x16xf32, #tpu.memory_space<vmem>>, vector<1x16xf32>
    %17 = vector.broadcast %16 : vector<1x16xf32> to vector<56x16xf32>
    %18 = arith.addf %15, %17 : vector<56x16xf32>
    %19 = math.tanh %18 : vector<56x16xf32>
    %c0_15 = arith.constant 0 : index
    %c0_16 = arith.constant 0 : index
    %20 = vector.load %arg4[%c0_15, %c0_16] : memref<56x16xf32, #tpu.memory_space<vmem>>, vector<56x16xf32>
    tpu.vector_store %arg4[%c0_15, %c0_16], %19 {strides = array<i32>} : memref<56x16xf32, #tpu.memory_space<vmem>>, vector<56x16xf32>,
    return
  }
  func.func @transform_0(%arg0: i32) -> (i32, i32, i32) {
    %c0_i32 = arith.constant 0 : i32
    %c0_i32_0 = arith.constant 0 : i32
    %c0_i32_1 = arith.constant 0 : i32
    return %c0_i32, %arg0, %c0_i32_0 : i32, i32, i32
  }
  func.func @transform_1(%arg0: i32) -> (i32, i32) {
    %c0_i32 = arith.constant 0 : i32
    %c0_i32_0 = arith.constant 0 : i32
    %c0_i32_1 = arith.constant 0 : i32
    return %c0_i32, %c0_i32_0 : i32, i32
  }
  func.func @transform_2(%arg0: i32) -> (i32, i32) {
    %c0_i32 = arith.constant 0 : i32
    %c0_i32_0 = arith.constant 0 : i32
    %c0_i32_1 = arith.constant 0 : i32
    return %c0_i32, %c0_i32_0 : i32, i32
  }
  func.func @transform_3(%arg0: i32) -> (i32, i32) {
    %c0_i32 = arith.constant 0 : i32
    %c0_i32_0 = arith.constant 0 : i32
    return %arg0, %c0_i32 : i32, i32
  }
}

module attributes {stable_mosaic.version = 11 : i64} {
  func.func @mlp_kernel(%arg0: i32, %arg1: memref<2x400xf32, #tpu.memory_space<vmem>>, %arg2: memref<400x120xf32, #tpu.memory_space<vmem>>, %arg3: memref<1x120xf32, #tpu.memory_space<vmem>>, %arg4: memref<120x84xf32, #tpu.memory_space<vmem>>, %arg5: memref<1x84xf32, #tpu.memory_space<vmem>>, %arg6: memref<84x10xf32, #tpu.memory_space<vmem>>, %arg7: memref<1x10xf32, #tpu.memory_space<vmem>>, %arg8: memref<2x10xf32, #tpu.memory_space<vmem>>) attributes {dimension_semantics = [#tpu.dimension_semantics<parallel>], iteration_bounds = array<i64: 1>, scalar_prefetch = 0 : i64, scratch_operands = 0 : i64, tpu.core_type = #tpu.core_type<tc>, window_params = [{transform_indices = @transform_0, window_bounds = array<i64: 2, 400>}, {pipeline_mode = #tpu.pipeline_mode<synchronous>, transform_indices = @transform_1, window_bounds = array<i64: 400, 120>}, {pipeline_mode = #tpu.pipeline_mode<synchronous>, transform_indices = @transform_2, window_bounds = array<i64: 1, 120>}, {pipeline_mode = #tpu.pipeline_mode<synchronous>, transform_indices = @transform_3, window_bounds = array<i64: 120, 84>}, {pipeline_mode = #tpu.pipeline_mode<synchronous>, transform_indices = @transform_4, window_bounds = array<i64: 1, 84>}, {pipeline_mode = #tpu.pipeline_mode<synchronous>, transform_indices = @transform_5, window_bounds = array<i64: 84, 10>}, {pipeline_mode = #tpu.pipeline_mode<synchronous>, transform_indices = @transform_6, window_bounds = array<i64: 1, 10>}, {transform_indices = @transform_7, window_bounds = array<i64: 2, 10>}]} {
    %c0 = arith.constant 0 : index
    %c0_0 = arith.constant 0 : index
    %0 = vector.load %arg1[%c0, %c0_0] : memref<2x400xf32, #tpu.memory_space<vmem>>, vector<2x400xf32>
    %c0_1 = arith.constant 0 : index
    %c0_2 = arith.constant 0 : index
    %1 = vector.load %arg2[%c0_1, %c0_2] : memref<400x120xf32, #tpu.memory_space<vmem>>, vector<400x120xf32>
    %cst = arith.constant dense<0.000000e+00> : vector<2x120xf32>
    %2 = tpu.matmul %0, %1, %cst {dimension_numbers = #tpu.dot_dimension_numbers<[1], [0], [0], [1], [0, 0, 1, 1], [], []>} : vector<2x400xf32>, vector<400x120xf32>, vector<2x120xf32> -> vector<2x120xf32>
    %c0_3 = arith.constant 0 : index
    %c0_4 = arith.constant 0 : index
    %3 = vector.load %arg3[%c0_3, %c0_4] : memref<1x120xf32, #tpu.memory_space<vmem>>, vector<1x120xf32>
    %4 = vector.broadcast %3 : vector<1x120xf32> to vector<2x120xf32>
    %5 = arith.addf %2, %4 : vector<2x120xf32>
    %6 = math.tanh %5 : vector<2x120xf32>
    %c0_5 = arith.constant 0 : index
    %c0_6 = arith.constant 0 : index
    %7 = vector.load %arg4[%c0_5, %c0_6] : memref<120x84xf32, #tpu.memory_space<vmem>>, vector<120x84xf32>
    %cst_7 = arith.constant dense<0.000000e+00> : vector<2x84xf32>
    %8 = tpu.matmul %6, %7, %cst_7 {dimension_numbers = #tpu.dot_dimension_numbers<[1], [0], [0], [1], [0, 0, 1, 1], [], []>} : vector<2x120xf32>, vector<120x84xf32>, vector<2x84xf32> -> vector<2x84xf32>
    %c0_8 = arith.constant 0 : index
    %c0_9 = arith.constant 0 : index
    %9 = vector.load %arg5[%c0_8, %c0_9] : memref<1x84xf32, #tpu.memory_space<vmem>>, vector<1x84xf32>
    %10 = vector.broadcast %9 : vector<1x84xf32> to vector<2x84xf32>
    %11 = arith.addf %8, %10 : vector<2x84xf32>
    %12 = math.tanh %11 : vector<2x84xf32>
    %c0_10 = arith.constant 0 : index
    %c0_11 = arith.constant 0 : index
    %13 = vector.load %arg6[%c0_10, %c0_11] : memref<84x10xf32, #tpu.memory_space<vmem>>, vector<84x10xf32>
    %cst_12 = arith.constant dense<0.000000e+00> : vector<2x10xf32>
    %14 = tpu.matmul %12, %13, %cst_12 {dimension_numbers = #tpu.dot_dimension_numbers<[1], [0], [0], [1], [0, 0, 1, 1], [], []>} : vector<2x84xf32>, vector<84x10xf32>, vector<2x10xf32> -> vector<2x10xf32>
    %c0_13 = arith.constant 0 : index
    %c0_14 = arith.constant 0 : index
    %15 = vector.load %arg7[%c0_13, %c0_14] : memref<1x10xf32, #tpu.memory_space<vmem>>, vector<1x10xf32>
    %16 = vector.broadcast %15 : vector<1x10xf32> to vector<2x10xf32>
    %17 = arith.addf %14, %16 : vector<2x10xf32>
    %c0_15 = arith.constant 0 : index
    %c0_16 = arith.constant 0 : index
    %18 = vector.load %arg8[%c0_15, %c0_16] : memref<2x10xf32, #tpu.memory_space<vmem>>, vector<2x10xf32>
    tpu.vector_store %arg8[%c0_15, %c0_16], %17 {strides = array<i32>} : memref<2x10xf32, #tpu.memory_space<vmem>>, vector<2x10xf32>,
    return
  }
  func.func @transform_0(%arg0: i32) -> (i32, i32) {
    %c0_i32 = arith.constant 0 : i32
    %c0_i32_0 = arith.constant 0 : i32
    return %arg0, %c0_i32 : i32, i32
  }
  func.func @transform_1(%arg0: i32) -> (i32, i32) {
    %c0_i32 = arith.constant 0 : i32
    %c0_i32_0 = arith.constant 0 : i32
    %c0_i32_1 = arith.constant 0 : i32
    return %c0_i32, %c0_i32_0 : i32, i32
  }
  func.func @transform_2(%arg0: i32) -> (i32, i32) {
    %c0_i32 = arith.constant 0 : i32
    %c0_i32_0 = arith.constant 0 : i32
    %c0_i32_1 = arith.constant 0 : i32
    return %c0_i32, %c0_i32_0 : i32, i32
  }
  func.func @transform_3(%arg0: i32) -> (i32, i32) {
    %c0_i32 = arith.constant 0 : i32
    %c0_i32_0 = arith.constant 0 : i32
    %c0_i32_1 = arith.constant 0 : i32
    return %c0_i32, %c0_i32_0 : i32, i32
  }
  func.func @transform_4(%arg0: i32) -> (i32, i32) {
    %c0_i32 = arith.constant 0 : i32
    %c0_i32_0 = arith.constant 0 : i32
    %c0_i32_1 = arith.constant 0 : i32
    return %c0_i32, %c0_i32_0 : i32, i32
  }
  func.func @transform_5(%arg0: i32) -> (i32, i32) {
    %c0_i32 = arith.constant 0 : i32
    %c0_i32_0 = arith.constant 0 : i32
    %c0_i32_1 = arith.constant 0 : i32
    return %c0_i32, %c0_i32_0 : i32, i32
  }
  func.func @transform_6(%arg0: i32) -> (i32, i32) {
    %c0_i32 = arith.constant 0 : i32
    %c0_i32_0 = arith.constant 0 : i32
    %c0_i32_1 = arith.constant 0 : i32
    return %c0_i32, %c0_i32_0 : i32, i32
  }
  func.func @transform_7(%arg0: i32) -> (i32, i32) {
    %c0_i32 = arith.constant 0 : i32
    %c0_i32_0 = arith.constant 0 : i32
    return %arg0, %c0_i32 : i32, i32
  }
}

</mosaic_0001>

<llo_original>
// kernel: mode11_forward_pallas.3
$region0: #{mode11_forward_pallas.3}
  #allocation0 [shape = 'u32[]', space=smem, size = 0x4, offset = 0x4, fixed_abs, tag = 'smem constant byte address 0x4 - core index']
  #allocation1 [shape = 'u32[144,128]{1,0:T(1,128)}', space=vmem, size = 0x12000, scoped, tag = 'internal scratch']
  %s0 = inlined_call_operand.vmem [shape: f32[4,392,75], index: 0, kind: input, shape index: {}]
  %s1 = inlined_call_operand.vmem [shape: f32[75,6], index: 1, kind: input, shape index: {}]
  %s2 = inlined_call_operand.vmem [shape: f32[1,6], index: 2, kind: input, shape index: {}]
  %s3 = inlined_call_operand.vmem [shape: f32[392,6], index: 3, kind: output, shape index: {}]
  %s4 = sld [smem:[#allocation0]]
  $region22: #{mode11_forward_pallas.3} parent=0
    _
  %s6 = ssub.s32 1, %s4
  %s7 = scalar_select 0, %s6, %s4
  // Predicated region
  $region2: #{mode11_forward_pallas.3} parent=0 // pred_check
    _
  $region3: #{mode11_forward_pallas.3} parent=0 // pred_check_branch
    %9 = sbr.rel (0) target = $region5
  $region4: #{mode11_forward_pallas.3} parent=0 // pred_region
    _
  $region5: #{mode11_forward_pallas.3} parent=0 // pred_fallthru
    _
  // Predicated region
  $region6: #{mode11_forward_pallas.3} parent=0 // pred_check
    _
  $region7: #{mode11_forward_pallas.3} parent=0 // pred_check_branch
    %11 = sbr.rel (0) target = $region9
  $region8: #{mode11_forward_pallas.3} parent=0 // pred_region
    _
  $region9: #{mode11_forward_pallas.3} parent=0 // pred_fallthru
    _
  // Predicated region
  $region10: #{mode11_forward_pallas.3} parent=0 // pred_check
    _
  $region11: #{mode11_forward_pallas.3} parent=0 // pred_check_branch
    %13 = sbr.rel (0) target = $region13
  $region12: #{mode11_forward_pallas.3} parent=0 // pred_region
    _
  $region13: #{mode11_forward_pallas.3} parent=0 // pred_fallthru
    _
  %v14 = vld [vmem:[%s1] sm:$0xff]
  %v15 = vld [vmem:[%s1 + $0x8] sm:$0xff]
  %v16 = vld [vmem:[%s1 + $0x10] sm:$0xff]
  %v17 = vld [vmem:[%s1 + $0x18] sm:$0xff]
  %v18 = vld [vmem:[%s1 + $0x20] sm:$0xff]
  %v19 = vld [vmem:[%s1 + $0x28] sm:$0xff]
  %v20 = vld [vmem:[%s1 + $0x30] sm:$0xff]
  %v21 = vld [vmem:[%s1 + $0x38] sm:$0xff]
  %v22 = vld [vmem:[%s1 + $0x40] sm:$0xff]
  %v23 = vld [vmem:[%s1 + $0x48] sm:$0x7]
  %v24 = vld [vmem:[%s0] sm:$0xff]
  %v25 = vld [vmem:[%s0 + $0x8] sm:$0xff]
  %v26 = vld [vmem:[%s0 + $0x10] sm:$0xff]
  %v27 = vld [vmem:[%s0 + $0x18] sm:$0xff]
  %v28 = vld [vmem:[%s0 + $0x20] sm:$0xff]
  %v29 = vld [vmem:[%s0 + $0x28] sm:$0xff]
  %v30 = vld [vmem:[%s0 + $0x30] sm:$0xff]
  %v31 = vld [vmem:[%s0 + $0x38] sm:$0xff]
  %v32 = vld [vmem:[%s0 + $0x40] sm:$0xff]
  %v33 = vld [vmem:[%s0 + $0x48] sm:$0xff]
  %v34 = vld [vmem:[%s0 + $0x50] sm:$0xff]
  %v35 = vld [vmem:[%s0 + $0x58] sm:$0xff]
  %v36 = vld [vmem:[%s0 + $0x60] sm:$0xff]
  %v37 = vld [vmem:[%s0 + $0x68] sm:$0xff]
  %v38 = vld [vmem:[%s0 + $0x70] sm:$0xff]
  %v39 = vld [vmem:[%s0 + $0x78] sm:$0xff]
  %v40 = vld [vmem:[%s0 + $0x80] sm:$0xff]
  %v41 = vld [vmem:[%s0 + $0x88] sm:$0xff]
  %v42 = vld [vmem:[%s0 + $0x90] sm:$0xff]
  %v43 = vld [vmem:[%s0 + $0x98] sm:$0xff]
  %v44 = vld [vmem:[%s0 + $0xa0] sm:$0xff]
  %v45 = vld [vmem:[%s0 + $0xa8] sm:$0xff]
  %v46 = vld [vmem:[%s0 + $0xb0] sm:$0xff]
  %v47 = vld [vmem:[%s0 + $0xb8] sm:$0xff]
  %v48 = vld [vmem:[%s0 + $0xc0] sm:$0xff]
  %v49 = vld [vmem:[%s0 + $0xc8] sm:$0xff]
  %v50 = vld [vmem:[%s0 + $0xd0] sm:$0xff]
  %v51 = vld [vmem:[%s0 + $0xd8] sm:$0xff]
  %v52 = vld [vmem:[%s0 + $0xe0] sm:$0xff]
  %v53 = vld [vmem:[%s0 + $0xe8] sm:$0xff]
  %v54 = vld [vmem:[%s0 + $0xf0] sm:$0xff]
  %v55 = vld [vmem:[%s0 + $0xf8] sm:$0xff]
  %v56 = vld [vmem:[%s0 + $0x100] sm:$0xff]
  %v57 = vld [vmem:[%s0 + $0x108] sm:$0xff]
  %v58 = vld [vmem:[%s0 + $0x110] sm:$0xff]
  %v59 = vld [vmem:[%s0 + $0x118] sm:$0xff]
  %v60 = vld [vmem:[%s0 + $0x120] sm:$0xff]
  %v61 = vld [vmem:[%s0 + $0x128] sm:$0xff]
  %v62 = vld [vmem:[%s0 + $0x130] sm:$0xff]
  %v63 = vld [vmem:[%s0 + $0x138] sm:$0xff]
  %v64 = vld [vmem:[%s0 + $0x140] sm:$0xff]
  %v65 = vld [vmem:[%s0 + $0x148] sm:$0xff]
  %v66 = vld [vmem:[%s0 + $0x150] sm:$0xff]
  %v67 = vld [vmem:[%s0 + $0x158] sm:$0xff]
  %v68 = vld [vmem:[%s0 + $0x160] sm:$0xff]
  %v69 = vld [vmem:[%s0 + $0x168] sm:$0xff]
  %v70 = vld [vmem:[%s0 + $0x170] sm:$0xff]
  %v71 = vld [vmem:[%s0 + $0x178] sm:$0xff]
  %v72 = vld [vmem:[%s0 + $0x180] sm:$0xff]
  %vm73 = vcmask 613376
  %v75 = vsel %vm73, %v24, 0
  %v78 = vsel %vm73, %v25, 0
  %v81 = vsel %vm73, %v26, 0
  %v84 = vsel %vm73, %v27, 0
  %v87 = vsel %vm73, %v28, 0
  %v90 = vsel %vm73, %v29, 0
  %v93 = vsel %vm73, %v30, 0
  %v96 = vsel %vm73, %v31, 0
  %v99 = vsel %vm73, %v32, 0
  %v102 = vsel %vm73, %v33, 0
  %v105 = vsel %vm73, %v34, 0
  %v108 = vsel %vm73, %v35, 0
  %v111 = vsel %vm73, %v36, 0
  %v114 = vsel %vm73, %v37, 0
  %v117 = vsel %vm73, %v38, 0
  %v120 = vsel %vm73, %v39, 0
  %v123 = vsel %vm73, %v40, 0
  %v126 = vsel %vm73, %v41, 0
  %v129 = vsel %vm73, %v42, 0
  %v132 = vsel %vm73, %v43, 0
  %v135 = vsel %vm73, %v44, 0
  %v138 = vsel %vm73, %v45, 0
  %v141 = vsel %vm73, %v46, 0
  %v144 = vsel %vm73, %v47, 0
  %v147 = vsel %vm73, %v48, 0
  %v150 = vsel %vm73, %v49, 0
  %v153 = vsel %vm73, %v50, 0
  %v156 = vsel %vm73, %v51, 0
  %v159 = vsel %vm73, %v52, 0
  %v162 = vsel %vm73, %v53, 0
  %v165 = vsel %vm73, %v54, 0
  %v168 = vsel %vm73, %v55, 0
  %v171 = vsel %vm73, %v56, 0
  %v174 = vsel %vm73, %v57, 0
  %v177 = vsel %vm73, %v58, 0
  %v180 = vsel %vm73, %v59, 0
  %v183 = vsel %vm73, %v60, 0
  %v186 = vsel %vm73, %v61, 0
  %v189 = vsel %vm73, %v62, 0
  %v192 = vsel %vm73, %v63, 0
  %v195 = vsel %vm73, %v64, 0
  %v198 = vsel %vm73, %v65, 0
  %v201 = vsel %vm73, %v66, 0
  %v204 = vsel %vm73, %v67, 0
  %v207 = vsel %vm73, %v68, 0
  %v210 = vsel %vm73, %v69, 0
  %v213 = vsel %vm73, %v70, 0
  %v216 = vsel %vm73, %v71, 0
  %v219 = vsel %vm73, %v72, 0
  %vm221 = vcmask 1042432
  %v223 = vsel %vm221, %v23, 0
  %225 = vmatprep.subr.mxu0 0.0
  %226 = vmatpush1.msra.mxu0 %v14
  %227 = vmatprep.subr.mxu0 0.0
  %228 = vmatpush1.msra.mxu0 %v15
  %229 = vmatprep.subr.mxu0 0.0
  %230 = vmatpush1.msra.mxu0 %v16
  %231 = vmatprep.subr.mxu0 0.0
  %232 = vmatpush1.msra.mxu0 %v17
  %233 = vmatprep.subr.mxu0 0.0
  %234 = vmatpush1.msra.mxu0 %v18
  %235 = vmatprep.subr.mxu0 0.0
  %236 = vmatpush1.msra.mxu0 %v19
  %237 = vmatprep.subr.mxu0 0.0
  %238 = vmatpush1.msra.mxu0 %v20
  %239 = vmatprep.subr.mxu0 0.0
  %240 = vmatpush1.msra.mxu0 %v21
  %241 = vmatprep.subr.mxu0 0.0
  %242 = vmatpush1.msra.mxu0 %v22
  %243 = vmatprep.subr.mxu0 0.0
  %244 = vmatpush1.msra.mxu0 %v223
  %245 = vmatprep.subr.mxu0 0.0
  %246 = vmatpush1.msra.mxu0 0.0
  %247 = vmatprep.subr.mxu0 0.0
  %248 = vmatpush1.msra.mxu0 0.0
  %249 = vmatprep.subr.mxu0 0.0
  %250 = vmatpush1.msra.mxu0 0.0
  %251 = vmatprep.subr.mxu0 0.0
  %252 = vmatpush1.msra.mxu0 0.0
  %253 = vmatprep.subr.mxu0 0.0
  %254 = vmatpush1.msra.mxu0 0.0
  %255 = vmatprep.subr.mxu0 0.0
  %256 = vmatpush1.msra.mxu0 0.0
  %257 = vmatprep.subr.mxu0 0.0
  %258 = vmatpush1.msra.mxu0 0.0
  %259 = vmatprep.subr.mxu0 0.0
  %260 = vmatpush1.msra.mxu0 0.0
  %261 = vmatprep.subr.mxu0 0.0
  %262 = vmatpush1.msra.mxu0 0.0
  %263 = vmatprep.subr.mxu0 0.0
  %264 = vmatpush1.msra.mxu0 0.0
  %265 = vmatprep.subr.mxu0 0.0
  %266 = vmatpush1.msra.mxu0 0.0
  %267 = vmatprep.subr.mxu0 0.0
  %268 = vmatpush1.msra.mxu0 0.0
  %269 = vmatprep.subr.mxu0 0.0
  %270 = vmatpush1.msra.mxu0 0.0
  %271 = vmatprep.subr.mxu0 0.0
  %272 = vmatpush1.msra.mxu0 0.0
  %273 = vmatprep.subr.mxu0 0.0
  %274 = vmatpush1.msra.mxu0 0.0
  %275 = vmatprep.subr.mxu0 0.0
  %276 = vmatpush1.msra.mxu0 0.0
  %277 = vmatprep.subr.mxu0 0.0
  %278 = vmatpush1.msra.mxu0 0.0
  %279 = vmatprep.subr.mxu0 0.0
  %280 = vmatpush1.msra.mxu0 0.0
  %281 = vmatprep.subr.mxu0 0.0
  %282 = vmatpush1.msra.mxu0 0.0
  %283 = vmatprep.subr.mxu0 0.0
  %284 = vmatpush1.msra.mxu0 0.0
  %285 = vmatprep.subr.mxu0 0.0
  %286 = vmatpush1.msra.mxu0 0.0
  %287 = vmatprep.subr.mxu0 0.0
  %288 = vmatpush1.msra.mxu0 0.0
  %289 = vmatprep.mubr.f32.mxu0 0.0
  %290 = vmatmul.mubr.f32.gmra.mrb[0].mxu0 %v75
  %v291 = vpop.f32.mrb[0].mxu0
  %v292 = vadd.f32 0.0, %v291
  %v293 = vpop.f32.mrb[0].mxu0
  %294 = vmatprep.mubr.f32.mxu0 0.0
  %295 = vmatmul.mubr.f32.gmra.mrb[0].mxu0 %v78
  %v296 = vpop.f32.mrb[0].mxu0
  %v297 = vadd.f32 0.0, %v296
  %v298 = vpop.f32.mrb[0].mxu0
  %299 = vmatprep.mubr.f32.mxu0 0.0
  %300 = vmatmul.mubr.f32.gmra.mrb[0].mxu0 %v81
  %v301 = vpop.f32.mrb[0].mxu0
  %v302 = vadd.f32 0.0, %v301
  %v303 = vpop.f32.mrb[0].mxu0
  %304 = vmatprep.mubr.f32.mxu0 0.0
  %305 = vmatmul.mubr.f32.gmra.mrb[0].mxu0 %v84
  %v306 = vpop.f32.mrb[0].mxu0
  %v307 = vadd.f32 0.0, %v306
  %v308 = vpop.f32.mrb[0].mxu0
  %309 = vmatprep.mubr.f32.mxu0 0.0
  %310 = vmatmul.mubr.f32.gmra.mrb[0].mxu0 %v87
  %v311 = vpop.f32.mrb[0].mxu0
  %v312 = vadd.f32 0.0, %v311
  %v313 = vpop.f32.mrb[0].mxu0
  %314 = vmatprep.mubr.f32.mxu0 0.0
  %315 = vmatmul.mubr.f32.gmra.mrb[0].mxu0 %v90
  %v316 = vpop.f32.mrb[0].mxu0
  %v317 = vadd.f32 0.0, %v316
  %v318 = vpop.f32.mrb[0].mxu0
  %319 = vmatprep.mubr.f32.mxu0 0.0
  %320 = vmatmul.mubr.f32.gmra.mrb[0].mxu0 %v93
  %v321 = vpop.f32.mrb[0].mxu0
  %v322 = vadd.f32 0.0, %v321
  %v323 = vpop.f32.mrb[0].mxu0
  %324 = vmatprep.mubr.f32.mxu0 0.0
  %325 = vmatmul.mubr.f32.gmra.mrb[0].mxu0 %v96
  %v326 = vpop.f32.mrb[0].mxu0
  %v327 = vadd.f32 0.0, %v326
  %v328 = vpop.f32.mrb[0].mxu0
  %329 = vmatprep.mubr.f32.mxu0 0.0
  %330 = vmatmul.mubr.f32.gmra.mrb[0].mxu0 %v99
  %v331 = vpop.f32.mrb[0].mxu0
  %v332 = vadd.f32 0.0, %v331
  %v333 = vpop.f32.mrb[0].mxu0
  %334 = vmatprep.mubr.f32.mxu0 0.0
  %335 = vmatmul.mubr.f32.gmra.mrb[0].mxu0 %v102
  %v336 = vpop.f32.mrb[0].mxu0
  %v337 = vadd.f32 0.0, %v336
  %v338 = vpop.f32.mrb[0].mxu0
  %339 = vmatprep.mubr.f32.mxu0 0.0
  %340 = vmatmul.mubr.f32.gmra.mrb[0].mxu0 %v105
  %v341 = vpop.f32.mrb[0].mxu0
  %v342 = vadd.f32 0.0, %v341
  %v343 = vpop.f32.mrb[0].mxu0
  %344 = vmatprep.mubr.f32.mxu0 0.0
  %345 = vmatmul.mubr.f32.gmra.mrb[0].mxu0 %v108
  %v346 = vpop.f32.mrb[0].mxu0
  %v347 = vadd.f32 0.0, %v346
  %v348 = vpop.f32.mrb[0].mxu0
  %349 = vmatprep.mubr.f32.mxu0 0.0
  %350 = vmatmul.mubr.f32.gmra.mrb[0].mxu0 %v111
  %v351 = vpop.f32.mrb[0].mxu0
  %v352 = vadd.f32 0.0, %v351
  %v353 = vpop.f32.mrb[0].mxu0
  %354 = vmatprep.mubr.f32.mxu0 0.0
  %355 = vmatmul.mubr.f32.gmra.mrb[0].mxu0 %v114
  %v356 = vpop.f32.mrb[0].mxu0
  %v357 = vadd.f32 0.0, %v356
  %v358 = vpop.f32.mrb[0].mxu0
  %359 = vmatprep.mubr.f32.mxu0 0.0
  %360 = vmatmul.mubr.f32.gmra.mrb[0].mxu0 %v117
  %v361 = vpop.f32.mrb[0].mxu0
  %v362 = vadd.f32 0.0, %v361
  %v363 = vpop.f32.mrb[0].mxu0
  %364 = vmatprep.mubr.f32.mxu0 0.0
  %365 = vmatmul.mubr.f32.gmra.mrb[0].mxu0 %v120
  %v366 = vpop.f32.mrb[0].mxu0
  %v367 = vadd.f32 0.0, %v366
  %v368 = vpop.f32.mrb[0].mxu0
  %369 = vmatprep.mubr.f32.mxu0 0.0
  %370 = vmatmul.mubr.f32.gmra.mrb[0].mxu0 %v123
  %v371 = vpop.f32.mrb[0].mxu0
  %v372 = vadd.f32 0.0, %v371
  %v373 = vpop.f32.mrb[0].mxu0
  %374 = vmatprep.mubr.f32.mxu0 0.0
  %375 = vmatmul.mubr.f32.gmra.mrb[0].mxu0 %v126
  %v376 = vpop.f32.mrb[0].mxu0
  %v377 = vadd.f32 0.0, %v376
  %v378 = vpop.f32.mrb[0].mxu0
  %379 = vmatprep.mubr.f32.mxu0 0.0
  %380 = vmatmul.mubr.f32.gmra.mrb[0].mxu0 %v129
  %v381 = vpop.f32.mrb[0].mxu0
  %v382 = vadd.f32 0.0, %v381
  %v383 = vpop.f32.mrb[0].mxu0
  %384 = vmatprep.mubr.f32.mxu0 0.0
  %385 = vmatmul.mubr.f32.gmra.mrb[0].mxu0 %v132
  %v386 = vpop.f32.mrb[0].mxu0
  %v387 = vadd.f32 0.0, %v386
  %v388 = vpop.f32.mrb[0].mxu0
  %389 = vmatprep.mubr.f32.mxu0 0.0
  %390 = vmatmul.mubr.f32.gmra.mrb[0].mxu0 %v135
  %v391 = vpop.f32.mrb[0].mxu0
  %v392 = vadd.f32 0.0, %v391
  %v393 = vpop.f32.mrb[0].mxu0
  %394 = vmatprep.mubr.f32.mxu0 0.0
  %395 = vmatmul.mubr.f32.gmra.mrb[0].mxu0 %v138
  %v396 = vpop.f32.mrb[0].mxu0
  %v397 = vadd.f32 0.0, %v396
  %v398 = vpop.f32.mrb[0].mxu0
  %399 = vmatprep.mubr.f32.mxu0 0.0
  %400 = vmatmul.mubr.f32.gmra.mrb[0].mxu0 %v141
  %v401 = vpop.f32.mrb[0].mxu0
  %v402 = vadd.f32 0.0, %v401
  %v403 = vpop.f32.mrb[0].mxu0
  %404 = vmatprep.mubr.f32.mxu0 0.0
  %405 = vmatmul.mubr.f32.gmra.mrb[0].mxu0 %v144
  %v406 = vpop.f32.mrb[0].mxu0
  %v407 = vadd.f32 0.0, %v406
  %v408 = vpop.f32.mrb[0].mxu0
  %409 = vmatprep.mubr.f32.mxu0 0.0
  %410 = vmatmul.mubr.f32.gmra.mrb[0].mxu0 %v147
  %v411 = vpop.f32.mrb[0].mxu0
  %v412 = vadd.f32 0.0, %v411
  %v413 = vpop.f32.mrb[0].mxu0
  %414 = vmatprep.mubr.f32.mxu0 0.0
  %415 = vmatmul.mubr.f32.gmra.mrb[0].mxu0 %v150
  %v416 = vpop.f32.mrb[0].mxu0
  %v417 = vadd.f32 0.0, %v416
  %v418 = vpop.f32.mrb[0].mxu0
  %419 = vmatprep.mubr.f32.mxu0 0.0
  %420 = vmatmul.mubr.f32.gmra.mrb[0].mxu0 %v153
  %v421 = vpop.f32.mrb[0].mxu0
  %v422 = vadd.f32 0.0, %v421
  %v423 = vpop.f32.mrb[0].mxu0
  %424 = vmatprep.mubr.f32.mxu0 0.0
  %425 = vmatmul.mubr.f32.gmra.mrb[0].mxu0 %v156
  %v426 = vpop.f32.mrb[0].mxu0
  %v427 = vadd.f32 0.0, %v426
  %v428 = vpop.f32.mrb[0].mxu0
  %429 = vmatprep.mubr.f32.mxu0 0.0
  %430 = vmatmul.mubr.f32.gmra.mrb[0].mxu0 %v159
  %v431 = vpop.f32.mrb[0].mxu0
  %v432 = vadd.f32 0.0, %v431
  %v433 = vpop.f32.mrb[0].mxu0
  %434 = vmatprep.mubr.f32.mxu0 0.0
  %435 = vmatmul.mubr.f32.gmra.mrb[0].mxu0 %v162
  %v436 = vpop.f32.mrb[0].mxu0
  %v437 = vadd.f32 0.0, %v436
  %v438 = vpop.f32.mrb[0].mxu0
  %439 = vmatprep.mubr.f32.mxu0 0.0
  %440 = vmatmul.mubr.f32.gmra.mrb[0].mxu0 %v165
  %v441 = vpop.f32.mrb[0].mxu0
  %v442 = vadd.f32 0.0, %v441
  %v443 = vpop.f32.mrb[0].mxu0
  %444 = vmatprep.mubr.f32.mxu0 0.0
  %445 = vmatmul.mubr.f32.gmra.mrb[0].mxu0 %v168
  %v446 = vpop.f32.mrb[0].mxu0
  %v447 = vadd.f32 0.0, %v446
  %v448 = vpop.f32.mrb[0].mxu0
  %449 = vmatprep.mubr.f32.mxu0 0.0
  %450 = vmatmul.mubr.f32.gmra.mrb[0].mxu0 %v171
  %v451 = vpop.f32.mrb[0].mxu0
  %v452 = vadd.f32 0.0, %v451
  %v453 = vpop.f32.mrb[0].mxu0
  %454 = vmatprep.mubr.f32.mxu0 0.0
  %455 = vmatmul.mubr.f32.gmra.mrb[0].mxu0 %v174
  %v456 = vpop.f32.mrb[0].mxu0
  %v457 = vadd.f32 0.0, %v456
  %v458 = vpop.f32.mrb[0].mxu0
  %459 = vmatprep.mubr.f32.mxu0 0.0
  %460 = vmatmul.mubr.f32.gmra.mrb[0].mxu0 %v177
  %v461 = vpop.f32.mrb[0].mxu0
  %v462 = vadd.f32 0.0, %v461
  %v463 = vpop.f32.mrb[0].mxu0
  %464 = vmatprep.mubr.f32.mxu0 0.0
  %465 = vmatmul.mubr.f32.gmra.mrb[0].mxu0 %v180
  %v466 = vpop.f32.mrb[0].mxu0
  %v467 = vadd.f32 0.0, %v466
  %v468 = vpop.f32.mrb[0].mxu0
  %469 = vmatprep.mubr.f32.mxu0 0.0
  %470 = vmatmul.mubr.f32.gmra.mrb[0].mxu0 %v183
  %v471 = vpop.f32.mrb[0].mxu0
  %v472 = vadd.f32 0.0, %v471
  %v473 = vpop.f32.mrb[0].mxu0
  %474 = vmatprep.mubr.f32.mxu0 0.0
  %475 = vmatmul.mubr.f32.gmra.mrb[0].mxu0 %v186
  %v476 = vpop.f32.mrb[0].mxu0
  %v477 = vadd.f32 0.0, %v476
  %v478 = vpop.f32.mrb[0].mxu0
  %479 = vmatprep.mubr.f32.mxu0 0.0
  %480 = vmatmul.mubr.f32.gmra.mrb[0].mxu0 %v189
  %v481 = vpop.f32.mrb[0].mxu0
  %v482 = vadd.f32 0.0, %v481
  %v483 = vpop.f32.mrb[0].mxu0
  %484 = vmatprep.mubr.f32.mxu0 0.0
  %485 = vmatmul.mubr.f32.gmra.mrb[0].mxu0 %v192
  %v486 = vpop.f32.mrb[0].mxu0
  %v487 = vadd.f32 0.0, %v486
  %v488 = vpop.f32.mrb[0].mxu0
  %489 = vmatprep.mubr.f32.mxu0 0.0
  %490 = vmatmul.mubr.f32.gmra.mrb[0].mxu0 %v195
  %v491 = vpop.f32.mrb[0].mxu0
  %v492 = vadd.f32 0.0, %v491
  %v493 = vpop.f32.mrb[0].mxu0
  %494 = vmatprep.mubr.f32.mxu0 0.0
  %495 = vmatmul.mubr.f32.gmra.mrb[0].mxu0 %v198
  %v496 = vpop.f32.mrb[0].mxu0
  %v497 = vadd.f32 0.0, %v496
  %v498 = vpop.f32.mrb[0].mxu0
  %499 = vmatprep.mubr.f32.mxu0 0.0
  %500 = vmatmul.mubr.f32.gmra.mrb[0].mxu0 %v201
  %v501 = vpop.f32.mrb[0].mxu0
  %v502 = vadd.f32 0.0, %v501
  %v503 = vpop.f32.mrb[0].mxu0
  %504 = vmatprep.mubr.f32.mxu0 0.0
  %505 = vmatmul.mubr.f32.gmra.mrb[0].mxu0 %v204
  %v506 = vpop.f32.mrb[0].mxu0
  %v507 = vadd.f32 0.0, %v506
  %v508 = vpop.f32.mrb[0].mxu0
  %509 = vmatprep.mubr.f32.mxu0 0.0
  %510 = vmatmul.mubr.f32.gmra.mrb[0].mxu0 %v207
  %v511 = vpop.f32.mrb[0].mxu0
  %v512 = vadd.f32 0.0, %v511
  %v513 = vpop.f32.mrb[0].mxu0
  %514 = vmatprep.mubr.f32.mxu0 0.0
  %515 = vmatmul.mubr.f32.gmra.mrb[0].mxu0 %v210
  %v516 = vpop.f32.mrb[0].mxu0
  %v517 = vadd.f32 0.0, %v516
  %v518 = vpop.f32.mrb[0].mxu0
  %519 = vmatprep.mubr.f32.mxu0 0.0
  %520 = vmatmul.mubr.f32.gmra.mrb[0].mxu0 %v213
  %v521 = vpop.f32.mrb[0].mxu0
  %v522 = vadd.f32 0.0, %v521
  %v523 = vpop.f32.mrb[0].mxu0
  %524 = vmatprep.mubr.f32.mxu0 0.0
  %525 = vmatmul.mubr.f32.gmra.mrb[0].mxu0 %v216
  %v526 = vpop.f32.mrb[0].mxu0
  %v527 = vadd.f32 0.0, %v526
  %v528 = vpop.f32.mrb[0].mxu0
  %529 = vmatprep.mubr.f32.mxu0 0.0
  %530 = vmatmul.mubr.f32.gmra.mrb[0].mxu0 %v219
  %v531 = vpop.f32.mrb[0].mxu0
  %v532 = vadd.f32 0.0, %v531
  %v533 = vpop.f32.mrb[0].mxu0
  %534 = vdwg.mxu0
  %s535 = scalar_lea.vmem %s0, 392
  %v536 = vld [vmem:[%s535] sm:$0xff]
  %v537 = vld [vmem:[%s535 + $0x8] sm:$0xff]
  %v538 = vld [vmem:[%s535 + $0x10] sm:$0xff]
  %v539 = vld [vmem:[%s535 + $0x18] sm:$0xff]
  %v540 = vld [vmem:[%s535 + $0x20] sm:$0xff]
  %v541 = vld [vmem:[%s535 + $0x28] sm:$0xff]
  %v542 = vld [vmem:[%s535 + $0x30] sm:$0xff]
  %v543 = vld [vmem:[%s535 + $0x38] sm:$0xff]
  %v544 = vld [vmem:[%s535 + $0x40] sm:$0xff]
  %v545 = vld [vmem:[%s535 + $0x48] sm:$0xff]
  %v546 = vld [vmem:[%s535 + $0x50] sm:$0xff]
  %v547 = vld [vmem:[%s535 + $0x58] sm:$0xff]
  %v548 = vld [vmem:[%s535 + $0x60] sm:$0xff]
  %v549 = vld [vmem:[%s535 + $0x68] sm:$0xff]
  %v550 = vld [vmem:[%s535 + $0x70] sm:$0xff]
  %v551 = vld [vmem:[%s535 + $0x78] sm:$0xff]
  %v552 = vld [vmem:[%s535 + $0x80] sm:$0xff]
  %v553 = vld [vmem:[%s535 + $0x88] sm:$0xff]
  %v554 = vld [vmem:[%s535 + $0x90] sm:$0xff]
  %v555 = vld [vmem:[%s535 + $0x98] sm:$0xff]
  %v556 = vld [vmem:[%s535 + $0xa0] sm:$0xff]
  %v557 = vld [vmem:[%s535 + $0xa8] sm:$0xff]
  %v558 = vld [vmem:[%s535 + $0xb0] sm:$0xff]
  %v559 = vld [vmem:[%s535 + $0xb8] sm:$0xff]
  %v560 = vld [vmem:[%s535 + $0xc0] sm:$0xff]
  %v561 = vld [vmem:[%s535 + $0xc8] sm:$0xff]
  %v562 = vld [vmem:[%s535 + $0xd0] sm:$0xff]
  %v563 = vld [vmem:[%s535 + $0xd8] sm:$0xff]
  %v564 = vld [vmem:[%s535 + $0xe0] sm:$0xff]
  %v565 = vld [vmem:[%s535 + $0xe8] sm:$0xff]
  %v566 = vld [vmem:[%s535 + $0xf0] sm:$0xff]
  %v567 = vld [vmem:[%s535 + $0xf8] sm:$0xff]
  %v568 = vld [vmem:[%s535 + $0x100] sm:$0xff]
  %v569 = vld [vmem:[%s535 + $0x108] sm:$0xff]
  %v570 = vld [vmem:[%s535 + $0x110] sm:$0xff]
  %v571 = vld [vmem:[%s535 + $0x118] sm:$0xff]
  %v572 = vld [vmem:[%s535 + $0x120] sm:$0xff]
  %v573 = vld [vmem:[%s535 + $0x128] sm:$0xff]
  %v574 = vld [vmem:[%s535 + $0x130] sm:$0xff]
  %v575 = vld [vmem:[%s535 + $0x138] sm:$0xff]
  %v576 = vld [vmem:[%s535 + $0x140] sm:$0xff]
  %v577 = vld [vmem:[%s535 + $0x148] sm:$0xff]
  %v578 = vld [vmem:[%s535 + $0x150] sm:$0xff]
  %v579 = vld [vmem:[%s535 + $0x158] sm:$0xff]
  %v580 = vld [vmem:[%s535 + $0x160] sm:$0xff]
  %v581 = vld [vmem:[%s535 + $0x168] sm:$0xff]
  %v582 = vld [vmem:[%s535 + $0x170] sm:$0xff]
  %v583 = vld [vmem:[%s535 + $0x178] sm:$0xff]
  %v584 = vld [vmem:[%s535 + $0x180] sm:$0xff]
  %v586 = vsel %vm73, %v536, 0
  %v589 = vsel %vm73, %v537, 0
  %v592 = vsel %vm73, %v538, 0
  %v595 = vsel %vm73, %v539, 0
  %v598 = vsel %vm73, %v540, 0
  %v601 = vsel %vm73, %v541, 0
  %v604 = vsel %vm73, %v542, 0
  %v607 = vsel %vm73, %v543, 0
  %v610 = vsel %vm73, %v544, 0
  %v613 = vsel %vm73, %v545, 0
  %v616 = vsel %vm73, %v546, 0
  %v619 = vsel %vm73, %v547, 0
  %v622 = vsel %vm73, %v548, 0
  %v625 = vsel %vm73, %v549, 0
  %v628 = vsel %vm73, %v550, 0
  %v631 = vsel %vm73, %v551, 0
  %v634 = vsel %vm73, %v552, 0
  %v637 = vsel %vm73, %v553, 0
  %v640 = vsel %vm73, %v554, 0
  %v643 = vsel %vm73, %v555, 0
  %v646 = vsel %vm73, %v556, 0
  %v649 = vsel %vm73, %v557, 0
  %v652 = vsel %vm73, %v558, 0
  %v655 = vsel %vm73, %v559, 0
  %v658 = vsel %vm73, %v560, 0
  %v661 = vsel %vm73, %v561, 0
  %v664 = vsel %vm73, %v562, 0
  %v667 = vsel %vm73, %v563, 0
  %v670 = vsel %vm73, %v564, 0
  %v673 = vsel %vm73, %v565, 0
  %v676 = vsel %vm73, %v566, 0
  %v679 = vsel %vm73, %v567, 0
  %v682 = vsel %vm73, %v568, 0
  %v685 = vsel %vm73, %v569, 0
  %v688 = vsel %vm73, %v570, 0
  %v691 = vsel %vm73, %v571, 0
  %v694 = vsel %vm73, %v572, 0
  %v697 = vsel %vm73, %v573, 0
  %v700 = vsel %vm73, %v574, 0
  %v703 = vsel %vm73, %v575, 0
  %v706 = vsel %vm73, %v576, 0
  %v709 = vsel %vm73, %v577, 0
  %v712 = vsel %vm73, %v578, 0
  %v715 = vsel %vm73, %v579, 0
  %v718 = vsel %vm73, %v580, 0
  %v721 = vsel %vm73, %v581, 0
  %v724 = vsel %vm73, %v582, 0
  %v727 = vsel %vm73, %v583, 0
  %v730 = vsel %vm73, %v584, 0
  %732 = vmatprep.subr.mxu0 0.0
  %733 = vmatpush1.msra.mxu0 %v14
  %734 = vmatprep.subr.mxu0 0.0
  %735 = vmatpush1.msra.mxu0 %v15
  %736 = vmatprep.subr.mxu0 0.0
  %737 = vmatpush1.msra.mxu0 %v16
  %738 = vmatprep.subr.mxu0 0.0
  %739 = vmatpush1.msra.mxu0 %v17
  %740 = vmatprep.subr.mxu0 0.0
  %741 = vmatpush1.msra.mxu0 %v18
  %742 = vmatprep.subr.mxu0 0.0
  %743 = vmatpush1.msra.mxu0 %v19
  %744 = vmatprep.subr.mxu0 0.0
  %745 = vmatpush1.msra.mxu0 %v20
  %746 = vmatprep.subr.mxu0 0.0
  %747 = vmatpush1.msra.mxu0 %v21
  %748 = vmatprep.subr.mxu0 0.0
  %749 = vmatpush1.msra.mxu0 %v22
  %750 = vmatprep.subr.mxu0 0.0
  %751 = vmatpush1.msra.mxu0 %v223
  %752 = vmatprep.subr.mxu0 0.0
  %753 = vmatpush1.msra.mxu0 0.0
  %754 = vmatprep.subr.mxu0 0.0
  %755 = vmatpush1.msra.mxu0 0.0
  %756 = vmatprep.subr.mxu0 0.0
  %757 = vmatpush1.msra.mxu0 0.0
  %758 = vmatprep.subr.mxu0 0.0
  %759 = vmatpush1.msra.mxu0 0.0
  %760 = vmatprep.subr.mxu0 0.0
  %761 = vmatpush1.msra.mxu0 0.0
  %762 = vmatprep.subr.mxu0 0.0
  %763 = vmatpush1.msra.mxu0 0.0
  %764 = vmatprep.subr.mxu0 0.0
  %765 = vmatpush1.msra.mxu0 0.0
  %766 = vmatprep.subr.mxu0 0.0
  %767 = vmatpush1.msra.mxu0 0.0
  %768 = vmatprep.subr.mxu0 0.0
  %769 = vmatpush1.msra.mxu0 0.0
  %770 = vmatprep.subr.mxu0 0.0
  %771 = vmatpush1.msra.mxu0 0.0
  %772 = vmatprep.subr.mxu0 0.0
  %773 = vmatpush1.msra.mxu0 0.0
  %774 = vmatprep.subr.mxu0 0.0
  %775 = vmatpush1.msra.mxu0 0.0
  %776 = vmatprep.subr.mxu0 0.0
  %777 = vmatpush1.msra.mxu0 0.0
  %778 = vmatprep.subr.mxu0 0.0
  %779 = vmatpush1.msra.mxu0 0.0
  %780 = vmatprep.subr.mxu0 0.0
  %781 = vmatpush1.msra.mxu0 0.0
  %782 = vmatprep.subr.mxu0 0.0
  %783 = vmatpush1.msra.mxu0 0.0
  %784 = vmatprep.subr.mxu0 0.0
  %785 = vmatpush1.msra.mxu0 0.0
  %786 = vmatprep.subr.mxu0 0.0
  %787 = vmatpush1.msra.mxu0 0.0
  %788 = vmatprep.subr.mxu0 0.0
  %789 = vmatpush1.msra.mxu0 0.0
  %790 = vmatprep.subr.mxu0 0.0
  %791 = vmatpush1.msra.mxu0 0.0
  %792 = vmatprep.subr.mxu0 0.0
  %793 = vmatpush1.msra.mxu0 0.0
  %794 = vmatprep.subr.mxu0 0.0
  %795 = vmatpush1.msra.mxu0 0.0
  %796 = vmatprep.mubr.f32.mxu0 0.0
  %797 = vmatmul.mubr.f32.gmra.mrb[0].mxu0 %v586
  %v798 = vpop.f32.mrb[0].mxu0
  %v799 = vadd.f32 0.0, %v798
  %v800 = vpop.f32.mrb[0].mxu0
  %801 = vmatprep.mubr.f32.mxu0 0.0
  %802 = vmatmul.mubr.f32.gmra.mrb[0].mxu0 %v589
  %v803 = vpop.f32.mrb[0].mxu0
  %v804 = vadd.f32 0.0, %v803
  %v805 = vpop.f32.mrb[0].mxu0
  %806 = vmatprep.mubr.f32.mxu0 0.0
  %807 = vmatmul.mubr.f32.gmra.mrb[0].mxu0 %v592
  %v808 = vpop.f32.mrb[0].mxu0
  %v809 = vadd.f32 0.0, %v808
  %v810 = vpop.f32.mrb[0].mxu0
  %811 = vmatprep.mubr.f32.mxu0 0.0
  %812 = vmatmul.mubr.f32.gmra.mrb[0].mxu0 %v595
  %v813 = vpop.f32.mrb[0].mxu0
  %v814 = vadd.f32 0.0, %v813
  %v815 = vpop.f32.mrb[0].mxu0
  %816 = vmatprep.mubr.f32.mxu0 0.0
  %817 = vmatmul.mubr.f32.gmra.mrb[0].mxu0 %v598
  %v818 = vpop.f32.mrb[0].mxu0
  %v819 = vadd.f32 0.0, %v818
  %v820 = vpop.f32.mrb[0].mxu0
  %821 = vmatprep.mubr.f32.mxu0 0.0
  %822 = vmatmul.mubr.f32.gmra.mrb[0].mxu0 %v601
  %v823 = vpop.f32.mrb[0].mxu0
  %v824 = vadd.f32 0.0, %v823
  %v825 = vpop.f32.mrb[0].mxu0
  %826 = vmatprep.mubr.f32.mxu0 0.0
  %827 = vmatmul.mubr.f32.gmra.mrb[0].mxu0 %v604
  %v828 = vpop.f32.mrb[0].mxu0
  %v829 = vadd.f32 0.0, %v828
  %v830 = vpop.f32.mrb[0].mxu0
  %831 = vmatprep.mubr.f32.mxu0 0.0
  %832 = vmatmul.mubr.f32.gmra.mrb[0].mxu0 %v607
  %v833 = vpop.f32.mrb[0].mxu0
  %v834 = vadd.f32 0.0, %v833
  %v835 = vpop.f32.mrb[0].mxu0
  %836 = vmatprep.mubr.f32.mxu0 0.0
  %837 = vmatmul.mubr.f32.gmra.mrb[0].mxu0 %v610
  %v838 = vpop.f32.mrb[0].mxu0
  %v839 = vadd.f32 0.0, %v838
  %v840 = vpop.f32.mrb[0].mxu0
  %841 = vmatprep.mubr.f32.mxu0 0.0
  %842 = vmatmul.mubr.f32.gmra.mrb[0].mxu0 %v613
  %v843 = vpop.f32.mrb[0].mxu0
  %v844 = vadd.f32 0.0, %v843
  %v845 = vpop.f32.mrb[0].mxu0
  %846 = vmatprep.mubr.f32.mxu0 0.0
  %847 = vmatmul.mubr.f32.gmra.mrb[0].mxu0 %v616
  %v848 = vpop.f32.mrb[0].mxu0
  %v849 = vadd.f32 0.0, %v848
  %v850 = vpop.f32.mrb[0].mxu0
  %851 = vmatprep.mubr.f32.mxu0 0.0
  %852 = vmatmul.mubr.f32.gmra.mrb[0].mxu0 %v619
  %v853 = vpop.f32.mrb[0].mxu0
  %v854 = vadd.f32 0.0, %v853
  %v855 = vpop.f32.mrb[0].mxu0
  %856 = vmatprep.mubr.f32.mxu0 0.0
  %857 = vmatmul.mubr.f32.gmra.mrb[0].mxu0 %v622
  %v858 = vpop.f32.mrb[0].mxu0
  %v859 = vadd.f32 0.0, %v858
  %v860 = vpop.f32.mrb[0].mxu0
  %861 = vmatprep.mubr.f32.mxu0 0.0
  %862 = vmatmul.mubr.f32.gmra.mrb[0].mxu0 %v625
  %v863 = vpop.f32.mrb[0].mxu0
  %v864 = vadd.f32 0.0, %v863
  %v865 = vpop.f32.mrb[0].mxu0
  %866 = vmatprep.mubr.f32.mxu0 0.0
  %867 = vmatmul.mubr.f32.gmra.mrb[0].mxu0 %v628
  %v868 = vpop.f32.mrb[0].mxu0
  %v869 = vadd.f32 0.0, %v868
  %v870 = vpop.f32.mrb[0].mxu0
  %871 = vmatprep.mubr.f32.mxu0 0.0
  %872 = vmatmul.mubr.f32.gmra.mrb[0].mxu0 %v631
  %v873 = vpop.f32.mrb[0].mxu0
  %v874 = vadd.f32 0.0, %v873
  %v875 = vpop.f32.mrb[0].mxu0
  %876 = vmatprep.mubr.f32.mxu0 0.0
  %877 = vmatmul.mubr.f32.gmra.mrb[0].mxu0 %v634
  %v878 = vpop.f32.mrb[0].mxu0
  %v879 = vadd.f32 0.0, %v878
  %v880 = vpop.f32.mrb[0].mxu0
  %881 = vmatprep.mubr.f32.mxu0 0.0
  %882 = vmatmul.mubr.f32.gmra.mrb[0].mxu0 %v637
  %v883 = vpop.f32.mrb[0].mxu0
  %v884 = vadd.f32 0.0, %v883
  %v885 = vpop.f32.mrb[0].mxu0
  %886 = vmatprep.mubr.f32.mxu0 0.0
  %887 = vmatmul.mubr.f32.gmra.mrb[0].mxu0 %v640
  %v888 = vpop.f32.mrb[0].mxu0
  %v889 = vadd.f32 0.0, %v888
  %v890 = vpop.f32.mrb[0].mxu0
  %891 = vmatprep.mubr.f32.mxu0 0.0
  %892 = vmatmul.mubr.f32.gmra.mrb[0].mxu0 %v643
  %v893 = vpop.f32.mrb[0].mxu0
  %v894 = vadd.f32 0.0, %v893
  %v895 = vpop.f32.mrb[0].mxu0
  %896 = vmatprep.mubr.f32.mxu0 0.0
  %897 = vmatmul.mubr.f32.gmra.mrb[0].mxu0 %v646
  %v898 = vpop.f32.mrb[0].mxu0
  %v899 = vadd.f32 0.0, %v898
  %v900 = vpop.f32.mrb[0].mxu0
  %901 = vmatprep.mubr.f32.mxu0 0.0
  %902 = vmatmul.mubr.f32.gmra.mrb[0].mxu0 %v649
  %v903 = vpop.f32.mrb[0].mxu0
  %v904 = vadd.f32 0.0, %v903
  %v905 = vpop.f32.mrb[0].mxu0
  %906 = vmatprep.mubr.f32.mxu0 0.0
  %907 = vmatmul.mubr.f32.gmra.mrb[0].mxu0 %v652
  %v908 = vpop.f32.mrb[0].mxu0
  %v909 = vadd.f32 0.0, %v908
  %v910 = vpop.f32.mrb[0].mxu0
  %911 = vmatprep.mubr.f32.mxu0 0.0
  %912 = vmatmul.mubr.f32.gmra.mrb[0].mxu0 %v655
  %v913 = vpop.f32.mrb[0].mxu0
  %v914 = vadd.f32 0.0, %v913
  %v915 = vpop.f32.mrb[0].mxu0
  %916 = vmatprep.mubr.f32.mxu0 0.0
  %917 = vmatmul.mubr.f32.gmra.mrb[0].mxu0 %v658
  %v918 = vpop.f32.mrb[0].mxu0
  %v919 = vadd.f32 0.0, %v918
  %v920 = vpop.f32.mrb[0].mxu0
  %921 = vmatprep.mubr.f32.mxu0 0.0
  %922 = vmatmul.mubr.f32.gmra.mrb[0].mxu0 %v661
  %v923 = vpop.f32.mrb[0].mxu0
  %v924 = vadd.f32 0.0, %v923
  %v925 = vpop.f32.mrb[0].mxu0
  %926 = vmatprep.mubr.f32.mxu0 0.0
  %927 = vmatmul.mubr.f32.gmra.mrb[0].mxu0 %v664
  %v928 = vpop.f32.mrb[0].mxu0
  %v929 = vadd.f32 0.0, %v928
  %v930 = vpop.f32.mrb[0].mxu0
  %931 = vmatprep.mubr.f32.mxu0 0.0
  %932 = vmatmul.mubr.f32.gmra.mrb[0].mxu0 %v667
  %v933 = vpop.f32.mrb[0].mxu0
  %v934 = vadd.f32 0.0, %v933
  %v935 = vpop.f32.mrb[0].mxu0
  %936 = vmatprep.mubr.f32.mxu0 0.0
  %937 = vmatmul.mubr.f32.gmra.mrb[0].mxu0 %v670
  %v938 = vpop.f32.mrb[0].mxu0
  %v939 = vadd.f32 0.0, %v938
  %v940 = vpop.f32.mrb[0].mxu0
  %941 = vmatprep.mubr.f32.mxu0 0.0
  %942 = vmatmul.mubr.f32.gmra.mrb[0].mxu0 %v673
  %v943 = vpop.f32.mrb[0].mxu0
  %v944 = vadd.f32 0.0, %v943
  %v945 = vpop.f32.mrb[0].mxu0
  %946 = vmatprep.mubr.f32.mxu0 0.0
  %947 = vmatmul.mubr.f32.gmra.mrb[0].mxu0 %v676
  %v948 = vpop.f32.mrb[0].mxu0
  %v949 = vadd.f32 0.0, %v948
  %v950 = vpop.f32.mrb[0].mxu0
  %951 = vmatprep.mubr.f32.mxu0 0.0
  %952 = vmatmul.mubr.f32.gmra.mrb[0].mxu0 %v679
  %v953 = vpop.f32.mrb[0].mxu0
  %v954 = vadd.f32 0.0, %v953
  %v955 = vpop.f32.mrb[0].mxu0
  %956 = vmatprep.mubr.f32.mxu0 0.0
  %957 = vmatmul.mubr.f32.gmra.mrb[0].mxu0 %v682
  %v958 = vpop.f32.mrb[0].mxu0
  %v959 = vadd.f32 0.0, %v958
  %v960 = vpop.f32.mrb[0].mxu0
  %961 = vmatprep.mubr.f32.mxu0 0.0
  %962 = vmatmul.mubr.f32.gmra.mrb[0].mxu0 %v685
  %v963 = vpop.f32.mrb[0].mxu0
  %v964 = vadd.f32 0.0, %v963
  %v965 = vpop.f32.mrb[0].mxu0
  %966 = vmatprep.mubr.f32.mxu0 0.0
  %967 = vmatmul.mubr.f32.gmra.mrb[0].mxu0 %v688
  %v968 = vpop.f32.mrb[0].mxu0
  %v969 = vadd.f32 0.0, %v968
  %v970 = vpop.f32.mrb[0].mxu0
  %971 = vmatprep.mubr.f32.mxu0 0.0
  %972 = vmatmul.mubr.f32.gmra.mrb[0].mxu0 %v691
  %v973 = vpop.f32.mrb[0].mxu0
  %v974 = vadd.f32 0.0, %v973
  %v975 = vpop.f32.mrb[0].mxu0
  %976 = vmatprep.mubr.f32.mxu0 0.0
  %977 = vmatmul.mubr.f32.gmra.mrb[0].mxu0 %v694
  %v978 = vpop.f32.mrb[0].mxu0
  %v979 = vadd.f32 0.0, %v978
  %v980 = vpop.f32.mrb[0].mxu0
  %981 = vmatprep.mubr.f32.mxu0 0.0
  %982 = vmatmul.mubr.f32.gmra.mrb[0].mxu0 %v697
  %v983 = vpop.f32.mrb[0].mxu0
  %v984 = vadd.f32 0.0, %v983
  %v985 = vpop.f32.mrb[0].mxu0
  %986 = vmatprep.mubr.f32.mxu0 0.0
  %987 = vmatmul.mubr.f32.gmra.mrb[0].mxu0 %v700
  %v988 = vpop.f32.mrb[0].mxu0
  %v989 = vadd.f32 0.0, %v988
  %v990 = vpop.f32.mrb[0].mxu0
  %991 = vmatprep.mubr.f32.mxu0 0.0
  %992 = vmatmul.mubr.f32.gmra.mrb[0].mxu0 %v703
  %v993 = vpop.f32.mrb[0].mxu0
  %v994 = vadd.f32 0.0, %v993
  %v995 = vpop.f32.mrb[0].mxu0
  %996 = vmatprep.mubr.f32.mxu0 0.0
  %997 = vmatmul.mubr.f32.gmra.mrb[0].mxu0 %v706
  %v998 = vpop.f32.mrb[0].mxu0
  %v999 = vadd.f32 0.0, %v998
  %v1000 = vpop.f32.mrb[0].mxu0
  %1001 = vmatprep.mubr.f32.mxu0 0.0
  %1002 = vmatmul.mubr.f32.gmra.mrb[0].mxu0 %v709
  %v1003 = vpop.f32.mrb[0].mxu0
  %v1004 = vadd.f32 0.0, %v1003
  %v1005 = vpop.f32.mrb[0].mxu0
  %1006 = vmatprep.mubr.f32.mxu0 0.0
  %1007 = vmatmul.mubr.f32.gmra.mrb[0].mxu0 %v712
  %v1008 = vpop.f32.mrb[0].mxu0
  %v1009 = vadd.f32 0.0, %v1008
  %v1010 = vpop.f32.mrb[0].mxu0
  %1011 = vmatprep.mubr.f32.mxu0 0.0
  %1012 = vmatmul.mubr.f32.gmra.mrb[0].mxu0 %v715
  %v1013 = vpop.f32.mrb[0].mxu0
  %v1014 = vadd.f32 0.0, %v1013
  %v1015 = vpop.f32.mrb[0].mxu0
  %1016 = vmatprep.mubr.f32.mxu0 0.0
  %1017 = vmatmul.mubr.f32.gmra.mrb[0].mxu0 %v718
  %v1018 = vpop.f32.mrb[0].mxu0
  %v1019 = vadd.f32 0.0, %v1018
  %v1020 = vpop.f32.mrb[0].mxu0
  %1021 = vmatprep.mubr.f32.mxu0 0.0
  %1022 = vmatmul.mubr.f32.gmra.mrb[0].mxu0 %v721
  %v1023 = vpop.f32.mrb[0].mxu0
  %v1024 = vadd.f32 0.0, %v1023
  %v1025 = vpop.f32.mrb[0].mxu0
  %1026 = vmatprep.mubr.f32.mxu0 0.0
  %1027 = vmatmul.mubr.f32.gmra.mrb[0].mxu0 %v724
  %v1028 = vpop.f32.mrb[0].mxu0
  %v1029 = vadd.f32 0.0, %v1028
  %v1030 = vpop.f32.mrb[0].mxu0
  %1031 = vmatprep.mubr.f32.mxu0 0.0
  %1032 = vmatmul.mubr.f32.gmra.mrb[0].mxu0 %v727
  %v1033 = vpop.f32.mrb[0].mxu0
  %v1034 = vadd.f32 0.0, %v1033
  %v1035 = vpop.f32.mrb[0].mxu0
  %1036 = vmatprep.mubr.f32.mxu0 0.0
  %1037 = vmatmul.mubr.f32.gmra.mrb[0].mxu0 %v730
  %v1038 = vpop.f32.mrb[0].mxu0
  %v1039 = vadd.f32 0.0, %v1038
  %v1040 = vpop.f32.mrb[0].mxu0
  %1041 = vdwg.mxu0
  %s1042 = scalar_lea.vmem %s0, 784
  %v1043 = vld [vmem:[%s1042] sm:$0xff]
  %v1044 = vld [vmem:[%s1042 + $0x8] sm:$0xff]
  %v1045 = vld [vmem:[%s1042 + $0x10] sm:$0xff]
  %v1046 = vld [vmem:[%s1042 + $0x18] sm:$0xff]
  %v1047 = vld [vmem:[%s1042 + $0x20] sm:$0xff]
  %v1048 = vld [vmem:[%s1042 + $0x28] sm:$0xff]
  %v1049 = vld [vmem:[%s1042 + $0x30] sm:$0xff]
  %v1050 = vld [vmem:[%s1042 + $0x38] sm:$0xff]
  %v1051 = vld [vmem:[%s1042 + $0x40] sm:$0xff]
  %v1052 = vld [vmem:[%s1042 + $0x48] sm:$0xff]
  %v1053 = vld [vmem:[%s1042 + $0x50] sm:$0xff]
  %v1054 = vld [vmem:[%s1042 + $0x58] sm:$0xff]
  %v1055 = vld [vmem:[%s1042 + $0x60] sm:$0xff]
  %v1056 = vld [vmem:[%s1042 + $0x68] sm:$0xff]
  %v1057 = vld [vmem:[%s1042 + $0x70] sm:$0xff]
  %v1058 = vld [vmem:[%s1042 + $0x78] sm:$0xff]
  %v1059 = vld [vmem:[%s1042 + $0x80] sm:$0xff]
  %v1060 = vld [vmem:[%s1042 + $0x88] sm:$0xff]
  %v1061 = vld [vmem:[%s1042 + $0x90] sm:$0xff]
  %v1062 = vld [vmem:[%s1042 + $0x98] sm:$0xff]
  %v1063 = vld [vmem:[%s1042 + $0xa0] sm:$0xff]
  %v1064 = vld [vmem:[%s1042 + $0xa8] sm:$0xff]
  %v1065 = vld [vmem:[%s1042 + $0xb0] sm:$0xff]
  %v1066 = vld [vmem:[%s1042 + $0xb8] sm:$0xff]
  %v1067 = vld [vmem:[%s1042 + $0xc0] sm:$0xff]
  %v1068 = vld [vmem:[%s1042 + $0xc8] sm:$0xff]
  %v1069 = vld [vmem:[%s1042 + $0xd0] sm:$0xff]
  %v1070 = vld [vmem:[%s1042 + $0xd8] sm:$0xff]
  %v1071 = vld [vmem:[%s1042 + $0xe0] sm:$0xff]
  %v1072 = vld [vmem:[%s1042 + $0xe8] sm:$0xff]
  %v1073 = vld [vmem:[%s1042 + $0xf0] sm:$0xff]
  %v1074 = vld [vmem:[%s1042 + $0xf8] sm:$0xff]
  %v1075 = vld [vmem:[%s1042 + $0x100] sm:$0xff]
  %v1076 = vld [vmem:[%s1042 + $0x108] sm:$0xff]
  %v1077 = vld [vmem:[%s1042 + $0x110] sm:$0xff]
  %v1078 = vld [vmem:[%s1042 + $0x118] sm:$0xff]
  %v1079 = vld [vmem:[%s1042 + $0x120] sm:$0xff]
  %v1080 = vld [vmem:[%s1042 + $0x128] sm:$0xff]
  %v1081 = vld [vmem:[%s1042 + $0x130] sm:$0xff]
  %v1082 = vld [vmem:[%s1042 + $0x138] sm:$0xff]
  %v1083 = vld [vmem:[%s1042 + $0x140] sm:$0xff]
  %v1084 = vld [vmem:[%s1042 + $0x148] sm:$0xff]
  %v1085 = vld [vmem:[%s1042 + $0x150] sm:$0xff]
  %v1086 = vld [vmem:[%s1042 + $0x158] sm:$0xff]
  %v1087 = vld [vmem:[%s1042 + $0x160] sm:$0xff]
  %v1088 = vld [vmem:[%s1042 + $0x168] sm:$0xff]
  %v1089 = vld [vmem:[%s1042 + $0x170] sm:$0xff]
  %v1090 = vld [vmem:[%s1042 + $0x178] sm:$0xff]
  %v1091 = vld [vmem:[%s1042 + $0x180] sm:$0xff]
  %v1093 = vsel %vm73, %v1043, 0
  %v1096 = vsel %vm73, %v1044, 0
  %v1099 = vsel %vm73, %v1045, 0
  %v1102 = vsel %vm73, %v1046, 0
  %v1105 = vsel %vm73, %v1047, 0
  %v1108 = vsel %vm73, %v1048, 0
  %v1111 = vsel %vm73, %v1049, 0
  %v1114 = vsel %vm73, %v1050, 0
  %v1117 = vsel %vm73, %v1051, 0
  %v1120 = vsel %vm73, %v1052, 0
  %v1123 = vsel %vm73, %v1053, 0
  %v1126 = vsel %vm73, %v1054, 0
  %v1129 = vsel %vm73, %v1055, 0
  %v1132 = vsel %vm73, %v1056, 0
  %v1135 = vsel %vm73, %v1057, 0
  %v1138 = vsel %vm73, %v1058, 0
  %v1141 = vsel %vm73, %v1059, 0
  %v1144 = vsel %vm73, %v1060, 0
  %v1147 = vsel %vm73, %v1061, 0
  %v1150 = vsel %vm73, %v1062, 0
  %v1153 = vsel %vm73, %v1063, 0
  %v1156 = vsel %vm73, %v1064, 0
  %v1159 = vsel %vm73, %v1065, 0
  %v1162 = vsel %vm73, %v1066, 0
  %v1165 = vsel %vm73, %v1067, 0
  %v1168 = vsel %vm73, %v1068, 0
  %v1171 = vsel %vm73, %v1069, 0
  %v1174 = vsel %vm73, %v1070, 0
  %v1177 = vsel %vm73, %v1071, 0
  %v1180 = vsel %vm73, %v1072, 0
  %v1183 = vsel %vm73, %v1073, 0
  %v1186 = vsel %vm73, %v1074, 0
  %v1189 = vsel %vm73, %v1075, 0
  %v1192 = vsel %vm73, %v1076, 0
  %v1195 = vsel %vm73, %v1077, 0
  %v1198 = vsel %vm73, %v1078, 0
  %v1201 = vsel %vm73, %v1079, 0
  %v1204 = vsel %vm73, %v1080, 0
  %v1207 = vsel %vm73, %v1081, 0
  %v1210 = vsel %vm73, %v1082, 0
  %v1213 = vsel %vm73, %v1083, 0
  %v1216 = vsel %vm73, %v1084, 0
  %v1219 = vsel %vm73, %v1085, 0
  %v1222 = vsel %vm73, %v1086, 0
  %v1225 = vsel %vm73, %v1087, 0
  %v1228 = vsel %vm73, %v1088, 0
  %v1231 = vsel %vm73, %v1089, 0
  %v1234 = vsel %vm73, %v1090, 0
  %v1237 = vsel %vm73, %v1091, 0
  %1239 = vmatprep.subr.mxu0 0.0
  %1240 = vmatpush1.msra.mxu0 %v14
  %1241 = vmatprep.subr.mxu0 0.0
  %1242 = vmatpush1.msra.mxu0 %v15
  %1243 = vmatprep.subr.mxu0 0.0
  %1244 = vmatpush1.msra.mxu0 %v16
  %1245 = vmatprep.subr.mxu0 0.0
  %1246 = vmatpush1.msra.mxu0 %v17
  %1247 = vmatprep.subr.mxu0 0.0
  %1248 = vmatpush1.msra.mxu0 %v18
  %1249 = vmatprep.subr.mxu0 0.0
  %1250 = vmatpush1.msra.mxu0 %v19
  %1251 = vmatprep.subr.mxu0 0.0
  %1252 = vmatpush1.msra.mxu0 %v20
  %1253 = vmatprep.subr.mxu0 0.0
  %1254 = vmatpush1.msra.mxu0 %v21
  %1255 = vmatprep.subr.mxu0 0.0
  %1256 = vmatpush1.msra.mxu0 %v22
  %1257 = vmatprep.subr.mxu0 0.0
  %1258 = vmatpush1.msra.mxu0 %v223
  %1259 = vmatprep.subr.mxu0 0.0
  %1260 = vmatpush1.msra.mxu0 0.0
  %1261 = vmatprep.subr.mxu0 0.0
  %1262 = vmatpush1.msra.mxu0 0.0
  %1263 = vmatprep.subr.mxu0 0.0
  %1264 = vmatpush1.msra.mxu0 0.0
  %1265 = vmatprep.subr.mxu0 0.0
  %1266 = vmatpush1.msra.mxu0 0.0
  %1267 = vmatprep.subr.mxu0 0.0
  %1268 = vmatpush1.msra.mxu0 0.0
  %1269 = vmatprep.subr.mxu0 0.0
  %1270 = vmatpush1.msra.mxu0 0.0
  %1271 = vmatprep.subr.mxu0 0.0
  %1272 = vmatpush1.msra.mxu0 0.0
  %1273 = vmatprep.subr.mxu0 0.0
  %1274 = vmatpush1.msra.mxu0 0.0
  %1275 = vmatprep.subr.mxu0 0.0
  %1276 = vmatpush1.msra.mxu0 0.0
  %1277 = vmatprep.subr.mxu0 0.0
  %1278 = vmatpush1.msra.mxu0 0.0
  %1279 = vmatprep.subr.mxu0 0.0
  %1280 = vmatpush1.msra.mxu0 0.0
  %1281 = vmatprep.subr.mxu0 0.0
  %1282 = vmatpush1.msra.mxu0 0.0
  %1283 = vmatprep.subr.mxu0 0.0
  %1284 = vmatpush1.msra.mxu0 0.0
  %1285 = vmatprep.subr.mxu0 0.0
  %1286 = vmatpush1.msra.mxu0 0.0
  %1287 = vmatprep.subr.mxu0 0.0
  %1288 = vmatpush1.msra.mxu0 0.0
  %1289 = vmatprep.subr.mxu0 0.0
  %1290 = vmatpush1.msra.mxu0 0.0
  %1291 = vmatprep.subr.mxu0 0.0
  %1292 = vmatpush1.msra.mxu0 0.0
  %1293 = vmatprep.subr.mxu0 0.0
  %1294 = vmatpush1.msra.mxu0 0.0
  %1295 = vmatprep.subr.mxu0 0.0
  %1296 = vmatpush1.msra.mxu0 0.0
  %1297 = vmatprep.subr.mxu0 0.0
  %1298 = vmatpush1.msra.mxu0 0.0
  %1299 = vmatprep.subr.mxu0 0.0
  %1300 = vmatpush1.msra.mxu0 0.0
  %1301 = vmatprep.subr.mxu0 0.0
  %1302 = vmatpush1.msra.mxu0 0.0
  %1303 = vmatprep.mubr.f32.mxu0 0.0
  %1304 = vmatmul.mubr.f32.gmra.mrb[0].mxu0 %v1093
  %v1305 = vpop.f32.mrb[0].mxu0
  %v1306 = vadd.f32 0.0, %v1305
  %v1307 = vpop.f32.mrb[0].mxu0
  %1308 = vmatprep.mubr.f32.mxu0 0.0
  %1309 = vmatmul.mubr.f32.gmra.mrb[0].mxu0 %v1096
  %v1310 = vpop.f32.mrb[0].mxu0
  %v1311 = vadd.f32 0.0, %v1310
  %v1312 = vpop.f32.mrb[0].mxu0
  %1313 = vmatprep.mubr.f32.mxu0 0.0
  %1314 = vmatmul.mubr.f32.gmra.mrb[0].mxu0 %v1099
  %v1315 = vpop.f32.mrb[0].mxu0
  %v1316 = vadd.f32 0.0, %v1315
  %v1317 = vpop.f32.mrb[0].mxu0
  %1318 = vmatprep.mubr.f32.mxu0 0.0
  %1319 = vmatmul.mubr.f32.gmra.mrb[0].mxu0 %v1102
  %v1320 = vpop.f32.mrb[0].mxu0
  %v1321 = vadd.f32 0.0, %v1320
  %v1322 = vpop.f32.mrb[0].mxu0
  %1323 = vmatprep.mubr.f32.mxu0 0.0
  %1324 = vmatmul.mubr.f32.gmra.mrb[0].mxu0 %v1105
  %v1325 = vpop.f32.mrb[0].mxu0
  %v1326 = vadd.f32 0.0, %v1325
  %v1327 = vpop.f32.mrb[0].mxu0
  %1328 = vmatprep.mubr.f32.mxu0 0.0
  %1329 = vmatmul.mubr.f32.gmra.mrb[0].mxu0 %v1108
  %v1330 = vpop.f32.mrb[0].mxu0
  %v1331 = vadd.f32 0.0, %v1330
  %v1332 = vpop.f32.mrb[0].mxu0
  %1333 = vmatprep.mubr.f32.mxu0 0.0
  %1334 = vmatmul.mubr.f32.gmra.mrb[0].mxu0 %v1111
  %v1335 = vpop.f32.mrb[0].mxu0
  %v1336 = vadd.f32 0.0, %v1335
  %v1337 = vpop.f32.mrb[0].mxu0
  %1338 = vmatprep.mubr.f32.mxu0 0.0
  %1339 = vmatmul.mubr.f32.gmra.mrb[0].mxu0 %v1114
  %v1340 = vpop.f32.mrb[0].mxu0
  %v1341 = vadd.f32 0.0, %v1340
  %v1342 = vpop.f32.mrb[0].mxu0
  %1343 = vmatprep.mubr.f32.mxu0 0.0
  %1344 = vmatmul.mubr.f32.gmra.mrb[0].mxu0 %v1117
  %v1345 = vpop.f32.mrb[0].mxu0
  %v1346 = vadd.f32 0.0, %v1345
  %v1347 = vpop.f32.mrb[0].mxu0
  %1348 = vmatprep.mubr.f32.mxu0 0.0
  %1349 = vmatmul.mubr.f32.gmra.mrb[0].mxu0 %v1120
  %v1350 = vpop.f32.mrb[0].mxu0
  %v1351 = vadd.f32 0.0, %v1350
  %v1352 = vpop.f32.mrb[0].mxu0
  %1353 = vmatprep.mubr.f32.mxu0 0.0
  %1354 = vmatmul.mubr.f32.gmra.mrb[0].mxu0 %v1123
  %v1355 = vpop.f32.mrb[0].mxu0
  %v1356 = vadd.f32 0.0, %v1355
  %v1357 = vpop.f32.mrb[0].mxu0
  %1358 = vmatprep.mubr.f32.mxu0 0.0
  %1359 = vmatmul.mubr.f32.gmra.mrb[0].mxu0 %v1126
  %v1360 = vpop.f32.mrb[0].mxu0
  %v1361 = vadd.f32 0.0, %v1360
  %v1362 = vpop.f32.mrb[0].mxu0
  %1363 = vmatprep.mubr.f32.mxu0 0.0
  %1364 = vmatmul.mubr.f32.gmra.mrb[0].mxu0 %v1129
  %v1365 = vpop.f32.mrb[0].mxu0
  %v1366 = vadd.f32 0.0, %v1365
  %v1367 = vpop.f32.mrb[0].mxu0
  %1368 = vmatprep.mubr.f32.mxu0 0.0
  %1369 = vmatmul.mubr.f32.gmra.mrb[0].mxu0 %v1132
  %v1370 = vpop.f32.mrb[0].mxu0
  %v1371 = vadd.f32 0.0, %v1370
  %v1372 = vpop.f32.mrb[0].mxu0
  %1373 = vmatprep.mubr.f32.mxu0 0.0
  %1374 = vmatmul.mubr.f32.gmra.mrb[0].mxu0 %v1135
  %v1375 = vpop.f32.mrb[0].mxu0
  %v1376 = vadd.f32 0.0, %v1375
  %v1377 = vpop.f32.mrb[0].mxu0
  %1378 = vmatprep.mubr.f32.mxu0 0.0
  %1379 = vmatmul.mubr.f32.gmra.mrb[0].mxu0 %v1138
  %v1380 = vpop.f32.mrb[0].mxu0
  %v1381 = vadd.f32 0.0, %v1380
  %v1382 = vpop.f32.mrb[0].mxu0
  %1383 = vmatprep.mubr.f32.mxu0 0.0
  %1384 = vmatmul.mubr.f32.gmra.mrb[0].mxu0 %v1141
  %v1385 = vpop.f32.mrb[0].mxu0
  %v1386 = vadd.f32 0.0, %v1385
  %v1387 = vpop.f32.mrb[0].mxu0
  %1388 = vmatprep.mubr.f32.mxu0 0.0
  %1389 = vmatmul.mubr.f32.gmra.mrb[0].mxu0 %v1144
  %v1390 = vpop.f32.mrb[0].mxu0
  %v1391 = vadd.f32 0.0, %v1390
  %v1392 = vpop.f32.mrb[0].mxu0
  %1393 = vmatprep.mubr.f32.mxu0 0.0
  %1394 = vmatmul.mubr.f32.gmra.mrb[0].mxu0 %v1147
  %v1395 = vpop.f32.mrb[0].mxu0
  %v1396 = vadd.f32 0.0, %v1395
  %v1397 = vpop.f32.mrb[0].mxu0
  %1398 = vmatprep.mubr.f32.mxu0 0.0
  %1399 = vmatmul.mubr.f32.gmra.mrb[0].mxu0 %v1150
  %v1400 = vpop.f32.mrb[0].mxu0
  %v1401 = vadd.f32 0.0, %v1400
  %v1402 = vpop.f32.mrb[0].mxu0
  %1403 = vmatprep.mubr.f32.mxu0 0.0
  %1404 = vmatmul.mubr.f32.gmra.mrb[0].mxu0 %v1153
  %v1405 = vpop.f32.mrb[0].mxu0
  %v1406 = vadd.f32 0.0, %v1405
  %v1407 = vpop.f32.mrb[0].mxu0
  %1408 = vmatprep.mubr.f32.mxu0 0.0
  %1409 = vmatmul.mubr.f32.gmra.mrb[0].mxu0 %v1156
  %v1410 = vpop.f32.mrb[0].mxu0
  %v1411 = vadd.f32 0.0, %v1410
  %v1412 = vpop.f32.mrb[0].mxu0
  %1413 = vmatprep.mubr.f32.mxu0 0.0
  %1414 = vmatmul.mubr.f32.gmra.mrb[0].mxu0 %v1159
  %v1415 = vpop.f32.mrb[0].mxu0
  %v1416 = vadd.f32 0.0, %v1415
  %v1417 = vpop.f32.mrb[0].mxu0
  %1418 = vmatprep.mubr.f32.mxu0 0.0
  %1419 = vmatmul.mubr.f32.gmra.mrb[0].mxu0 %v1162
  %v1420 = vpop.f32.mrb[0].mxu0
  %v1421 = vadd.f32 0.0, %v1420
  %v1422 = vpop.f32.mrb[0].mxu0
  %1423 = vmatprep.mubr.f32.mxu0 0.0
  %1424 = vmatmul.mubr.f32.gmra.mrb[0].mxu0 %v1165
  %v1425 = vpop.f32.mrb[0].mxu0
  %v1426 = vadd.f32 0.0, %v1425
  %v1427 = vpop.f32.mrb[0].mxu0
  %1428 = vmatprep.mubr.f32.mxu0 0.0
  %1429 = vmatmul.mubr.f32.gmra.mrb[0].mxu0 %v1168
  %v1430 = vpop.f32.mrb[0].mxu0
  %v1431 = vadd.f32 0.0, %v1430
  %v1432 = vpop.f32.mrb[0].mxu0
  %1433 = vmatprep.mubr.f32.mxu0 0.0
  %1434 = vmatmul.mubr.f32.gmra.mrb[0].mxu0 %v1171
  %v1435 = vpop.f32.mrb[0].mxu0
  %v1436 = vadd.f32 0.0, %v1435
  %v1437 = vpop.f32.mrb[0].mxu0
  %1438 = vmatprep.mubr.f32.mxu0 0.0
  %1439 = vmatmul.mubr.f32.gmra.mrb[0].mxu0 %v1174
  %v1440 = vpop.f32.mrb[0].mxu0
  %v1441 = vadd.f32 0.0, %v1440
  %v1442 = vpop.f32.mrb[0].mxu0
  %1443 = vmatprep.mubr.f32.mxu0 0.0
  %1444 = vmatmul.mubr.f32.gmra.mrb[0].mxu0 %v1177
  %v1445 = vpop.f32.mrb[0].mxu0
  %v1446 = vadd.f32 0.0, %v1445
  %v1447 = vpop.f32.mrb[0].mxu0
  %1448 = vmatprep.mubr.f32.mxu0 0.0
  %1449 = vmatmul.mubr.f32.gmra.mrb[0].mxu0 %v1180
  %v1450 = vpop.f32.mrb[0].mxu0
  %v1451 = vadd.f32 0.0, %v1450
  %v1452 = vpop.f32.mrb[0].mxu0
  %1453 = vmatprep.mubr.f32.mxu0 0.0
  %1454 = vmatmul.mubr.f32.gmra.mrb[0].mxu0 %v1183
  %v1455 = vpop.f32.mrb[0].mxu0
  %v1456 = vadd.f32 0.0, %v1455
  %v1457 = vpop.f32.mrb[0].mxu0
  %1458 = vmatprep.mubr.f32.mxu0 0.0
  %1459 = vmatmul.mubr.f32.gmra.mrb[0].mxu0 %v1186
  %v1460 = vpop.f32.mrb[0].mxu0
  %v1461 = vadd.f32 0.0, %v1460
  %v1462 = vpop.f32.mrb[0].mxu0
  %1463 = vmatprep.mubr.f32.mxu0 0.0
  %1464 = vmatmul.mubr.f32.gmra.mrb[0].mxu0 %v1189
  %v1465 = vpop.f32.mrb[0].mxu0
  %v1466 = vadd.f32 0.0, %v1465
  %v1467 = vpop.f32.mrb[0].mxu0
  %1468 = vmatprep.mubr.f32.mxu0 0.0
  %1469 = vmatmul.mubr.f32.gmra.mrb[0].mxu0 %v1192
  %v1470 = vpop.f32.mrb[0].mxu0
  %v1471 = vadd.f32 0.0, %v1470
  %v1472 = vpop.f32.mrb[0].mxu0
  %1473 = vmatprep.mubr.f32.mxu0 0.0
  %1474 = vmatmul.mubr.f32.gmra.mrb[0].mxu0 %v1195
  %v1475 = vpop.f32.mrb[0].mxu0
  %v1476 = vadd.f32 0.0, %v1475
  %v1477 = vpop.f32.mrb[0].mxu0
  %1478 = vmatprep.mubr.f32.mxu0 0.0
  %1479 = vmatmul.mubr.f32.gmra.mrb[0].mxu0 %v1198
  %v1480 = vpop.f32.mrb[0].mxu0
  %v1481 = vadd.f32 0.0, %v1480
  %v1482 = vpop.f32.mrb[0].mxu0
  %1483 = vmatprep.mubr.f32.mxu0 0.0
  %1484 = vmatmul.mubr.f32.gmra.mrb[0].mxu0 %v1201
  %v1485 = vpop.f32.mrb[0].mxu0
  %v1486 = vadd.f32 0.0, %v1485
  %v1487 = vpop.f32.mrb[0].mxu0
  %1488 = vmatprep.mubr.f32.mxu0 0.0
  %1489 = vmatmul.mubr.f32.gmra.mrb[0].mxu0 %v1204
  %v1490 = vpop.f32.mrb[0].mxu0
  %v1491 = vadd.f32 0.0, %v1490
  %v1492 = vpop.f32.mrb[0].mxu0
  %1493 = vmatprep.mubr.f32.mxu0 0.0
  %1494 = vmatmul.mubr.f32.gmra.mrb[0].mxu0 %v1207
  %v1495 = vpop.f32.mrb[0].mxu0
  %v1496 = vadd.f32 0.0, %v1495
  %v1497 = vpop.f32.mrb[0].mxu0
  %1498 = vmatprep.mubr.f32.mxu0 0.0
  %1499 = vmatmul.mubr.f32.gmra.mrb[0].mxu0 %v1210
  %v1500 = vpop.f32.mrb[0].mxu0
  %v1501 = vadd.f32 0.0, %v1500
  %v1502 = vpop.f32.mrb[0].mxu0
  %1503 = vmatprep.mubr.f32.mxu0 0.0
  %1504 = vmatmul.mubr.f32.gmra.mrb[0].mxu0 %v1213
  %v1505 = vpop.f32.mrb[0].mxu0
  %v1506 = vadd.f32 0.0, %v1505
  %v1507 = vpop.f32.mrb[0].mxu0
  %1508 = vmatprep.mubr.f32.mxu0 0.0
  %1509 = vmatmul.mubr.f32.gmra.mrb[0].mxu0 %v1216
  %v1510 = vpop.f32.mrb[0].mxu0
  %v1511 = vadd.f32 0.0, %v1510
  %v1512 = vpop.f32.mrb[0].mxu0
  %1513 = vmatprep.mubr.f32.mxu0 0.0
  %1514 = vmatmul.mubr.f32.gmra.mrb[0].mxu0 %v1219
  %v1515 = vpop.f32.mrb[0].mxu0
  %v1516 = vadd.f32 0.0, %v1515
  %v1517 = vpop.f32.mrb[0].mxu0
  %1518 = vmatprep.mubr.f32.mxu0 0.0
  %1519 = vmatmul.mubr.f32.gmra.mrb[0].mxu0 %v1222
  %v1520 = vpop.f32.mrb[0].mxu0
  %v1521 = vadd.f32 0.0, %v1520
  %v1522 = vpop.f32.mrb[0].mxu0
  %1523 = vmatprep.mubr.f32.mxu0 0.0
  %1524 = vmatmul.mubr.f32.gmra.mrb[0].mxu0 %v1225
  %v1525 = vpop.f32.mrb[0].mxu0
  %v1526 = vadd.f32 0.0, %v1525
  %v1527 = vpop.f32.mrb[0].mxu0
  %1528 = vmatprep.mubr.f32.mxu0 0.0
  %1529 = vmatmul.mubr.f32.gmra.mrb[0].mxu0 %v1228
  %v1530 = vpop.f32.mrb[0].mxu0
  %v1531 = vadd.f32 0.0, %v1530
  %v1532 = vpop.f32.mrb[0].mxu0
  %1533 = vmatprep.mubr.f32.mxu0 0.0
  %1534 = vmatmul.mubr.f32.gmra.mrb[0].mxu0 %v1231
  %v1535 = vpop.f32.mrb[0].mxu0
  %v1536 = vadd.f32 0.0, %v1535
  %v1537 = vpop.f32.mrb[0].mxu0
  %1538 = vmatprep.mubr.f32.mxu0 0.0
  %1539 = vmatmul.mubr.f32.gmra.mrb[0].mxu0 %v1234
  %v1540 = vpop.f32.mrb[0].mxu0
  %v1541 = vadd.f32 0.0, %v1540
  %v1542 = vpop.f32.mrb[0].mxu0
  %1543 = vmatprep.mubr.f32.mxu0 0.0
  %1544 = vmatmul.mubr.f32.gmra.mrb[0].mxu0 %v1237
  %v1545 = vpop.f32.mrb[0].mxu0
  %v1546 = vadd.f32 0.0, %v1545
  %v1547 = vpop.f32.mrb[0].mxu0
  %1548 = vdwg.mxu0
  %s1549 = scalar_lea.vmem %s0, 1176
  %v1550 = vld [vmem:[%s1549] sm:$0xff]
  %v1551 = vld [vmem:[%s1549 + $0x8] sm:$0xff]
  %v1552 = vld [vmem:[%s1549 + $0x10] sm:$0xff]
  %v1553 = vld [vmem:[%s1549 + $0x18] sm:$0xff]
  %v1554 = vld [vmem:[%s1549 + $0x20] sm:$0xff]
  %v1555 = vld [vmem:[%s1549 + $0x28] sm:$0xff]
  %v1556 = vld [vmem:[%s1549 + $0x30] sm:$0xff]
  %v1557 = vld [vmem:[%s1549 + $0x38] sm:$0xff]
  %v1558 = vld [vmem:[%s1549 + $0x40] sm:$0xff]
  %v1559 = vld [vmem:[%s1549 + $0x48] sm:$0xff]
  %v1560 = vld [vmem:[%s1549 + $0x50] sm:$0xff]
  %v1561 = vld [vmem:[%s1549 + $0x58] sm:$0xff]
  %v1562 = vld [vmem:[%s1549 + $0x60] sm:$0xff]
  %v1563 = vld [vmem:[%s1549 + $0x68] sm:$0xff]
  %v1564 = vld [vmem:[%s1549 + $0x70] sm:$0xff]
  %v1565 = vld [vmem:[%s1549 + $0x78] sm:$0xff]
  %v1566 = vld [vmem:[%s1549 + $0x80] sm:$0xff]
  %v1567 = vld [vmem:[%s1549 + $0x88] sm:$0xff]
  %v1568 = vld [vmem:[%s1549 + $0x90] sm:$0xff]
  %v1569 = vld [vmem:[%s1549 + $0x98] sm:$0xff]
  %v1570 = vld [vmem:[%s1549 + $0xa0] sm:$0xff]
  %v1571 = vld [vmem:[%s1549 + $0xa8] sm:$0xff]
  %v1572 = vld [vmem:[%s1549 + $0xb0] sm:$0xff]
  %v1573 = vld [vmem:[%s1549 + $0xb8] sm:$0xff]
  %v1574 = vld [vmem:[%s1549 + $0xc0] sm:$0xff]
  %v1575 = vld [vmem:[%s1549 + $0xc8] sm:$0xff]
  %v1576 = vld [vmem:[%s1549 + $0xd0] sm:$0xff]
  %v1577 = vld [vmem:[%s1549 + $0xd8] sm:$0xff]
  %v1578 = vld [vmem:[%s1549 + $0xe0] sm:$0xff]
  %v1579 = vld [vmem:[%s1549 + $0xe8] sm:$0xff]
  %v1580 = vld [vmem:[%s1549 + $0xf0] sm:$0xff]
  %v1581 = vld [vmem:[%s1549 + $0xf8] sm:$0xff]
  %v1582 = vld [vmem:[%s1549 + $0x100] sm:$0xff]
  %v1583 = vld [vmem:[%s1549 + $0x108] sm:$0xff]
  %v1584 = vld [vmem:[%s1549 + $0x110] sm:$0xff]
  %v1585 = vld [vmem:[%s1549 + $0x118] sm:$0xff]
  %v1586 = vld [vmem:[%s1549 + $0x120] sm:$0xff]
  %v1587 = vld [vmem:[%s1549 + $0x128] sm:$0xff]
  %v1588 = vld [vmem:[%s1549 + $0x130] sm:$0xff]
  %v1589 = vld [vmem:[%s1549 + $0x138] sm:$0xff]
  %v1590 = vld [vmem:[%s1549 + $0x140] sm:$0xff]
  %v1591 = vld [vmem:[%s1549 + $0x148] sm:$0xff]
  %v1592 = vld [vmem:[%s1549 + $0x150] sm:$0xff]
  %v1593 = vld [vmem:[%s1549 + $0x158] sm:$0xff]
  %v1594 = vld [vmem:[%s1549 + $0x160] sm:$0xff]
  %v1595 = vld [vmem:[%s1549 + $0x168] sm:$0xff]
  %v1596 = vld [vmem:[%s1549 + $0x170] sm:$0xff]
  %v1597 = vld [vmem:[%s1549 + $0x178] sm:$0xff]
  %v1598 = vld [vmem:[%s1549 + $0x180] sm:$0xff]
  %v1600 = vsel %vm73, %v1550, 0
  %v1603 = vsel %vm73, %v1551, 0
  %v1606 = vsel %vm73, %v1552, 0
  %v1609 = vsel %vm73, %v1553, 0
  %v1612 = vsel %vm73, %v1554, 0
  %v1615 = vsel %vm73, %v1555, 0
  %v1618 = vsel %vm73, %v1556, 0
  %v1621 = vsel %vm73, %v1557, 0
  %v1624 = vsel %vm73, %v1558, 0
  %v1627 = vsel %vm73, %v1559, 0
  %v1630 = vsel %vm73, %v1560, 0
  %v1633 = vsel %vm73, %v1561, 0
  %v1636 = vsel %vm73, %v1562, 0
  %v1639 = vsel %vm73, %v1563, 0
  %v1642 = vsel %vm73, %v1564, 0
  %v1645 = vsel %vm73, %v1565, 0
  %v1648 = vsel %vm73, %v1566, 0
  %v1651 = vsel %vm73, %v1567, 0
  %v1654 = vsel %vm73, %v1568, 0
  %v1657 = vsel %vm73, %v1569, 0
  %v1660 = vsel %vm73, %v1570, 0
  %v1663 = vsel %vm73, %v1571, 0
  %v1666 = vsel %vm73, %v1572, 0
  %v1669 = vsel %vm73, %v1573, 0
  %v1672 = vsel %vm73, %v1574, 0
  %v1675 = vsel %vm73, %v1575, 0
  %v1678 = vsel %vm73, %v1576, 0
  %v1681 = vsel %vm73, %v1577, 0
  %v1684 = vsel %vm73, %v1578, 0
  %v1687 = vsel %vm73, %v1579, 0
  %v1690 = vsel %vm73, %v1580, 0
  %v1693 = vsel %vm73, %v1581, 0
  %v1696 = vsel %vm73, %v1582, 0
  %v1699 = vsel %vm73, %v1583, 0
  %v1702 = vsel %vm73, %v1584, 0
  %v1705 = vsel %vm73, %v1585, 0
  %v1708 = vsel %vm73, %v1586, 0
  %v1711 = vsel %vm73, %v1587, 0
  %v1714 = vsel %vm73, %v1588, 0
  %v1717 = vsel %vm73, %v1589, 0
  %v1720 = vsel %vm73, %v1590, 0
  %v1723 = vsel %vm73, %v1591, 0
  %v1726 = vsel %vm73, %v1592, 0
  %v1729 = vsel %vm73, %v1593, 0
  %v1732 = vsel %vm73, %v1594, 0
  %v1735 = vsel %vm73, %v1595, 0
  %v1738 = vsel %vm73, %v1596, 0
  %v1741 = vsel %vm73, %v1597, 0
  %v1744 = vsel %vm73, %v1598, 0
  %1746 = vmatprep.subr.mxu0 0.0
  %1747 = vmatpush1.msra.mxu0 %v14
  %1748 = vmatprep.subr.mxu0 0.0
  %1749 = vmatpush1.msra.mxu0 %v15
  %1750 = vmatprep.subr.mxu0 0.0
  %1751 = vmatpush1.msra.mxu0 %v16
  %1752 = vmatprep.subr.mxu0 0.0
  %1753 = vmatpush1.msra.mxu0 %v17
  %1754 = vmatprep.subr.mxu0 0.0
  %1755 = vmatpush1.msra.mxu0 %v18
  %1756 = vmatprep.subr.mxu0 0.0
  %1757 = vmatpush1.msra.mxu0 %v19
  %1758 = vmatprep.subr.mxu0 0.0
  %1759 = vmatpush1.msra.mxu0 %v20
  %1760 = vmatprep.subr.mxu0 0.0
  %1761 = vmatpush1.msra.mxu0 %v21
  %1762 = vmatprep.subr.mxu0 0.0
  %1763 = vmatpush1.msra.mxu0 %v22
  %1764 = vmatprep.subr.mxu0 0.0
  %1765 = vmatpush1.msra.mxu0 %v223
  %1766 = vmatprep.subr.mxu0 0.0
  %1767 = vmatpush1.msra.mxu0 0.0
  %1768 = vmatprep.subr.mxu0 0.0
  %1769 = vmatpush1.msra.mxu0 0.0
  %1770 = vmatprep.subr.mxu0 0.0
  %1771 = vmatpush1.msra.mxu0 0.0
  %1772 = vmatprep.subr.mxu0 0.0
  %1773 = vmatpush1.msra.mxu0 0.0
  %1774 = vmatprep.subr.mxu0 0.0
  %1775 = vmatpush1.msra.mxu0 0.0
  %1776 = vmatprep.subr.mxu0 0.0
  %1777 = vmatpush1.msra.mxu0 0.0
  %1778 = vmatprep.subr.mxu0 0.0
  %1779 = vmatpush1.msra.mxu0 0.0
  %1780 = vmatprep.subr.mxu0 0.0
  %1781 = vmatpush1.msra.mxu0 0.0
  %1782 = vmatprep.subr.mxu0 0.0
  %1783 = vmatpush1.msra.mxu0 0.0
  %1784 = vmatprep.subr.mxu0 0.0
  %1785 = vmatpush1.msra.mxu0 0.0
  %1786 = vmatprep.subr.mxu0 0.0
  %1787 = vmatpush1.msra.mxu0 0.0
  %1788 = vmatprep.subr.mxu0 0.0
  %1789 = vmatpush1.msra.mxu0 0.0
  %1790 = vmatprep.subr.mxu0 0.0
  %1791 = vmatpush1.msra.mxu0 0.0
  %1792 = vmatprep.subr.mxu0 0.0
  %1793 = vmatpush1.msra.mxu0 0.0
  %1794 = vmatprep.subr.mxu0 0.0
  %1795 = vmatpush1.msra.mxu0 0.0
  %1796 = vmatprep.subr.mxu0 0.0
  %1797 = vmatpush1.msra.mxu0 0.0
  %1798 = vmatprep.subr.mxu0 0.0
  %1799 = vmatpush1.msra.mxu0 0.0
  %1800 = vmatprep.subr.mxu0 0.0
  %1801 = vmatpush1.msra.mxu0 0.0
  %1802 = vmatprep.subr.mxu0 0.0
  %1803 = vmatpush1.msra.mxu0 0.0
  %1804 = vmatprep.subr.mxu0 0.0
  %1805 = vmatpush1.msra.mxu0 0.0
  %1806 = vmatprep.subr.mxu0 0.0
  %1807 = vmatpush1.msra.mxu0 0.0
  %1808 = vmatprep.subr.mxu0 0.0
  %1809 = vmatpush1.msra.mxu0 0.0
  %1810 = vmatprep.mubr.f32.mxu0 0.0
  %1811 = vmatmul.mubr.f32.gmra.mrb[0].mxu0 %v1600
  %v1812 = vpop.f32.mrb[0].mxu0
  %v1813 = vadd.f32 0.0, %v1812
  %v1814 = vpop.f32.mrb[0].mxu0
  %1815 = vmatprep.mubr.f32.mxu0 0.0
  %1816 = vmatmul.mubr.f32.gmra.mrb[0].mxu0 %v1603
  %v1817 = vpop.f32.mrb[0].mxu0
  %v1818 = vadd.f32 0.0, %v1817
  %v1819 = vpop.f32.mrb[0].mxu0
  %1820 = vmatprep.mubr.f32.mxu0 0.0
  %1821 = vmatmul.mubr.f32.gmra.mrb[0].mxu0 %v1606
  %v1822 = vpop.f32.mrb[0].mxu0
  %v1823 = vadd.f32 0.0, %v1822
  %v1824 = vpop.f32.mrb[0].mxu0
  %1825 = vmatprep.mubr.f32.mxu0 0.0
  %1826 = vmatmul.mubr.f32.gmra.mrb[0].mxu0 %v1609
  %v1827 = vpop.f32.mrb[0].mxu0
  %v1828 = vadd.f32 0.0, %v1827
  %v1829 = vpop.f32.mrb[0].mxu0
  %1830 = vmatprep.mubr.f32.mxu0 0.0
  %1831 = vmatmul.mubr.f32.gmra.mrb[0].mxu0 %v1612
  %v1832 = vpop.f32.mrb[0].mxu0
  %v1833 = vadd.f32 0.0, %v1832
  %v1834 = vpop.f32.mrb[0].mxu0
  %1835 = vmatprep.mubr.f32.mxu0 0.0
  %1836 = vmatmul.mubr.f32.gmra.mrb[0].mxu0 %v1615
  %v1837 = vpop.f32.mrb[0].mxu0
  %v1838 = vadd.f32 0.0, %v1837
  %v1839 = vpop.f32.mrb[0].mxu0
  %1840 = vmatprep.mubr.f32.mxu0 0.0
  %1841 = vmatmul.mubr.f32.gmra.mrb[0].mxu0 %v1618
  %v1842 = vpop.f32.mrb[0].mxu0
  %v1843 = vadd.f32 0.0, %v1842
  %v1844 = vpop.f32.mrb[0].mxu0
  %1845 = vmatprep.mubr.f32.mxu0 0.0
  %1846 = vmatmul.mubr.f32.gmra.mrb[0].mxu0 %v1621
  %v1847 = vpop.f32.mrb[0].mxu0
  %v1848 = vadd.f32 0.0, %v1847
  %v1849 = vpop.f32.mrb[0].mxu0
  %1850 = vmatprep.mubr.f32.mxu0 0.0
  %1851 = vmatmul.mubr.f32.gmra.mrb[0].mxu0 %v1624
  %v1852 = vpop.f32.mrb[0].mxu0
  %v1853 = vadd.f32 0.0, %v1852
  %v1854 = vpop.f32.mrb[0].mxu0
  %1855 = vmatprep.mubr.f32.mxu0 0.0
  %1856 = vmatmul.mubr.f32.gmra.mrb[0].mxu0 %v1627
  %v1857 = vpop.f32.mrb[0].mxu0
  %v1858 = vadd.f32 0.0, %v1857
  %v1859 = vpop.f32.mrb[0].mxu0
  %1860 = vmatprep.mubr.f32.mxu0 0.0
  %1861 = vmatmul.mubr.f32.gmra.mrb[0].mxu0 %v1630
  %v1862 = vpop.f32.mrb[0].mxu0
  %v1863 = vadd.f32 0.0, %v1862
  %v1864 = vpop.f32.mrb[0].mxu0
  %1865 = vmatprep.mubr.f32.mxu0 0.0
  %1866 = vmatmul.mubr.f32.gmra.mrb[0].mxu0 %v1633
  %v1867 = vpop.f32.mrb[0].mxu0
  %v1868 = vadd.f32 0.0, %v1867
  %v1869 = vpop.f32.mrb[0].mxu0
  %1870 = vmatprep.mubr.f32.mxu0 0.0
  %1871 = vmatmul.mubr.f32.gmra.mrb[0].mxu0 %v1636
  %v1872 = vpop.f32.mrb[0].mxu0
  %v1873 = vadd.f32 0.0, %v1872
  %v1874 = vpop.f32.mrb[0].mxu0
  %1875 = vmatprep.mubr.f32.mxu0 0.0
  %1876 = vmatmul.mubr.f32.gmra.mrb[0].mxu0 %v1639
  %v1877 = vpop.f32.mrb[0].mxu0
  %v1878 = vadd.f32 0.0, %v1877
  %v1879 = vpop.f32.mrb[0].mxu0
  %1880 = vmatprep.mubr.f32.mxu0 0.0
  %1881 = vmatmul.mubr.f32.gmra.mrb[0].mxu0 %v1642
  %v1882 = vpop.f32.mrb[0].mxu0
  %v1883 = vadd.f32 0.0, %v1882
  %v1884 = vpop.f32.mrb[0].mxu0
  %1885 = vmatprep.mubr.f32.mxu0 0.0
  %1886 = vmatmul.mubr.f32.gmra.mrb[0].mxu0 %v1645
  %v1887 = vpop.f32.mrb[0].mxu0
  %v1888 = vadd.f32 0.0, %v1887
  %v1889 = vpop.f32.mrb[0].mxu0
  %1890 = vmatprep.mubr.f32.mxu0 0.0
  %1891 = vmatmul.mubr.f32.gmra.mrb[0].mxu0 %v1648
  %v1892 = vpop.f32.mrb[0].mxu0
  %v1893 = vadd.f32 0.0, %v1892
  %v1894 = vpop.f32.mrb[0].mxu0
  %1895 = vmatprep.mubr.f32.mxu0 0.0
  %1896 = vmatmul.mubr.f32.gmra.mrb[0].mxu0 %v1651
  %v1897 = vpop.f32.mrb[0].mxu0
  %v1898 = vadd.f32 0.0, %v1897
  %v1899 = vpop.f32.mrb[0].mxu0
  %1900 = vmatprep.mubr.f32.mxu0 0.0
  %1901 = vmatmul.mubr.f32.gmra.mrb[0].mxu0 %v1654
  %v1902 = vpop.f32.mrb[0].mxu0
  %v1903 = vadd.f32 0.0, %v1902
  %v1904 = vpop.f32.mrb[0].mxu0
  %1905 = vmatprep.mubr.f32.mxu0 0.0
  %1906 = vmatmul.mubr.f32.gmra.mrb[0].mxu0 %v1657
  %v1907 = vpop.f32.mrb[0].mxu0
  %v1908 = vadd.f32 0.0, %v1907
  %v1909 = vpop.f32.mrb[0].mxu0
  %1910 = vmatprep.mubr.f32.mxu0 0.0
  %1911 = vmatmul.mubr.f32.gmra.mrb[0].mxu0 %v1660
  %v1912 = vpop.f32.mrb[0].mxu0
  %v1913 = vadd.f32 0.0, %v1912
  %v1914 = vpop.f32.mrb[0].mxu0
  %1915 = vmatprep.mubr.f32.mxu0 0.0
  %1916 = vmatmul.mubr.f32.gmra.mrb[0].mxu0 %v1663
  %v1917 = vpop.f32.mrb[0].mxu0
  %v1918 = vadd.f32 0.0, %v1917
  %v1919 = vpop.f32.mrb[0].mxu0
  %1920 = vmatprep.mubr.f32.mxu0 0.0
  %1921 = vmatmul.mubr.f32.gmra.mrb[0].mxu0 %v1666
  %v1922 = vpop.f32.mrb[0].mxu0
  %v1923 = vadd.f32 0.0, %v1922
  %v1924 = vpop.f32.mrb[0].mxu0
  %1925 = vmatprep.mubr.f32.mxu0 0.0
  %1926 = vmatmul.mubr.f32.gmra.mrb[0].mxu0 %v1669
  %v1927 = vpop.f32.mrb[0].mxu0
  %v1928 = vadd.f32 0.0, %v1927
  %v1929 = vpop.f32.mrb[0].mxu0
  %1930 = vmatprep.mubr.f32.mxu0 0.0
  %1931 = vmatmul.mubr.f32.gmra.mrb[0].mxu0 %v1672
  %v1932 = vpop.f32.mrb[0].mxu0
  %v1933 = vadd.f32 0.0, %v1932
  %v1934 = vpop.f32.mrb[0].mxu0
  %1935 = vmatprep.mubr.f32.mxu0 0.0
  %1936 = vmatmul.mubr.f32.gmra.mrb[0].mxu0 %v1675
  %v1937 = vpop.f32.mrb[0].mxu0
  %v1938 = vadd.f32 0.0, %v1937
  %v1939 = vpop.f32.mrb[0].mxu0
  %1940 = vmatprep.mubr.f32.mxu0 0.0
  %1941 = vmatmul.mubr.f32.gmra.mrb[0].mxu0 %v1678
  %v1942 = vpop.f32.mrb[0].mxu0
  %v1943 = vadd.f32 0.0, %v1942
  %v1944 = vpop.f32.mrb[0].mxu0
  %1945 = vmatprep.mubr.f32.mxu0 0.0
  %1946 = vmatmul.mubr.f32.gmra.mrb[0].mxu0 %v1681
  %v1947 = vpop.f32.mrb[0].mxu0
  %v1948 = vadd.f32 0.0, %v1947
  %v1949 = vpop.f32.mrb[0].mxu0
  %1950 = vmatprep.mubr.f32.mxu0 0.0
  %1951 = vmatmul.mubr.f32.gmra.mrb[0].mxu0 %v1684
  %v1952 = vpop.f32.mrb[0].mxu0
  %v1953 = vadd.f32 0.0, %v1952
  %v1954 = vpop.f32.mrb[0].mxu0
  %1955 = vmatprep.mubr.f32.mxu0 0.0
  %1956 = vmatmul.mubr.f32.gmra.mrb[0].mxu0 %v1687
  %v1957 = vpop.f32.mrb[0].mxu0
  %v1958 = vadd.f32 0.0, %v1957
  %v1959 = vpop.f32.mrb[0].mxu0
  %1960 = vmatprep.mubr.f32.mxu0 0.0
  %1961 = vmatmul.mubr.f32.gmra.mrb[0].mxu0 %v1690
  %v1962 = vpop.f32.mrb[0].mxu0
  %v1963 = vadd.f32 0.0, %v1962
  %v1964 = vpop.f32.mrb[0].mxu0
  %1965 = vmatprep.mubr.f32.mxu0 0.0
  %1966 = vmatmul.mubr.f32.gmra.mrb[0].mxu0 %v1693
  %v1967 = vpop.f32.mrb[0].mxu0
  %v1968 = vadd.f32 0.0, %v1967
  %v1969 = vpop.f32.mrb[0].mxu0
  %1970 = vmatprep.mubr.f32.mxu0 0.0
  %1971 = vmatmul.mubr.f32.gmra.mrb[0].mxu0 %v1696
  %v1972 = vpop.f32.mrb[0].mxu0
  %v1973 = vadd.f32 0.0, %v1972
  %v1974 = vpop.f32.mrb[0].mxu0
  %1975 = vmatprep.mubr.f32.mxu0 0.0
  %1976 = vmatmul.mubr.f32.gmra.mrb[0].mxu0 %v1699
  %v1977 = vpop.f32.mrb[0].mxu0
  %v1978 = vadd.f32 0.0, %v1977
  %v1979 = vpop.f32.mrb[0].mxu0
  %1980 = vmatprep.mubr.f32.mxu0 0.0
  %1981 = vmatmul.mubr.f32.gmra.mrb[0].mxu0 %v1702
  %v1982 = vpop.f32.mrb[0].mxu0
  %v1983 = vadd.f32 0.0, %v1982
  %v1984 = vpop.f32.mrb[0].mxu0
  %1985 = vmatprep.mubr.f32.mxu0 0.0
  %1986 = vmatmul.mubr.f32.gmra.mrb[0].mxu0 %v1705
  %v1987 = vpop.f32.mrb[0].mxu0
  %v1988 = vadd.f32 0.0, %v1987
  %v1989 = vpop.f32.mrb[0].mxu0
  %1990 = vmatprep.mubr.f32.mxu0 0.0
  %1991 = vmatmul.mubr.f32.gmra.mrb[0].mxu0 %v1708
  %v1992 = vpop.f32.mrb[0].mxu0
  %v1993 = vadd.f32 0.0, %v1992
  %v1994 = vpop.f32.mrb[0].mxu0
  %1995 = vmatprep.mubr.f32.mxu0 0.0
  %1996 = vmatmul.mubr.f32.gmra.mrb[0].mxu0 %v1711
  %v1997 = vpop.f32.mrb[0].mxu0
  %v1998 = vadd.f32 0.0, %v1997
  %v1999 = vpop.f32.mrb[0].mxu0
  %2000 = vmatprep.mubr.f32.mxu0 0.0
  %2001 = vmatmul.mubr.f32.gmra.mrb[0].mxu0 %v1714
  %v2002 = vpop.f32.mrb[0].mxu0
  %v2003 = vadd.f32 0.0, %v2002
  %v2004 = vpop.f32.mrb[0].mxu0
  %2005 = vmatprep.mubr.f32.mxu0 0.0
  %2006 = vmatmul.mubr.f32.gmra.mrb[0].mxu0 %v1717
  %v2007 = vpop.f32.mrb[0].mxu0
  %v2008 = vadd.f32 0.0, %v2007
  %v2009 = vpop.f32.mrb[0].mxu0
  %2010 = vmatprep.mubr.f32.mxu0 0.0
  %2011 = vmatmul.mubr.f32.gmra.mrb[0].mxu0 %v1720
  %v2012 = vpop.f32.mrb[0].mxu0
  %v2013 = vadd.f32 0.0, %v2012
  %v2014 = vpop.f32.mrb[0].mxu0
  %2015 = vmatprep.mubr.f32.mxu0 0.0
  %2016 = vmatmul.mubr.f32.gmra.mrb[0].mxu0 %v1723
  %v2017 = vpop.f32.mrb[0].mxu0
  %v2018 = vadd.f32 0.0, %v2017
  %v2019 = vpop.f32.mrb[0].mxu0
  %2020 = vmatprep.mubr.f32.mxu0 0.0
  %2021 = vmatmul.mubr.f32.gmra.mrb[0].mxu0 %v1726
  %v2022 = vpop.f32.mrb[0].mxu0
  %v2023 = vadd.f32 0.0, %v2022
  %v2024 = vpop.f32.mrb[0].mxu0
  %2025 = vmatprep.mubr.f32.mxu0 0.0
  %2026 = vmatmul.mubr.f32.gmra.mrb[0].mxu0 %v1729
  %v2027 = vpop.f32.mrb[0].mxu0
  %v2028 = vadd.f32 0.0, %v2027
  %v2029 = vpop.f32.mrb[0].mxu0
  %2030 = vmatprep.mubr.f32.mxu0 0.0
  %2031 = vmatmul.mubr.f32.gmra.mrb[0].mxu0 %v1732
  %v2032 = vpop.f32.mrb[0].mxu0
  %v2033 = vadd.f32 0.0, %v2032
  %v2034 = vpop.f32.mrb[0].mxu0
  %2035 = vmatprep.mubr.f32.mxu0 0.0
  %2036 = vmatmul.mubr.f32.gmra.mrb[0].mxu0 %v1735
  %v2037 = vpop.f32.mrb[0].mxu0
  %v2038 = vadd.f32 0.0, %v2037
  %v2039 = vpop.f32.mrb[0].mxu0
  %2040 = vmatprep.mubr.f32.mxu0 0.0
  %2041 = vmatmul.mubr.f32.gmra.mrb[0].mxu0 %v1738
  %v2042 = vpop.f32.mrb[0].mxu0
  %v2043 = vadd.f32 0.0, %v2042
  %v2044 = vpop.f32.mrb[0].mxu0
  %2045 = vmatprep.mubr.f32.mxu0 0.0
  %2046 = vmatmul.mubr.f32.gmra.mrb[0].mxu0 %v1741
  %v2047 = vpop.f32.mrb[0].mxu0
  %v2048 = vadd.f32 0.0, %v2047
  %v2049 = vpop.f32.mrb[0].mxu0
  %2050 = vmatprep.mubr.f32.mxu0 0.0
  %2051 = vmatmul.mubr.f32.gmra.mrb[0].mxu0 %v1744
  %v2052 = vpop.f32.mrb[0].mxu0
  %v2053 = vadd.f32 0.0, %v2052
  %v2054 = vpop.f32.mrb[0].mxu0
  %2055 = vdwg.mxu0
  %v2056 = vmax.f32 %v292, %v799
  %v2057 = vmax.f32 %v297, %v804
  %v2058 = vmax.f32 %v302, %v809
  %v2059 = vmax.f32 %v307, %v814
  %v2060 = vmax.f32 %v312, %v819
  %v2061 = vmax.f32 %v317, %v824
  %v2062 = vmax.f32 %v322, %v829
  %v2063 = vmax.f32 %v327, %v834
  %v2064 = vmax.f32 %v332, %v839
  %v2065 = vmax.f32 %v337, %v844
  %v2066 = vmax.f32 %v342, %v849
  %v2067 = vmax.f32 %v347, %v854
  %v2068 = vmax.f32 %v352, %v859
  %v2069 = vmax.f32 %v357, %v864
  %v2070 = vmax.f32 %v362, %v869
  %v2071 = vmax.f32 %v367, %v874
  %v2072 = vmax.f32 %v372, %v879
  %v2073 = vmax.f32 %v377, %v884
  %v2074 = vmax.f32 %v382, %v889
  %v2075 = vmax.f32 %v387, %v894
  %v2076 = vmax.f32 %v392, %v899
  %v2077 = vmax.f32 %v397, %v904
  %v2078 = vmax.f32 %v402, %v909
  %v2079 = vmax.f32 %v407, %v914
  %v2080 = vmax.f32 %v412, %v919
  %v2081 = vmax.f32 %v417, %v924
  %v2082 = vmax.f32 %v422, %v929
  %v2083 = vmax.f32 %v427, %v934
  %v2084 = vmax.f32 %v432, %v939
  %v2085 = vmax.f32 %v437, %v944
  %v2086 = vmax.f32 %v442, %v949
  %v2087 = vmax.f32 %v447, %v954
  %v2088 = vmax.f32 %v452, %v959
  %v2089 = vmax.f32 %v457, %v964
  %v2090 = vmax.f32 %v462, %v969
  %v2091 = vmax.f32 %v467, %v974
  %v2092 = vmax.f32 %v472, %v979
  %v2093 = vmax.f32 %v477, %v984
  %v2094 = vmax.f32 %v482, %v989
  %v2095 = vmax.f32 %v487, %v994
  %v2096 = vmax.f32 %v492, %v999
  %v2097 = vmax.f32 %v497, %v1004
  %v2098 = vmax.f32 %v502, %v1009
  %v2099 = vmax.f32 %v507, %v1014
  %v2100 = vmax.f32 %v512, %v1019
  %v2101 = vmax.f32 %v517, %v1024
  %v2102 = vmax.f32 %v522, %v1029
  %v2103 = vmax.f32 %v527, %v1034
  %v2104 = vmax.f32 %v532, %v1039
  %v2105 = vmax.f32 %v1306, %v1813
  %v2106 = vmax.f32 %v1311, %v1818
  %v2107 = vmax.f32 %v1316, %v1823
  %v2108 = vmax.f32 %v1321, %v1828
  %v2109 = vmax.f32 %v1326, %v1833
  %v2110 = vmax.f32 %v1331, %v1838
  %v2111 = vmax.f32 %v1336, %v1843
  %v2112 = vmax.f32 %v1341, %v1848
  %v2113 = vmax.f32 %v1346, %v1853
  %v2114 = vmax.f32 %v1351, %v1858
  %v2115 = vmax.f32 %v1356, %v1863
  %v2116 = vmax.f32 %v1361, %v1868
  %v2117 = vmax.f32 %v1366, %v1873
  %v2118 = vmax.f32 %v1371, %v1878
  %v2119 = vmax.f32 %v1376, %v1883
  %v2120 = vmax.f32 %v1381, %v1888
  %v2121 = vmax.f32 %v1386, %v1893
  %v2122 = vmax.f32 %v1391, %v1898
  %v2123 = vmax.f32 %v1396, %v1903
  %v2124 = vmax.f32 %v1401, %v1908
  %v2125 = vmax.f32 %v1406, %v1913
  %v2126 = vmax.f32 %v1411, %v1918
  %v2127 = vmax.f32 %v1416, %v1923
  %v2128 = vmax.f32 %v1421, %v1928
  %v2129 = vmax.f32 %v1426, %v1933
  %v2130 = vmax.f32 %v1431, %v1938
  %v2131 = vmax.f32 %v1436, %v1943
  %v2132 = vmax.f32 %v1441, %v1948
  %v2133 = vmax.f32 %v1446, %v1953
  %v2134 = vmax.f32 %v1451, %v1958
  %v2135 = vmax.f32 %v1456, %v1963
  %v2136 = vmax.f32 %v1461, %v1968
  %v2137 = vmax.f32 %v1466, %v1973
  %v2138 = vmax.f32 %v1471, %v1978
  %v2139 = vmax.f32 %v1476, %v1983
  %v2140 = vmax.f32 %v1481, %v1988
  %v2141 = vmax.f32 %v1486, %v1993
  %v2142 = vmax.f32 %v1491, %v1998
  %v2143 = vmax.f32 %v1496, %v2003
  %v2144 = vmax.f32 %v1501, %v2008
  %v2145 = vmax.f32 %v1506, %v2013
  %v2146 = vmax.f32 %v1511, %v2018
  %v2147 = vmax.f32 %v1516, %v2023
  %v2148 = vmax.f32 %v1521, %v2028
  %v2149 = vmax.f32 %v1526, %v2033
  %v2150 = vmax.f32 %v1531, %v2038
  %v2151 = vmax.f32 %v1536, %v2043
  %v2152 = vmax.f32 %v1541, %v2048
  %v2153 = vmax.f32 %v1546, %v2053
  %v2154 = vmax.f32 %v2056, %v2105
  %v2155 = vmax.f32 %v2057, %v2106
  %v2156 = vmax.f32 %v2058, %v2107
  %v2157 = vmax.f32 %v2059, %v2108
  %v2158 = vmax.f32 %v2060, %v2109
  %v2159 = vmax.f32 %v2061, %v2110
  %v2160 = vmax.f32 %v2062, %v2111
  %v2161 = vmax.f32 %v2063, %v2112
  %v2162 = vmax.f32 %v2064, %v2113
  %v2163 = vmax.f32 %v2065, %v2114
  %v2164 = vmax.f32 %v2066, %v2115
  %v2165 = vmax.f32 %v2067, %v2116
  %v2166 = vmax.f32 %v2068, %v2117
  %v2167 = vmax.f32 %v2069, %v2118
  %v2168 = vmax.f32 %v2070, %v2119
  %v2169 = vmax.f32 %v2071, %v2120
  %v2170 = vmax.f32 %v2072, %v2121
  %v2171 = vmax.f32 %v2073, %v2122
  %v2172 = vmax.f32 %v2074, %v2123
  %v2173 = vmax.f32 %v2075, %v2124
  %v2174 = vmax.f32 %v2076, %v2125
  %v2175 = vmax.f32 %v2077, %v2126
  %v2176 = vmax.f32 %v2078, %v2127
  %v2177 = vmax.f32 %v2079, %v2128
  %v2178 = vmax.f32 %v2080, %v2129
  %v2179 = vmax.f32 %v2081, %v2130
  %v2180 = vmax.f32 %v2082, %v2131
  %v2181 = vmax.f32 %v2083, %v2132
  %v2182 = vmax.f32 %v2084, %v2133
  %v2183 = vmax.f32 %v2085, %v2134
  %v2184 = vmax.f32 %v2086, %v2135
  %v2185 = vmax.f32 %v2087, %v2136
  %v2186 = vmax.f32 %v2088, %v2137
  %v2187 = vmax.f32 %v2089, %v2138
  %v2188 = vmax.f32 %v2090, %v2139
  %v2189 = vmax.f32 %v2091, %v2140
  %v2190 = vmax.f32 %v2092, %v2141
  %v2191 = vmax.f32 %v2093, %v2142
  %v2192 = vmax.f32 %v2094, %v2143
  %v2193 = vmax.f32 %v2095, %v2144
  %v2194 = vmax.f32 %v2096, %v2145
  %v2195 = vmax.f32 %v2097, %v2146
  %v2196 = vmax.f32 %v2098, %v2147
  %v2197 = vmax.f32 %v2099, %v2148
  %v2198 = vmax.f32 %v2100, %v2149
  %v2199 = vmax.f32 %v2101, %v2150
  %v2200 = vmax.f32 %v2102, %v2151
  %v2201 = vmax.f32 %v2103, %v2152
  %v2202 = vmax.f32 %v2104, %v2153
  %v2203 = vld [vmem:[%s2] sm:$0x1]
  %v2205 = vlaneseq
  %v2206 = vshrl.u32 %v2205, 7
  %v2207 = vsub.s32 0, %v2206
  %v2208 = vrot.slane %v2203, %v2207
  %v2210 = vadd.f32 %v2154, %v2208
  %v2211 = vadd.f32 %v2155, %v2208
  %v2212 = vadd.f32 %v2156, %v2208
  %v2213 = vadd.f32 %v2157, %v2208
  %v2214 = vadd.f32 %v2158, %v2208
  %v2215 = vadd.f32 %v2159, %v2208
  %v2216 = vadd.f32 %v2160, %v2208
  %v2217 = vadd.f32 %v2161, %v2208
  %v2218 = vadd.f32 %v2162, %v2208
  %v2219 = vadd.f32 %v2163, %v2208
  %v2220 = vadd.f32 %v2164, %v2208
  %v2221 = vadd.f32 %v2165, %v2208
  %v2222 = vadd.f32 %v2166, %v2208
  %v2223 = vadd.f32 %v2167, %v2208
  %v2224 = vadd.f32 %v2168, %v2208
  %v2225 = vadd.f32 %v2169, %v2208
  %v2226 = vadd.f32 %v2170, %v2208
  %v2227 = vadd.f32 %v2171, %v2208
  %v2228 = vadd.f32 %v2172, %v2208
  %v2229 = vadd.f32 %v2173, %v2208
  %v2230 = vadd.f32 %v2174, %v2208
  %v2231 = vadd.f32 %v2175, %v2208
  %v2232 = vadd.f32 %v2176, %v2208
  %v2233 = vadd.f32 %v2177, %v2208
  %v2234 = vadd.f32 %v2178, %v2208
  %v2235 = vadd.f32 %v2179, %v2208
  %v2236 = vadd.f32 %v2180, %v2208
  %v2237 = vadd.f32 %v2181, %v2208
  %v2238 = vadd.f32 %v2182, %v2208
  %v2239 = vadd.f32 %v2183, %v2208
  %v2240 = vadd.f32 %v2184, %v2208
  %v2241 = vadd.f32 %v2185, %v2208
  %v2242 = vadd.f32 %v2186, %v2208
  %v2243 = vadd.f32 %v2187, %v2208
  %v2244 = vadd.f32 %v2188, %v2208
  %v2245 = vadd.f32 %v2189, %v2208
  %v2246 = vadd.f32 %v2190, %v2208
  %v2247 = vadd.f32 %v2191, %v2208
  %v2248 = vadd.f32 %v2192, %v2208
  %v2249 = vadd.f32 %v2193, %v2208
  %v2250 = vadd.f32 %v2194, %v2208
  %v2251 = vadd.f32 %v2195, %v2208
  %v2252 = vadd.f32 %v2196, %v2208
  %v2253 = vadd.f32 %v2197, %v2208
  %v2254 = vadd.f32 %v2198, %v2208
  %v2255 = vadd.f32 %v2199, %v2208
  %v2256 = vadd.f32 %v2200, %v2208
  %v2257 = vadd.f32 %v2201, %v2208
  %v2258 = vadd.f32 %v2202, %v2208
  %v2259 = vtanh.pop %v2210
  %v2260 = vtanh.pop %v2211
  %v2261 = vtanh.pop %v2212
  %v2262 = vtanh.pop %v2213
  %v2263 = vtanh.pop %v2214
  %v2264 = vtanh.pop %v2215
  %v2265 = vtanh.pop %v2216
  %v2266 = vtanh.pop %v2217
  %v2267 = vtanh.pop %v2218
  %v2268 = vtanh.pop %v2219
  %v2269 = vtanh.pop %v2220
  %v2270 = vtanh.pop %v2221
  %v2271 = vtanh.pop %v2222
  %v2272 = vtanh.pop %v2223
  %v2273 = vtanh.pop %v2224
  %v2274 = vtanh.pop %v2225
  %v2275 = vtanh.pop %v2226
  %v2276 = vtanh.pop %v2227
  %v2277 = vtanh.pop %v2228
  %v2278 = vtanh.pop %v2229
  %v2279 = vtanh.pop %v2230
  %v2280 = vtanh.pop %v2231
  %v2281 = vtanh.pop %v2232
  %v2282 = vtanh.pop %v2233
  %v2283 = vtanh.pop %v2234
  %v2284 = vtanh.pop %v2235
  %v2285 = vtanh.pop %v2236
  %v2286 = vtanh.pop %v2237
  %v2287 = vtanh.pop %v2238
  %v2288 = vtanh.pop %v2239
  %v2289 = vtanh.pop %v2240
  %v2290 = vtanh.pop %v2241
  %v2291 = vtanh.pop %v2242
  %v2292 = vtanh.pop %v2243
  %v2293 = vtanh.pop %v2244
  %v2294 = vtanh.pop %v2245
  %v2295 = vtanh.pop %v2246
  %v2296 = vtanh.pop %v2247
  %v2297 = vtanh.pop %v2248
  %v2298 = vtanh.pop %v2249
  %v2299 = vtanh.pop %v2250
  %v2300 = vtanh.pop %v2251
  %v2301 = vtanh.pop %v2252
  %v2302 = vtanh.pop %v2253
  %v2303 = vtanh.pop %v2254
  %v2304 = vtanh.pop %v2255
  %v2305 = vtanh.pop %v2256
  %v2306 = vtanh.pop %v2257
  %v2307 = vtanh.pop %v2258
  %vm2308 = vcmask 48128
  %2309 = vst.msk [vmem:[%s3] sm:$0xff] %vm2308, %v2259
  %2310 = vst.msk [vmem:[%s3 + $0x8] sm:$0xff] %vm2308, %v2260
  %2311 = vst.msk [vmem:[%s3 + $0x10] sm:$0xff] %vm2308, %v2261
  %2312 = vst.msk [vmem:[%s3 + $0x18] sm:$0xff] %vm2308, %v2262
  %2313 = vst.msk [vmem:[%s3 + $0x20] sm:$0xff] %vm2308, %v2263
  %2314 = vst.msk [vmem:[%s3 + $0x28] sm:$0xff] %vm2308, %v2264
  %2315 = vst.msk [vmem:[%s3 + $0x30] sm:$0xff] %vm2308, %v2265
  %2316 = vst.msk [vmem:[%s3 + $0x38] sm:$0xff] %vm2308, %v2266
  %2317 = vst.msk [vmem:[%s3 + $0x40] sm:$0xff] %vm2308, %v2267
  %2318 = vst.msk [vmem:[%s3 + $0x48] sm:$0xff] %vm2308, %v2268
  %2319 = vst.msk [vmem:[%s3 + $0x50] sm:$0xff] %vm2308, %v2269
  %2320 = vst.msk [vmem:[%s3 + $0x58] sm:$0xff] %vm2308, %v2270
  %2321 = vst.msk [vmem:[%s3 + $0x60] sm:$0xff] %vm2308, %v2271
  %2322 = vst.msk [vmem:[%s3 + $0x68] sm:$0xff] %vm2308, %v2272
  %2323 = vst.msk [vmem:[%s3 + $0x70] sm:$0xff] %vm2308, %v2273
  %2324 = vst.msk [vmem:[%s3 + $0x78] sm:$0xff] %vm2308, %v2274
  %2325 = vst.msk [vmem:[%s3 + $0x80] sm:$0xff] %vm2308, %v2275
  %2326 = vst.msk [vmem:[%s3 + $0x88] sm:$0xff] %vm2308, %v2276
  %2327 = vst.msk [vmem:[%s3 + $0x90] sm:$0xff] %vm2308, %v2277
  %2328 = vst.msk [vmem:[%s3 + $0x98] sm:$0xff] %vm2308, %v2278
  %2329 = vst.msk [vmem:[%s3 + $0xa0] sm:$0xff] %vm2308, %v2279
  %2330 = vst.msk [vmem:[%s3 + $0xa8] sm:$0xff] %vm2308, %v2280
  %2331 = vst.msk [vmem:[%s3 + $0xb0] sm:$0xff] %vm2308, %v2281
  %2332 = vst.msk [vmem:[%s3 + $0xb8] sm:$0xff] %vm2308, %v2282
  %2333 = vst.msk [vmem:[%s3 + $0xc0] sm:$0xff] %vm2308, %v2283
  %2334 = vst.msk [vmem:[%s3 + $0xc8] sm:$0xff] %vm2308, %v2284
  %2335 = vst.msk [vmem:[%s3 + $0xd0] sm:$0xff] %vm2308, %v2285
  %2336 = vst.msk [vmem:[%s3 + $0xd8] sm:$0xff] %vm2308, %v2286
  %2337 = vst.msk [vmem:[%s3 + $0xe0] sm:$0xff] %vm2308, %v2287
  %2338 = vst.msk [vmem:[%s3 + $0xe8] sm:$0xff] %vm2308, %v2288
  %2339 = vst.msk [vmem:[%s3 + $0xf0] sm:$0xff] %vm2308, %v2289
  %2340 = vst.msk [vmem:[%s3 + $0xf8] sm:$0xff] %vm2308, %v2290
  %2341 = vst.msk [vmem:[%s3 + $0x100] sm:$0xff] %vm2308, %v2291
  %2342 = vst.msk [vmem:[%s3 + $0x108] sm:$0xff] %vm2308, %v2292
  %2343 = vst.msk [vmem:[%s3 + $0x110] sm:$0xff] %vm2308, %v2293
  %2344 = vst.msk [vmem:[%s3 + $0x118] sm:$0xff] %vm2308, %v2294
  %2345 = vst.msk [vmem:[%s3 + $0x120] sm:$0xff] %vm2308, %v2295
  %2346 = vst.msk [vmem:[%s3 + $0x128] sm:$0xff] %vm2308, %v2296
  %2347 = vst.msk [vmem:[%s3 + $0x130] sm:$0xff] %vm2308, %v2297
  %2348 = vst.msk [vmem:[%s3 + $0x138] sm:$0xff] %vm2308, %v2298
  %2349 = vst.msk [vmem:[%s3 + $0x140] sm:$0xff] %vm2308, %v2299
  %2350 = vst.msk [vmem:[%s3 + $0x148] sm:$0xff] %vm2308, %v2300
  %2351 = vst.msk [vmem:[%s3 + $0x150] sm:$0xff] %vm2308, %v2301
  %2352 = vst.msk [vmem:[%s3 + $0x158] sm:$0xff] %vm2308, %v2302
  %2353 = vst.msk [vmem:[%s3 + $0x160] sm:$0xff] %vm2308, %v2303
  %2354 = vst.msk [vmem:[%s3 + $0x168] sm:$0xff] %vm2308, %v2304
  %2355 = vst.msk [vmem:[%s3 + $0x170] sm:$0xff] %vm2308, %v2305
  %2356 = vst.msk [vmem:[%s3 + $0x178] sm:$0xff] %vm2308, %v2306
  %2357 = vst.msk [vmem:[%s3 + $0x180] sm:$0xff] %vm2308, %v2307
  // Predicated region
  $region14: #{mode11_forward_pallas.3} parent=0 // pred_check
    _
  $region15: #{mode11_forward_pallas.3} parent=0 // pred_check_branch
    %2359 = sbr.rel (0) target = $region17
  $region16: #{mode11_forward_pallas.3} parent=0 // pred_region
    _
  $region17: #{mode11_forward_pallas.3} parent=0 // pred_fallthru
    _
  // Predicated region
  $region18: #{mode11_forward_pallas.3} parent=0 // pred_check
    _
  $region19: #{mode11_forward_pallas.3} parent=0 // pred_check_branch
    %2361 = sbr.rel (0) target = $region21
  $region20: #{mode11_forward_pallas.3} parent=0 // pred_region
    _
  $region21: #{mode11_forward_pallas.3} parent=0 // pred_fallthru
    _

// kernel: mode11_forward_pallas.4
$region0: #{mode11_forward_pallas.4}
  #allocation0 [shape = 'u32[]', space=smem, size = 0x4, offset = 0x4, fixed_abs, tag = 'smem constant byte address 0x4 - core index']
  #allocation1 [shape = 'u32[144,128]{1,0:T(1,128)}', space=vmem, size = 0x12000, scoped, tag = 'internal scratch']
  %s0 = inlined_call_operand.vmem [shape: f32[4,56,150], index: 0, kind: input, shape index: {}]
  %s1 = inlined_call_operand.vmem [shape: f32[150,16], index: 1, kind: input, shape index: {}]
  %s2 = inlined_call_operand.vmem [shape: f32[1,16], index: 2, kind: input, shape index: {}]
  %s3 = inlined_call_operand.vmem [shape: f32[56,16], index: 3, kind: output, shape index: {}]
  %s4 = sld [smem:[#allocation0]]
  $region22: #{mode11_forward_pallas.4} parent=0
    _
  %s6 = ssub.s32 1, %s4
  %s7 = scalar_select 0, %s6, %s4
  // Predicated region
  $region2: #{mode11_forward_pallas.4} parent=0 // pred_check
    _
  $region3: #{mode11_forward_pallas.4} parent=0 // pred_check_branch
    %9 = sbr.rel (0) target = $region5
  $region4: #{mode11_forward_pallas.4} parent=0 // pred_region
    _
  $region5: #{mode11_forward_pallas.4} parent=0 // pred_fallthru
    _
  // Predicated region
  $region6: #{mode11_forward_pallas.4} parent=0 // pred_check
    _
  $region7: #{mode11_forward_pallas.4} parent=0 // pred_check_branch
    %11 = sbr.rel (0) target = $region9
  $region8: #{mode11_forward_pallas.4} parent=0 // pred_region
    _
  $region9: #{mode11_forward_pallas.4} parent=0 // pred_fallthru
    _
  // Predicated region
  $region10: #{mode11_forward_pallas.4} parent=0 // pred_check
    _
  $region11: #{mode11_forward_pallas.4} parent=0 // pred_check_branch
    %13 = sbr.rel (0) target = $region13
  $region12: #{mode11_forward_pallas.4} parent=0 // pred_region
    _
  $region13: #{mode11_forward_pallas.4} parent=0 // pred_fallthru
    _
  %v14 = vld [vmem:[%s1] sm:$0xff]
  %v15 = vld [vmem:[%s1 + $0x8] sm:$0xff]
  %v16 = vld [vmem:[%s1 + $0x10] sm:$0xff]
  %v17 = vld [vmem:[%s1 + $0x18] sm:$0xff]
  %v18 = vld [vmem:[%s1 + $0x20] sm:$0xff]
  %v19 = vld [vmem:[%s1 + $0x28] sm:$0xff]
  %v20 = vld [vmem:[%s1 + $0x30] sm:$0xff]
  %v21 = vld [vmem:[%s1 + $0x38] sm:$0xff]
  %v22 = vld [vmem:[%s1 + $0x40] sm:$0xff]
  %v23 = vld [vmem:[%s1 + $0x48] sm:$0xff]
  %v24 = vld [vmem:[%s1 + $0x50] sm:$0xff]
  %v25 = vld [vmem:[%s1 + $0x58] sm:$0xff]
  %v26 = vld [vmem:[%s1 + $0x60] sm:$0xff]
  %v27 = vld [vmem:[%s1 + $0x68] sm:$0xff]
  %v28 = vld [vmem:[%s1 + $0x70] sm:$0xff]
  %v29 = vld [vmem:[%s1 + $0x78] sm:$0xff]
  %v30 = vld [vmem:[%s1 + $0x80] sm:$0xff]
  %v31 = vld [vmem:[%s1 + $0x88] sm:$0xff]
  %v32 = vld [vmem:[%s1 + $0x90] sm:$0x3f]
  %v33 = vld [vmem:[%s0] sm:$0xff]
  %v34 = vld [vmem:[%s0 + $0x8] sm:$0xff]
  %v35 = vld [vmem:[%s0 + $0x10] sm:$0xff]
  %v36 = vld [vmem:[%s0 + $0x18] sm:$0xff]
  %v37 = vld [vmem:[%s0 + $0x20] sm:$0xff]
  %v38 = vld [vmem:[%s0 + $0x28] sm:$0xff]
  %v39 = vld [vmem:[%s0 + $0x30] sm:$0xff]
  %v40 = vld [vmem:[%s0 + $0x38] sm:$0xff]
  %v41 = vld [vmem:[%s0 + $0x40] sm:$0xff]
  %v42 = vld [vmem:[%s0 + $0x48] sm:$0xff]
  %v43 = vld [vmem:[%s0 + $0x50] sm:$0xff]
  %v44 = vld [vmem:[%s0 + $0x58] sm:$0xff]
  %v45 = vld [vmem:[%s0 + $0x60] sm:$0xff]
  %v46 = vld [vmem:[%s0 + $0x68] sm:$0xff]
  %vm47 = vcmask 179200
  %v49 = vsel %vm47, %v34, 0
  %v52 = vsel %vm47, %v36, 0
  %v55 = vsel %vm47, %v38, 0
  %v58 = vsel %vm47, %v40, 0
  %v61 = vsel %vm47, %v42, 0
  %v64 = vsel %vm47, %v44, 0
  %v67 = vsel %vm47, %v46, 0
  %vm69 = vcmask 1045504
  %v71 = vsel %vm69, %v32, 0
  %73 = vmatprep.subr.mxu0 0.0
  %74 = vmatpush1.msra.mxu0 %v14
  %75 = vmatprep.subr.mxu0 0.0
  %76 = vmatpush1.msra.mxu0 %v15
  %77 = vmatprep.subr.mxu0 0.0
  %78 = vmatpush1.msra.mxu0 %v16
  %79 = vmatprep.subr.mxu0 0.0
  %80 = vmatpush1.msra.mxu0 %v17
  %81 = vmatprep.subr.mxu0 0.0
  %82 = vmatpush1.msra.mxu0 %v18
  %83 = vmatprep.subr.mxu0 0.0
  %84 = vmatpush1.msra.mxu0 %v19
  %85 = vmatprep.subr.mxu0 0.0
  %86 = vmatpush1.msra.mxu0 %v20
  %87 = vmatprep.subr.mxu0 0.0
  %88 = vmatpush1.msra.mxu0 %v21
  %89 = vmatprep.subr.mxu0 0.0
  %90 = vmatpush1.msra.mxu0 %v22
  %91 = vmatprep.subr.mxu0 0.0
  %92 = vmatpush1.msra.mxu0 %v23
  %93 = vmatprep.subr.mxu0 0.0
  %94 = vmatpush1.msra.mxu0 %v24
  %95 = vmatprep.subr.mxu0 0.0
  %96 = vmatpush1.msra.mxu0 %v25
  %97 = vmatprep.subr.mxu0 0.0
  %98 = vmatpush1.msra.mxu0 %v26
  %99 = vmatprep.subr.mxu0 0.0
  %100 = vmatpush1.msra.mxu0 %v27
  %101 = vmatprep.subr.mxu0 0.0
  %102 = vmatpush1.msra.mxu0 %v28
  %103 = vmatprep.subr.mxu0 0.0
  %104 = vmatpush1.msra.mxu0 %v29
  %105 = vmatprep.subr.mxu0 0.0
  %106 = vmatpush1.msra.mxu0 %v30
  %107 = vmatprep.subr.mxu0 0.0
  %108 = vmatpush1.msra.mxu0 %v31
  %109 = vmatprep.subr.mxu0 0.0
  %110 = vmatpush1.msra.mxu0 %v71
  %111 = vmatprep.subr.mxu0 0.0
  %112 = vmatpush1.msra.mxu0 0.0
  %113 = vmatprep.subr.mxu0 0.0
  %114 = vmatpush1.msra.mxu0 0.0
  %115 = vmatprep.subr.mxu0 0.0
  %116 = vmatpush1.msra.mxu0 0.0
  %117 = vmatprep.subr.mxu0 0.0
  %118 = vmatpush1.msra.mxu0 0.0
  %119 = vmatprep.subr.mxu0 0.0
  %120 = vmatpush1.msra.mxu0 0.0
  %121 = vmatprep.subr.mxu0 0.0
  %122 = vmatpush1.msra.mxu0 0.0
  %123 = vmatprep.subr.mxu0 0.0
  %124 = vmatpush1.msra.mxu0 0.0
  %125 = vmatprep.subr.mxu0 0.0
  %126 = vmatpush1.msra.mxu0 0.0
  %127 = vmatprep.subr.mxu0 0.0
  %128 = vmatpush1.msra.mxu0 0.0
  %129 = vmatprep.subr.mxu0 0.0
  %130 = vmatpush1.msra.mxu0 0.0
  %131 = vmatprep.subr.mxu0 0.0
  %132 = vmatpush1.msra.mxu0 0.0
  %133 = vmatprep.subr.mxu0 0.0
  %134 = vmatpush1.msra.mxu0 0.0
  %135 = vmatprep.subr.mxu0 0.0
  %136 = vmatpush1.msra.mxu0 0.0
  %137 = vmatprep.mubr.f32.mxu0 %v49
  %138 = vmatmul.mubr.f32.gmra.mrb[0].mxu0 %v33
  %v139 = vpop.f32.mrb[0].mxu0
  %v140 = vadd.f32 0.0, %v139
  %v141 = vpop.f32.mrb[0].mxu0
  %142 = vmatprep.mubr.f32.mxu0 %v52
  %143 = vmatmul.mubr.f32.gmra.mrb[0].mxu0 %v35
  %v144 = vpop.f32.mrb[0].mxu0
  %v145 = vadd.f32 0.0, %v144
  %v146 = vpop.f32.mrb[0].mxu0
  %147 = vmatprep.mubr.f32.mxu0 %v55
  %148 = vmatmul.mubr.f32.gmra.mrb[0].mxu0 %v37
  %v149 = vpop.f32.mrb[0].mxu0
  %v150 = vadd.f32 0.0, %v149
  %v151 = vpop.f32.mrb[0].mxu0
  %152 = vmatprep.mubr.f32.mxu0 %v58
  %153 = vmatmul.mubr.f32.gmra.mrb[0].mxu0 %v39
  %v154 = vpop.f32.mrb[0].mxu0
  %v155 = vadd.f32 0.0, %v154
  %v156 = vpop.f32.mrb[0].mxu0
  %157 = vmatprep.mubr.f32.mxu0 %v61
  %158 = vmatmul.mubr.f32.gmra.mrb[0].mxu0 %v41
  %v159 = vpop.f32.mrb[0].mxu0
  %v160 = vadd.f32 0.0, %v159
  %v161 = vpop.f32.mrb[0].mxu0
  %162 = vmatprep.mubr.f32.mxu0 %v64
  %163 = vmatmul.mubr.f32.gmra.mrb[0].mxu0 %v43
  %v164 = vpop.f32.mrb[0].mxu0
  %v165 = vadd.f32 0.0, %v164
  %v166 = vpop.f32.mrb[0].mxu0
  %167 = vmatprep.mubr.f32.mxu0 %v67
  %168 = vmatmul.mubr.f32.gmra.mrb[0].mxu0 %v45
  %v169 = vpop.f32.mrb[0].mxu0
  %v170 = vadd.f32 0.0, %v169
  %v171 = vpop.f32.mrb[0].mxu0
  %172 = vdwg.mxu0
  %s173 = scalar_lea.vmem %s0, 112
  %v174 = vld [vmem:[%s173] sm:$0xff]
  %v175 = vld [vmem:[%s173 + $0x8] sm:$0xff]
  %v176 = vld [vmem:[%s173 + $0x10] sm:$0xff]
  %v177 = vld [vmem:[%s173 + $0x18] sm:$0xff]
  %v178 = vld [vmem:[%s173 + $0x20] sm:$0xff]
  %v179 = vld [vmem:[%s173 + $0x28] sm:$0xff]
  %v180 = vld [vmem:[%s173 + $0x30] sm:$0xff]
  %v181 = vld [vmem:[%s173 + $0x38] sm:$0xff]
  %v182 = vld [vmem:[%s173 + $0x40] sm:$0xff]
  %v183 = vld [vmem:[%s173 + $0x48] sm:$0xff]
  %v184 = vld [vmem:[%s173 + $0x50] sm:$0xff]
  %v185 = vld [vmem:[%s173 + $0x58] sm:$0xff]
  %v186 = vld [vmem:[%s173 + $0x60] sm:$0xff]
  %v187 = vld [vmem:[%s173 + $0x68] sm:$0xff]
  %v189 = vsel %vm47, %v175, 0
  %v192 = vsel %vm47, %v177, 0
  %v195 = vsel %vm47, %v179, 0
  %v198 = vsel %vm47, %v181, 0
  %v201 = vsel %vm47, %v183, 0
  %v204 = vsel %vm47, %v185, 0
  %v207 = vsel %vm47, %v187, 0
  %209 = vmatprep.subr.mxu0 0.0
  %210 = vmatpush1.msra.mxu0 %v14
  %211 = vmatprep.subr.mxu0 0.0
  %212 = vmatpush1.msra.mxu0 %v15
  %213 = vmatprep.subr.mxu0 0.0
  %214 = vmatpush1.msra.mxu0 %v16
  %215 = vmatprep.subr.mxu0 0.0
  %216 = vmatpush1.msra.mxu0 %v17
  %217 = vmatprep.subr.mxu0 0.0
  %218 = vmatpush1.msra.mxu0 %v18
  %219 = vmatprep.subr.mxu0 0.0
  %220 = vmatpush1.msra.mxu0 %v19
  %221 = vmatprep.subr.mxu0 0.0
  %222 = vmatpush1.msra.mxu0 %v20
  %223 = vmatprep.subr.mxu0 0.0
  %224 = vmatpush1.msra.mxu0 %v21
  %225 = vmatprep.subr.mxu0 0.0
  %226 = vmatpush1.msra.mxu0 %v22
  %227 = vmatprep.subr.mxu0 0.0
  %228 = vmatpush1.msra.mxu0 %v23
  %229 = vmatprep.subr.mxu0 0.0
  %230 = vmatpush1.msra.mxu0 %v24
  %231 = vmatprep.subr.mxu0 0.0
  %232 = vmatpush1.msra.mxu0 %v25
  %233 = vmatprep.subr.mxu0 0.0
  %234 = vmatpush1.msra.mxu0 %v26
  %235 = vmatprep.subr.mxu0 0.0
  %236 = vmatpush1.msra.mxu0 %v27
  %237 = vmatprep.subr.mxu0 0.0
  %238 = vmatpush1.msra.mxu0 %v28
  %239 = vmatprep.subr.mxu0 0.0
  %240 = vmatpush1.msra.mxu0 %v29
  %241 = vmatprep.subr.mxu0 0.0
  %242 = vmatpush1.msra.mxu0 %v30
  %243 = vmatprep.subr.mxu0 0.0
  %244 = vmatpush1.msra.mxu0 %v31
  %245 = vmatprep.subr.mxu0 0.0
  %246 = vmatpush1.msra.mxu0 %v71
  %247 = vmatprep.subr.mxu0 0.0
  %248 = vmatpush1.msra.mxu0 0.0
  %249 = vmatprep.subr.mxu0 0.0
  %250 = vmatpush1.msra.mxu0 0.0
  %251 = vmatprep.subr.mxu0 0.0
  %252 = vmatpush1.msra.mxu0 0.0
  %253 = vmatprep.subr.mxu0 0.0
  %254 = vmatpush1.msra.mxu0 0.0
  %255 = vmatprep.subr.mxu0 0.0
  %256 = vmatpush1.msra.mxu0 0.0
  %257 = vmatprep.subr.mxu0 0.0
  %258 = vmatpush1.msra.mxu0 0.0
  %259 = vmatprep.subr.mxu0 0.0
  %260 = vmatpush1.msra.mxu0 0.0
  %261 = vmatprep.subr.mxu0 0.0
  %262 = vmatpush1.msra.mxu0 0.0
  %263 = vmatprep.subr.mxu0 0.0
  %264 = vmatpush1.msra.mxu0 0.0
  %265 = vmatprep.subr.mxu0 0.0
  %266 = vmatpush1.msra.mxu0 0.0
  %267 = vmatprep.subr.mxu0 0.0
  %268 = vmatpush1.msra.mxu0 0.0
  %269 = vmatprep.subr.mxu0 0.0
  %270 = vmatpush1.msra.mxu0 0.0
  %271 = vmatprep.subr.mxu0 0.0
  %272 = vmatpush1.msra.mxu0 0.0
  %273 = vmatprep.mubr.f32.mxu0 %v189
  %274 = vmatmul.mubr.f32.gmra.mrb[0].mxu0 %v174
  %v275 = vpop.f32.mrb[0].mxu0
  %v276 = vadd.f32 0.0, %v275
  %v277 = vpop.f32.mrb[0].mxu0
  %278 = vmatprep.mubr.f32.mxu0 %v192
  %279 = vmatmul.mubr.f32.gmra.mrb[0].mxu0 %v176
  %v280 = vpop.f32.mrb[0].mxu0
  %v281 = vadd.f32 0.0, %v280
  %v282 = vpop.f32.mrb[0].mxu0
  %283 = vmatprep.mubr.f32.mxu0 %v195
  %284 = vmatmul.mubr.f32.gmra.mrb[0].mxu0 %v178
  %v285 = vpop.f32.mrb[0].mxu0
  %v286 = vadd.f32 0.0, %v285
  %v287 = vpop.f32.mrb[0].mxu0
  %288 = vmatprep.mubr.f32.mxu0 %v198
  %289 = vmatmul.mubr.f32.gmra.mrb[0].mxu0 %v180
  %v290 = vpop.f32.mrb[0].mxu0
  %v291 = vadd.f32 0.0, %v290
  %v292 = vpop.f32.mrb[0].mxu0
  %293 = vmatprep.mubr.f32.mxu0 %v201
  %294 = vmatmul.mubr.f32.gmra.mrb[0].mxu0 %v182
  %v295 = vpop.f32.mrb[0].mxu0
  %v296 = vadd.f32 0.0, %v295
  %v297 = vpop.f32.mrb[0].mxu0
  %298 = vmatprep.mubr.f32.mxu0 %v204
  %299 = vmatmul.mubr.f32.gmra.mrb[0].mxu0 %v184
  %v300 = vpop.f32.mrb[0].mxu0
  %v301 = vadd.f32 0.0, %v300
  %v302 = vpop.f32.mrb[0].mxu0
  %303 = vmatprep.mubr.f32.mxu0 %v207
  %304 = vmatmul.mubr.f32.gmra.mrb[0].mxu0 %v186
  %v305 = vpop.f32.mrb[0].mxu0
  %v306 = vadd.f32 0.0, %v305
  %v307 = vpop.f32.mrb[0].mxu0
  %308 = vdwg.mxu0
  %s309 = scalar_lea.vmem %s0, 224
  %v310 = vld [vmem:[%s309] sm:$0xff]
  %v311 = vld [vmem:[%s309 + $0x8] sm:$0xff]
  %v312 = vld [vmem:[%s309 + $0x10] sm:$0xff]
  %v313 = vld [vmem:[%s309 + $0x18] sm:$0xff]
  %v314 = vld [vmem:[%s309 + $0x20] sm:$0xff]
  %v315 = vld [vmem:[%s309 + $0x28] sm:$0xff]
  %v316 = vld [vmem:[%s309 + $0x30] sm:$0xff]
  %v317 = vld [vmem:[%s309 + $0x38] sm:$0xff]
  %v318 = vld [vmem:[%s309 + $0x40] sm:$0xff]
  %v319 = vld [vmem:[%s309 + $0x48] sm:$0xff]
  %v320 = vld [vmem:[%s309 + $0x50] sm:$0xff]
  %v321 = vld [vmem:[%s309 + $0x58] sm:$0xff]
  %v322 = vld [vmem:[%s309 + $0x60] sm:$0xff]
  %v323 = vld [vmem:[%s309 + $0x68] sm:$0xff]
  %v325 = vsel %vm47, %v311, 0
  %v328 = vsel %vm47, %v313, 0
  %v331 = vsel %vm47, %v315, 0
  %v334 = vsel %vm47, %v317, 0
  %v337 = vsel %vm47, %v319, 0
  %v340 = vsel %vm47, %v321, 0
  %v343 = vsel %vm47, %v323, 0
  %345 = vmatprep.subr.mxu0 0.0
  %346 = vmatpush1.msra.mxu0 %v14
  %347 = vmatprep.subr.mxu0 0.0
  %348 = vmatpush1.msra.mxu0 %v15
  %349 = vmatprep.subr.mxu0 0.0
  %350 = vmatpush1.msra.mxu0 %v16
  %351 = vmatprep.subr.mxu0 0.0
  %352 = vmatpush1.msra.mxu0 %v17
  %353 = vmatprep.subr.mxu0 0.0
  %354 = vmatpush1.msra.mxu0 %v18
  %355 = vmatprep.subr.mxu0 0.0
  %356 = vmatpush1.msra.mxu0 %v19
  %357 = vmatprep.subr.mxu0 0.0
  %358 = vmatpush1.msra.mxu0 %v20
  %359 = vmatprep.subr.mxu0 0.0
  %360 = vmatpush1.msra.mxu0 %v21
  %361 = vmatprep.subr.mxu0 0.0
  %362 = vmatpush1.msra.mxu0 %v22
  %363 = vmatprep.subr.mxu0 0.0
  %364 = vmatpush1.msra.mxu0 %v23
  %365 = vmatprep.subr.mxu0 0.0
  %366 = vmatpush1.msra.mxu0 %v24
  %367 = vmatprep.subr.mxu0 0.0
  %368 = vmatpush1.msra.mxu0 %v25
  %369 = vmatprep.subr.mxu0 0.0
  %370 = vmatpush1.msra.mxu0 %v26
  %371 = vmatprep.subr.mxu0 0.0
  %372 = vmatpush1.msra.mxu0 %v27
  %373 = vmatprep.subr.mxu0 0.0
  %374 = vmatpush1.msra.mxu0 %v28
  %375 = vmatprep.subr.mxu0 0.0
  %376 = vmatpush1.msra.mxu0 %v29
  %377 = vmatprep.subr.mxu0 0.0
  %378 = vmatpush1.msra.mxu0 %v30
  %379 = vmatprep.subr.mxu0 0.0
  %380 = vmatpush1.msra.mxu0 %v31
  %381 = vmatprep.subr.mxu0 0.0
  %382 = vmatpush1.msra.mxu0 %v71
  %383 = vmatprep.subr.mxu0 0.0
  %384 = vmatpush1.msra.mxu0 0.0
  %385 = vmatprep.subr.mxu0 0.0
  %386 = vmatpush1.msra.mxu0 0.0
  %387 = vmatprep.subr.mxu0 0.0
  %388 = vmatpush1.msra.mxu0 0.0
  %389 = vmatprep.subr.mxu0 0.0
  %390 = vmatpush1.msra.mxu0 0.0
  %391 = vmatprep.subr.mxu0 0.0
  %392 = vmatpush1.msra.mxu0 0.0
  %393 = vmatprep.subr.mxu0 0.0
  %394 = vmatpush1.msra.mxu0 0.0
  %395 = vmatprep.subr.mxu0 0.0
  %396 = vmatpush1.msra.mxu0 0.0
  %397 = vmatprep.subr.mxu0 0.0
  %398 = vmatpush1.msra.mxu0 0.0
  %399 = vmatprep.subr.mxu0 0.0
  %400 = vmatpush1.msra.mxu0 0.0
  %401 = vmatprep.subr.mxu0 0.0
  %402 = vmatpush1.msra.mxu0 0.0
  %403 = vmatprep.subr.mxu0 0.0
  %404 = vmatpush1.msra.mxu0 0.0
  %405 = vmatprep.subr.mxu0 0.0
  %406 = vmatpush1.msra.mxu0 0.0
  %407 = vmatprep.subr.mxu0 0.0
  %408 = vmatpush1.msra.mxu0 0.0
  %409 = vmatprep.mubr.f32.mxu0 %v325
  %410 = vmatmul.mubr.f32.gmra.mrb[0].mxu0 %v310
  %v411 = vpop.f32.mrb[0].mxu0
  %v412 = vadd.f32 0.0, %v411
  %v413 = vpop.f32.mrb[0].mxu0
  %414 = vmatprep.mubr.f32.mxu0 %v328
  %415 = vmatmul.mubr.f32.gmra.mrb[0].mxu0 %v312
  %v416 = vpop.f32.mrb[0].mxu0
  %v417 = vadd.f32 0.0, %v416
  %v418 = vpop.f32.mrb[0].mxu0
  %419 = vmatprep.mubr.f32.mxu0 %v331
  %420 = vmatmul.mubr.f32.gmra.mrb[0].mxu0 %v314
  %v421 = vpop.f32.mrb[0].mxu0
  %v422 = vadd.f32 0.0, %v421
  %v423 = vpop.f32.mrb[0].mxu0
  %424 = vmatprep.mubr.f32.mxu0 %v334
  %425 = vmatmul.mubr.f32.gmra.mrb[0].mxu0 %v316
  %v426 = vpop.f32.mrb[0].mxu0
  %v427 = vadd.f32 0.0, %v426
  %v428 = vpop.f32.mrb[0].mxu0
  %429 = vmatprep.mubr.f32.mxu0 %v337
  %430 = vmatmul.mubr.f32.gmra.mrb[0].mxu0 %v318
  %v431 = vpop.f32.mrb[0].mxu0
  %v432 = vadd.f32 0.0, %v431
  %v433 = vpop.f32.mrb[0].mxu0
  %434 = vmatprep.mubr.f32.mxu0 %v340
  %435 = vmatmul.mubr.f32.gmra.mrb[0].mxu0 %v320
  %v436 = vpop.f32.mrb[0].mxu0
  %v437 = vadd.f32 0.0, %v436
  %v438 = vpop.f32.mrb[0].mxu0
  %439 = vmatprep.mubr.f32.mxu0 %v343
  %440 = vmatmul.mubr.f32.gmra.mrb[0].mxu0 %v322
  %v441 = vpop.f32.mrb[0].mxu0
  %v442 = vadd.f32 0.0, %v441
  %v443 = vpop.f32.mrb[0].mxu0
  %444 = vdwg.mxu0
  %s445 = scalar_lea.vmem %s0, 336
  %v446 = vld [vmem:[%s445] sm:$0xff]
  %v447 = vld [vmem:[%s445 + $0x8] sm:$0xff]
  %v448 = vld [vmem:[%s445 + $0x10] sm:$0xff]
  %v449 = vld [vmem:[%s445 + $0x18] sm:$0xff]
  %v450 = vld [vmem:[%s445 + $0x20] sm:$0xff]
  %v451 = vld [vmem:[%s445 + $0x28] sm:$0xff]
  %v452 = vld [vmem:[%s445 + $0x30] sm:$0xff]
  %v453 = vld [vmem:[%s445 + $0x38] sm:$0xff]
  %v454 = vld [vmem:[%s445 + $0x40] sm:$0xff]
  %v455 = vld [vmem:[%s445 + $0x48] sm:$0xff]
  %v456 = vld [vmem:[%s445 + $0x50] sm:$0xff]
  %v457 = vld [vmem:[%s445 + $0x58] sm:$0xff]
  %v458 = vld [vmem:[%s445 + $0x60] sm:$0xff]
  %v459 = vld [vmem:[%s445 + $0x68] sm:$0xff]
  %v461 = vsel %vm47, %v447, 0
  %v464 = vsel %vm47, %v449, 0
  %v467 = vsel %vm47, %v451, 0
  %v470 = vsel %vm47, %v453, 0
  %v473 = vsel %vm47, %v455, 0
  %v476 = vsel %vm47, %v457, 0
  %v479 = vsel %vm47, %v459, 0
  %481 = vmatprep.subr.mxu0 0.0
  %482 = vmatpush1.msra.mxu0 %v14
  %483 = vmatprep.subr.mxu0 0.0
  %484 = vmatpush1.msra.mxu0 %v15
  %485 = vmatprep.subr.mxu0 0.0
  %486 = vmatpush1.msra.mxu0 %v16
  %487 = vmatprep.subr.mxu0 0.0
  %488 = vmatpush1.msra.mxu0 %v17
  %489 = vmatprep.subr.mxu0 0.0
  %490 = vmatpush1.msra.mxu0 %v18
  %491 = vmatprep.subr.mxu0 0.0
  %492 = vmatpush1.msra.mxu0 %v19
  %493 = vmatprep.subr.mxu0 0.0
  %494 = vmatpush1.msra.mxu0 %v20
  %495 = vmatprep.subr.mxu0 0.0
  %496 = vmatpush1.msra.mxu0 %v21
  %497 = vmatprep.subr.mxu0 0.0
  %498 = vmatpush1.msra.mxu0 %v22
  %499 = vmatprep.subr.mxu0 0.0
  %500 = vmatpush1.msra.mxu0 %v23
  %501 = vmatprep.subr.mxu0 0.0
  %502 = vmatpush1.msra.mxu0 %v24
  %503 = vmatprep.subr.mxu0 0.0
  %504 = vmatpush1.msra.mxu0 %v25
  %505 = vmatprep.subr.mxu0 0.0
  %506 = vmatpush1.msra.mxu0 %v26
  %507 = vmatprep.subr.mxu0 0.0
  %508 = vmatpush1.msra.mxu0 %v27
  %509 = vmatprep.subr.mxu0 0.0
  %510 = vmatpush1.msra.mxu0 %v28
  %511 = vmatprep.subr.mxu0 0.0
  %512 = vmatpush1.msra.mxu0 %v29
  %513 = vmatprep.subr.mxu0 0.0
  %514 = vmatpush1.msra.mxu0 %v30
  %515 = vmatprep.subr.mxu0 0.0
  %516 = vmatpush1.msra.mxu0 %v31
  %517 = vmatprep.subr.mxu0 0.0
  %518 = vmatpush1.msra.mxu0 %v71
  %519 = vmatprep.subr.mxu0 0.0
  %520 = vmatpush1.msra.mxu0 0.0
  %521 = vmatprep.subr.mxu0 0.0
  %522 = vmatpush1.msra.mxu0 0.0
  %523 = vmatprep.subr.mxu0 0.0
  %524 = vmatpush1.msra.mxu0 0.0
  %525 = vmatprep.subr.mxu0 0.0
  %526 = vmatpush1.msra.mxu0 0.0
  %527 = vmatprep.subr.mxu0 0.0
  %528 = vmatpush1.msra.mxu0 0.0
  %529 = vmatprep.subr.mxu0 0.0
  %530 = vmatpush1.msra.mxu0 0.0
  %531 = vmatprep.subr.mxu0 0.0
  %532 = vmatpush1.msra.mxu0 0.0
  %533 = vmatprep.subr.mxu0 0.0
  %534 = vmatpush1.msra.mxu0 0.0
  %535 = vmatprep.subr.mxu0 0.0
  %536 = vmatpush1.msra.mxu0 0.0
  %537 = vmatprep.subr.mxu0 0.0
  %538 = vmatpush1.msra.mxu0 0.0
  %539 = vmatprep.subr.mxu0 0.0
  %540 = vmatpush1.msra.mxu0 0.0
  %541 = vmatprep.subr.mxu0 0.0
  %542 = vmatpush1.msra.mxu0 0.0
  %543 = vmatprep.subr.mxu0 0.0
  %544 = vmatpush1.msra.mxu0 0.0
  %545 = vmatprep.mubr.f32.mxu0 %v461
  %546 = vmatmul.mubr.f32.gmra.mrb[0].mxu0 %v446
  %v547 = vpop.f32.mrb[0].mxu0
  %v548 = vadd.f32 0.0, %v547
  %v549 = vpop.f32.mrb[0].mxu0
  %550 = vmatprep.mubr.f32.mxu0 %v464
  %551 = vmatmul.mubr.f32.gmra.mrb[0].mxu0 %v448
  %v552 = vpop.f32.mrb[0].mxu0
  %v553 = vadd.f32 0.0, %v552
  %v554 = vpop.f32.mrb[0].mxu0
  %555 = vmatprep.mubr.f32.mxu0 %v467
  %556 = vmatmul.mubr.f32.gmra.mrb[0].mxu0 %v450
  %v557 = vpop.f32.mrb[0].mxu0
  %v558 = vadd.f32 0.0, %v557
  %v559 = vpop.f32.mrb[0].mxu0
  %560 = vmatprep.mubr.f32.mxu0 %v470
  %561 = vmatmul.mubr.f32.gmra.mrb[0].mxu0 %v452
  %v562 = vpop.f32.mrb[0].mxu0
  %v563 = vadd.f32 0.0, %v562
  %v564 = vpop.f32.mrb[0].mxu0
  %565 = vmatprep.mubr.f32.mxu0 %v473
  %566 = vmatmul.mubr.f32.gmra.mrb[0].mxu0 %v454
  %v567 = vpop.f32.mrb[0].mxu0
  %v568 = vadd.f32 0.0, %v567
  %v569 = vpop.f32.mrb[0].mxu0
  %570 = vmatprep.mubr.f32.mxu0 %v476
  %571 = vmatmul.mubr.f32.gmra.mrb[0].mxu0 %v456
  %v572 = vpop.f32.mrb[0].mxu0
  %v573 = vadd.f32 0.0, %v572
  %v574 = vpop.f32.mrb[0].mxu0
  %575 = vmatprep.mubr.f32.mxu0 %v479
  %576 = vmatmul.mubr.f32.gmra.mrb[0].mxu0 %v458
  %v577 = vpop.f32.mrb[0].mxu0
  %v578 = vadd.f32 0.0, %v577
  %v579 = vpop.f32.mrb[0].mxu0
  %580 = vdwg.mxu0
  %v581 = vmax.f32 %v140, %v276
  %v582 = vmax.f32 %v145, %v281
  %v583 = vmax.f32 %v150, %v286
  %v584 = vmax.f32 %v155, %v291
  %v585 = vmax.f32 %v160, %v296
  %v586 = vmax.f32 %v165, %v301
  %v587 = vmax.f32 %v170, %v306
  %v588 = vmax.f32 %v412, %v548
  %v589 = vmax.f32 %v417, %v553
  %v590 = vmax.f32 %v422, %v558
  %v591 = vmax.f32 %v427, %v563
  %v592 = vmax.f32 %v432, %v568
  %v593 = vmax.f32 %v437, %v573
  %v594 = vmax.f32 %v442, %v578
  %v595 = vmax.f32 %v581, %v588
  %v596 = vmax.f32 %v582, %v589
  %v597 = vmax.f32 %v583, %v590
  %v598 = vmax.f32 %v584, %v591
  %v599 = vmax.f32 %v585, %v592
  %v600 = vmax.f32 %v586, %v593
  %v601 = vmax.f32 %v587, %v594
  %v602 = vld [vmem:[%s2] sm:$0x1]
  %v604 = vlaneseq
  %v605 = vshrl.u32 %v604, 7
  %v606 = vsub.s32 0, %v605
  %v607 = vrot.slane %v602, %v606
  %v609 = vadd.f32 %v595, %v607
  %v610 = vadd.f32 %v596, %v607
  %v611 = vadd.f32 %v597, %v607
  %v612 = vadd.f32 %v598, %v607
  %v613 = vadd.f32 %v599, %v607
  %v614 = vadd.f32 %v600, %v607
  %v615 = vadd.f32 %v601, %v607
  %v616 = vtanh.pop %v609
  %v617 = vtanh.pop %v610
  %v618 = vtanh.pop %v611
  %v619 = vtanh.pop %v612
  %v620 = vtanh.pop %v613
  %v621 = vtanh.pop %v614
  %v622 = vtanh.pop %v615
  %vm623 = vcmask 130048
  %624 = vst.msk [vmem:[%s3] sm:$0xff] %vm623, %v616
  %625 = vst.msk [vmem:[%s3 + $0x8] sm:$0xff] %vm623, %v617
  %626 = vst.msk [vmem:[%s3 + $0x10] sm:$0xff] %vm623, %v618
  %627 = vst.msk [vmem:[%s3 + $0x18] sm:$0xff] %vm623, %v619
  %628 = vst.msk [vmem:[%s3 + $0x20] sm:$0xff] %vm623, %v620
  %629 = vst.msk [vmem:[%s3 + $0x28] sm:$0xff] %vm623, %v621
  %630 = vst.msk [vmem:[%s3 + $0x30] sm:$0xff] %vm623, %v622
  // Predicated region
  $region14: #{mode11_forward_pallas.4} parent=0 // pred_check
    _
  $region15: #{mode11_forward_pallas.4} parent=0 // pred_check_branch
    %632 = sbr.rel (0) target = $region17
  $region16: #{mode11_forward_pallas.4} parent=0 // pred_region
    _
  $region17: #{mode11_forward_pallas.4} parent=0 // pred_fallthru
    _
  // Predicated region
  $region18: #{mode11_forward_pallas.4} parent=0 // pred_check
    _
  $region19: #{mode11_forward_pallas.4} parent=0 // pred_check_branch
    %634 = sbr.rel (0) target = $region21
  $region20: #{mode11_forward_pallas.4} parent=0 // pred_region
    _
  $region21: #{mode11_forward_pallas.4} parent=0 // pred_fallthru
    _

// kernel: mode11_forward_pallas.5
$region0: #{mode11_forward_pallas.5}
  #allocation0 [shape = 'u32[]', space=smem, size = 0x4, offset = 0x4, fixed_abs, tag = 'smem constant byte address 0x4 - core index']
  #allocation1 [shape = 'u32[144,128]{1,0:T(1,128)}', space=vmem, size = 0x12000, scoped, tag = 'internal scratch']
  %s0 = inlined_call_operand.vmem [shape: f32[2,400], index: 0, kind: input, shape index: {}]
  %s1 = inlined_call_operand.vmem [shape: f32[400,120], index: 1, kind: input, shape index: {}]
  %s2 = inlined_call_operand.vmem [shape: f32[1,120], index: 2, kind: input, shape index: {}]
  %s3 = inlined_call_operand.vmem [shape: f32[120,84], index: 3, kind: input, shape index: {}]
  %s4 = inlined_call_operand.vmem [shape: f32[1,84], index: 4, kind: input, shape index: {}]
  %s5 = inlined_call_operand.vmem [shape: f32[84,10], index: 5, kind: input, shape index: {}]
  %s6 = inlined_call_operand.vmem [shape: f32[1,10], index: 6, kind: input, shape index: {}]
  %s7 = inlined_call_operand.hbm [shape: f32[2,10], index: 7, kind: output, shape index: {}]
  %s8 = sld [smem:[#allocation0]]
  $region38: #{mode11_forward_pallas.5} parent=0
    _
  %s10 = ssub.s32 1, %s8
  %s11 = scalar_select 0, %s10, %s8
  $region1: #{mode11_forward_pallas.5} parent=0
    #allocation2 [shape = 'u8[1024]{0}', space=vmem, size = 0x400, scoped, tag = 'output window, operand 0, single buffered']
    #allocation3 [shape = 's32[1]{0}', space=sflag, size = 0x4, scoped, tag = 'scoped memory for mode11_forward_pallas.5']
    %12 = vsyncpa [#allocation3], 0
    // Predicated region
    $region2: #{mode11_forward_pallas.5} parent=1 // pred_check
      _
    $region3: #{mode11_forward_pallas.5} parent=1 // pred_check_branch
      %14 = sbr.rel (0) target = $region5
    $region4: #{mode11_forward_pallas.5} parent=1 // pred_region
      _
    $region5: #{mode11_forward_pallas.5} parent=1 // pred_fallthru
      _
    // Predicated region
    $region6: #{mode11_forward_pallas.5} parent=1 // pred_check
      _
    $region7: #{mode11_forward_pallas.5} parent=1 // pred_check_branch
      %16 = sbr.rel (0) target = $region9
    $region8: #{mode11_forward_pallas.5} parent=1 // pred_region
      _
    $region9: #{mode11_forward_pallas.5} parent=1 // pred_fallthru
      _
    // Predicated region
    $region10: #{mode11_forward_pallas.5} parent=1 // pred_check
      _
    $region11: #{mode11_forward_pallas.5} parent=1 // pred_check_branch
      %18 = sbr.rel (0) target = $region13
    $region12: #{mode11_forward_pallas.5} parent=1 // pred_region
      _
    $region13: #{mode11_forward_pallas.5} parent=1 // pred_fallthru
      _
    // Predicated region
    $region14: #{mode11_forward_pallas.5} parent=1 // pred_check
      _
    $region15: #{mode11_forward_pallas.5} parent=1 // pred_check_branch
      %20 = sbr.rel (0) target = $region17
    $region16: #{mode11_forward_pallas.5} parent=1 // pred_region
      _
    $region17: #{mode11_forward_pallas.5} parent=1 // pred_fallthru
      _
    // Predicated region
    $region18: #{mode11_forward_pallas.5} parent=1 // pred_check
      _
    $region19: #{mode11_forward_pallas.5} parent=1 // pred_check_branch
      %22 = sbr.rel (0) target = $region21
    $region20: #{mode11_forward_pallas.5} parent=1 // pred_region
      _
    $region21: #{mode11_forward_pallas.5} parent=1 // pred_fallthru
      _
    // Predicated region
    $region22: #{mode11_forward_pallas.5} parent=1 // pred_check
      _
    $region23: #{mode11_forward_pallas.5} parent=1 // pred_check_branch
      %24 = sbr.rel (0) target = $region25
    $region24: #{mode11_forward_pallas.5} parent=1 // pred_region
      _
    $region25: #{mode11_forward_pallas.5} parent=1 // pred_fallthru
      _
    // Predicated region
    $region26: #{mode11_forward_pallas.5} parent=1 // pred_check
      _
    $region27: #{mode11_forward_pallas.5} parent=1 // pred_check_branch
      %26 = sbr.rel (0) target = $region29
    $region28: #{mode11_forward_pallas.5} parent=1 // pred_region
      _
    $region29: #{mode11_forward_pallas.5} parent=1 // pred_fallthru
      _
    %v27 = vld [vmem:[%s0] sm:$0xff]
    %v28 = vld [vmem:[%s1] sm:$0xff]
    %v29 = vld [vmem:[%s1 + $0x8] sm:$0xff]
    %v30 = vld [vmem:[%s1 + $0x10] sm:$0xff]
    %v31 = vld [vmem:[%s1 + $0x18] sm:$0xff]
    %v32 = vld [vmem:[%s1 + $0x20] sm:$0xff]
    %v33 = vld [vmem:[%s1 + $0x28] sm:$0xff]
    %v34 = vld [vmem:[%s1 + $0x30] sm:$0xff]
    %v35 = vld [vmem:[%s1 + $0x38] sm:$0xff]
    %v36 = vld [vmem:[%s1 + $0x40] sm:$0xff]
    %v37 = vld [vmem:[%s1 + $0x48] sm:$0xff]
    %v38 = vld [vmem:[%s1 + $0x50] sm:$0xff]
    %v39 = vld [vmem:[%s1 + $0x58] sm:$0xff]
    %v40 = vld [vmem:[%s1 + $0x60] sm:$0xff]
    %v41 = vld [vmem:[%s1 + $0x68] sm:$0xff]
    %v42 = vld [vmem:[%s1 + $0x70] sm:$0xff]
    %v43 = vld [vmem:[%s1 + $0x78] sm:$0xff]
    %v44 = vld [vmem:[%s1 + $0x80] sm:$0xff]
    %v45 = vld [vmem:[%s1 + $0x88] sm:$0xff]
    %v46 = vld [vmem:[%s1 + $0x90] sm:$0xff]
    %v47 = vld [vmem:[%s1 + $0x98] sm:$0xff]
    %v48 = vld [vmem:[%s1 + $0xa0] sm:$0xff]
    %v49 = vld [vmem:[%s1 + $0xa8] sm:$0xff]
    %v50 = vld [vmem:[%s1 + $0xb0] sm:$0xff]
    %v51 = vld [vmem:[%s1 + $0xb8] sm:$0xff]
    %v52 = vld [vmem:[%s1 + $0xc0] sm:$0xff]
    %v53 = vld [vmem:[%s1 + $0xc8] sm:$0xff]
    %v54 = vld [vmem:[%s1 + $0xd0] sm:$0xff]
    %v55 = vld [vmem:[%s1 + $0xd8] sm:$0xff]
    %v56 = vld [vmem:[%s1 + $0xe0] sm:$0xff]
    %v57 = vld [vmem:[%s1 + $0xe8] sm:$0xff]
    %v58 = vld [vmem:[%s1 + $0xf0] sm:$0xff]
    %v59 = vld [vmem:[%s1 + $0xf8] sm:$0xff]
    %v60 = vld [vmem:[%s1 + $0x100] sm:$0xff]
    %v61 = vld [vmem:[%s1 + $0x108] sm:$0xff]
    %v62 = vld [vmem:[%s1 + $0x110] sm:$0xff]
    %v63 = vld [vmem:[%s1 + $0x118] sm:$0xff]
    %v64 = vld [vmem:[%s1 + $0x120] sm:$0xff]
    %v65 = vld [vmem:[%s1 + $0x128] sm:$0xff]
    %v66 = vld [vmem:[%s1 + $0x130] sm:$0xff]
    %v67 = vld [vmem:[%s1 + $0x138] sm:$0xff]
    %v68 = vld [vmem:[%s1 + $0x140] sm:$0xff]
    %v69 = vld [vmem:[%s1 + $0x148] sm:$0xff]
    %v70 = vld [vmem:[%s1 + $0x150] sm:$0xff]
    %v71 = vld [vmem:[%s1 + $0x158] sm:$0xff]
    %v72 = vld [vmem:[%s1 + $0x160] sm:$0xff]
    %v73 = vld [vmem:[%s1 + $0x168] sm:$0xff]
    %v74 = vld [vmem:[%s1 + $0x170] sm:$0xff]
    %v75 = vld [vmem:[%s1 + $0x178] sm:$0xff]
    %v76 = vld [vmem:[%s1 + $0x180] sm:$0xff]
    %v77 = vld [vmem:[%s1 + $0x188] sm:$0xff]
    %v78 = vld [vmem:[%s2] sm:$0x1]
    %v80 = vlaneseq
    %v81 = vshrl.u32 %v80, 7
    %v82 = vsub.s32 0, %v81
    %v83 = vrot.slane %v78, %v82
    %v86 = vcombine.high %v27, %v27
    %v88 = vunpack.c.l.s4 1983009808
    %v89 = vunpack.c.0.s8 %v88
    %v90 = vlaneseq
    %v91 = vshrl.u32 %v90, 7
    %v92 = vsub.s32 %v89, %v91
    %v93 = vrot.slane %v27, %v92
    %v95 = vunpack.c.l.s4 1983009808
    %v96 = vunpack.c.0.s8 %v95
    %v97 = vlaneseq
    %v98 = vshrl.u32 %v97, 7
    %v99 = vsub.s32 %v96, %v98
    %v100 = vrot.slane %v86, %v99
    %v101 = vcombine.high %v93, %v93
    %v102 = vcombine.high %v100, %v100
    %vm106 = vcmask 130048
    %v107 = vsel %vm106, %v102, 0
    %109 = vmatprep.subr.mxu0 0.0
    %110 = vmatpush1.msra.mxu0 %v28
    %111 = vmatprep.subr.mxu0 0.0
    %112 = vmatpush1.msra.mxu0 %v29
    %113 = vmatprep.subr.mxu0 0.0
    %114 = vmatpush1.msra.mxu0 %v30
    %115 = vmatprep.subr.mxu0 0.0
    %116 = vmatpush1.msra.mxu0 %v31
    %117 = vmatprep.subr.mxu0 0.0
    %118 = vmatpush1.msra.mxu0 %v32
    %119 = vmatprep.subr.mxu0 0.0
    %120 = vmatpush1.msra.mxu0 %v33
    %121 = vmatprep.subr.mxu0 0.0
    %122 = vmatpush1.msra.mxu0 %v34
    %123 = vmatprep.subr.mxu0 0.0
    %124 = vmatpush1.msra.mxu0 %v35
    %125 = vmatprep.subr.mxu0 0.0
    %126 = vmatpush1.msra.mxu0 %v36
    %127 = vmatprep.subr.mxu0 0.0
    %128 = vmatpush1.msra.mxu0 %v37
    %129 = vmatprep.subr.mxu0 0.0
    %130 = vmatpush1.msra.mxu0 %v38
    %131 = vmatprep.subr.mxu0 0.0
    %132 = vmatpush1.msra.mxu0 %v39
    %133 = vmatprep.subr.mxu0 0.0
    %134 = vmatpush1.msra.mxu0 %v40
    %135 = vmatprep.subr.mxu0 0.0
    %136 = vmatpush1.msra.mxu0 %v41
    %137 = vmatprep.subr.mxu0 0.0
    %138 = vmatpush1.msra.mxu0 %v42
    %139 = vmatprep.subr.mxu0 0.0
    %140 = vmatpush1.msra.mxu0 %v43
    %141 = vmatprep.subr.mxu0 0.0
    %142 = vmatpush1.msra.mxu0 %v44
    %143 = vmatprep.subr.mxu0 0.0
    %144 = vmatpush1.msra.mxu0 %v45
    %145 = vmatprep.subr.mxu0 0.0
    %146 = vmatpush1.msra.mxu0 %v46
    %147 = vmatprep.subr.mxu0 0.0
    %148 = vmatpush1.msra.mxu0 %v47
    %149 = vmatprep.subr.mxu0 0.0
    %150 = vmatpush1.msra.mxu0 %v48
    %151 = vmatprep.subr.mxu0 0.0
    %152 = vmatpush1.msra.mxu0 %v49
    %153 = vmatprep.subr.mxu0 0.0
    %154 = vmatpush1.msra.mxu0 %v50
    %155 = vmatprep.subr.mxu0 0.0
    %156 = vmatpush1.msra.mxu0 %v51
    %157 = vmatprep.subr.mxu0 0.0
    %158 = vmatpush1.msra.mxu0 %v52
    %159 = vmatprep.subr.mxu0 0.0
    %160 = vmatpush1.msra.mxu0 %v53
    %161 = vmatprep.subr.mxu0 0.0
    %162 = vmatpush1.msra.mxu0 %v54
    %163 = vmatprep.subr.mxu0 0.0
    %164 = vmatpush1.msra.mxu0 %v55
    %165 = vmatprep.subr.mxu0 0.0
    %166 = vmatpush1.msra.mxu0 %v56
    %167 = vmatprep.subr.mxu0 0.0
    %168 = vmatpush1.msra.mxu0 %v57
    %169 = vmatprep.subr.mxu0 0.0
    %170 = vmatpush1.msra.mxu0 %v58
    %171 = vmatprep.subr.mxu0 0.0
    %172 = vmatpush1.msra.mxu0 %v59
    %173 = vmatprep.mubr.f32.mxu0 %v101
    %174 = vmatmul.mubr.f32.gmra.mrb[0].mxu0 %v93
    %v175 = vpop.f32.mrb[0].mxu0
    %v176 = vadd.f32 %v83, %v175
    %v177 = vpop.f32.mrb[0].mxu0
    %178 = vdwg.mxu0
    %179 = vmatprep.subr.mxu0 0.0
    %180 = vmatpush1.msra.mxu0 %v60
    %181 = vmatprep.subr.mxu0 0.0
    %182 = vmatpush1.msra.mxu0 %v61
    %183 = vmatprep.subr.mxu0 0.0
    %184 = vmatpush1.msra.mxu0 %v62
    %185 = vmatprep.subr.mxu0 0.0
    %186 = vmatpush1.msra.mxu0 %v63
    %187 = vmatprep.subr.mxu0 0.0
    %188 = vmatpush1.msra.mxu0 %v64
    %189 = vmatprep.subr.mxu0 0.0
    %190 = vmatpush1.msra.mxu0 %v65
    %191 = vmatprep.subr.mxu0 0.0
    %192 = vmatpush1.msra.mxu0 %v66
    %193 = vmatprep.subr.mxu0 0.0
    %194 = vmatpush1.msra.mxu0 %v67
    %195 = vmatprep.subr.mxu0 0.0
    %196 = vmatpush1.msra.mxu0 %v68
    %197 = vmatprep.subr.mxu0 0.0
    %198 = vmatpush1.msra.mxu0 %v69
    %199 = vmatprep.subr.mxu0 0.0
    %200 = vmatpush1.msra.mxu0 %v70
    %201 = vmatprep.subr.mxu0 0.0
    %202 = vmatpush1.msra.mxu0 %v71
    %203 = vmatprep.subr.mxu0 0.0
    %204 = vmatpush1.msra.mxu0 %v72
    %205 = vmatprep.subr.mxu0 0.0
    %206 = vmatpush1.msra.mxu0 %v73
    %207 = vmatprep.subr.mxu0 0.0
    %208 = vmatpush1.msra.mxu0 %v74
    %209 = vmatprep.subr.mxu0 0.0
    %210 = vmatpush1.msra.mxu0 %v75
    %211 = vmatprep.subr.mxu0 0.0
    %212 = vmatpush1.msra.mxu0 %v76
    %213 = vmatprep.subr.mxu0 0.0
    %214 = vmatpush1.msra.mxu0 %v77
    %215 = vmatprep.subr.mxu0 0.0
    %216 = vmatpush1.msra.mxu0 0.0
    %217 = vmatprep.subr.mxu0 0.0
    %218 = vmatpush1.msra.mxu0 0.0
    %219 = vmatprep.subr.mxu0 0.0
    %220 = vmatpush1.msra.mxu0 0.0
    %221 = vmatprep.subr.mxu0 0.0
    %222 = vmatpush1.msra.mxu0 0.0
    %223 = vmatprep.subr.mxu0 0.0
    %224 = vmatpush1.msra.mxu0 0.0
    %225 = vmatprep.subr.mxu0 0.0
    %226 = vmatpush1.msra.mxu0 0.0
    %227 = vmatprep.subr.mxu0 0.0
    %228 = vmatpush1.msra.mxu0 0.0
    %229 = vmatprep.subr.mxu0 0.0
    %230 = vmatpush1.msra.mxu0 0.0
    %231 = vmatprep.subr.mxu0 0.0
    %232 = vmatpush1.msra.mxu0 0.0
    %233 = vmatprep.subr.mxu0 0.0
    %234 = vmatpush1.msra.mxu0 0.0
    %235 = vmatprep.subr.mxu0 0.0
    %236 = vmatpush1.msra.mxu0 0.0
    %237 = vmatprep.subr.mxu0 0.0
    %238 = vmatpush1.msra.mxu0 0.0
    %239 = vmatprep.subr.mxu0 0.0
    %240 = vmatpush1.msra.mxu0 0.0
    %241 = vmatprep.subr.mxu0 0.0
    %242 = vmatpush1.msra.mxu0 0.0
    %243 = vmatprep.mubr.f32.mxu0 %v107
    %244 = vmatmul.mubr.f32.gmra.mrb[0].mxu0 %v100
    %v245 = vpop.f32.mrb[0].mxu0
    %v246 = vadd.f32 %v176, %v245
    %v247 = vpop.f32.mrb[0].mxu0
    %248 = vdwg.mxu0
    %v249 = vtanh.pop %v246
    %v250 = vld [vmem:[%s3] sm:$0xff]
    %v251 = vld [vmem:[%s3 + $0x8] sm:$0xff]
    %v252 = vld [vmem:[%s3 + $0x10] sm:$0xff]
    %v253 = vld [vmem:[%s3 + $0x18] sm:$0xff]
    %v254 = vld [vmem:[%s3 + $0x20] sm:$0xff]
    %v255 = vld [vmem:[%s3 + $0x28] sm:$0xff]
    %v256 = vld [vmem:[%s3 + $0x30] sm:$0xff]
    %v257 = vld [vmem:[%s3 + $0x38] sm:$0xff]
    %v258 = vld [vmem:[%s3 + $0x40] sm:$0xff]
    %v259 = vld [vmem:[%s3 + $0x48] sm:$0xff]
    %v260 = vld [vmem:[%s3 + $0x50] sm:$0xff]
    %v261 = vld [vmem:[%s3 + $0x58] sm:$0xff]
    %v262 = vld [vmem:[%s3 + $0x60] sm:$0xff]
    %v263 = vld [vmem:[%s3 + $0x68] sm:$0xff]
    %v264 = vld [vmem:[%s3 + $0x70] sm:$0xff]
    %v265 = vld [vmem:[%s4] sm:$0x1]
    %v267 = vlaneseq
    %v268 = vshrl.u32 %v267, 7
    %v269 = vsub.s32 0, %v268
    %v270 = vrot.slane %v265, %v269
    %vm272 = vcmask 982016
    %v274 = vsel %vm272, %v249, 0
    %276 = vmatprep.subr.mxu0 0.0
    %277 = vmatpush1.msra.mxu0 %v250
    %278 = vmatprep.subr.mxu0 0.0
    %279 = vmatpush1.msra.mxu0 %v251
    %280 = vmatprep.subr.mxu0 0.0
    %281 = vmatpush1.msra.mxu0 %v252
    %282 = vmatprep.subr.mxu0 0.0
    %283 = vmatpush1.msra.mxu0 %v253
    %284 = vmatprep.subr.mxu0 0.0
    %285 = vmatpush1.msra.mxu0 %v254
    %286 = vmatprep.subr.mxu0 0.0
    %287 = vmatpush1.msra.mxu0 %v255
    %288 = vmatprep.subr.mxu0 0.0
    %289 = vmatpush1.msra.mxu0 %v256
    %290 = vmatprep.subr.mxu0 0.0
    %291 = vmatpush1.msra.mxu0 %v257
    %292 = vmatprep.subr.mxu0 0.0
    %293 = vmatpush1.msra.mxu0 %v258
    %294 = vmatprep.subr.mxu0 0.0
    %295 = vmatpush1.msra.mxu0 %v259
    %296 = vmatprep.subr.mxu0 0.0
    %297 = vmatpush1.msra.mxu0 %v260
    %298 = vmatprep.subr.mxu0 0.0
    %299 = vmatpush1.msra.mxu0 %v261
    %300 = vmatprep.subr.mxu0 0.0
    %301 = vmatpush1.msra.mxu0 %v262
    %302 = vmatprep.subr.mxu0 0.0
    %303 = vmatpush1.msra.mxu0 %v263
    %304 = vmatprep.subr.mxu0 0.0
    %305 = vmatpush1.msra.mxu0 %v264
    %306 = vmatprep.subr.mxu0 0.0
    %307 = vmatpush1.msra.mxu0 0.0
    %308 = vmatprep.subr.mxu0 0.0
    %309 = vmatpush1.msra.mxu0 0.0
    %310 = vmatprep.subr.mxu0 0.0
    %311 = vmatpush1.msra.mxu0 0.0
    %312 = vmatprep.subr.mxu0 0.0
    %313 = vmatpush1.msra.mxu0 0.0
    %314 = vmatprep.subr.mxu0 0.0
    %315 = vmatpush1.msra.mxu0 0.0
    %316 = vmatprep.subr.mxu0 0.0
    %317 = vmatpush1.msra.mxu0 0.0
    %318 = vmatprep.subr.mxu0 0.0
    %319 = vmatpush1.msra.mxu0 0.0
    %320 = vmatprep.subr.mxu0 0.0
    %321 = vmatpush1.msra.mxu0 0.0
    %322 = vmatprep.subr.mxu0 0.0
    %323 = vmatpush1.msra.mxu0 0.0
    %324 = vmatprep.subr.mxu0 0.0
    %325 = vmatpush1.msra.mxu0 0.0
    %326 = vmatprep.subr.mxu0 0.0
    %327 = vmatpush1.msra.mxu0 0.0
    %328 = vmatprep.subr.mxu0 0.0
    %329 = vmatpush1.msra.mxu0 0.0
    %330 = vmatprep.subr.mxu0 0.0
    %331 = vmatpush1.msra.mxu0 0.0
    %332 = vmatprep.subr.mxu0 0.0
    %333 = vmatpush1.msra.mxu0 0.0
    %334 = vmatprep.subr.mxu0 0.0
    %335 = vmatpush1.msra.mxu0 0.0
    %336 = vmatprep.subr.mxu0 0.0
    %337 = vmatpush1.msra.mxu0 0.0
    %338 = vmatprep.subr.mxu0 0.0
    %339 = vmatpush1.msra.mxu0 0.0
    %340 = vmatprep.mubr.f32.mxu0 0.0
    %341 = vmatmul.mubr.f32.gmra.mrb[0].mxu0 %v274
    %v342 = vpop.f32.mrb[0].mxu0
    %v343 = vadd.f32 %v270, %v342
    %v344 = vpop.f32.mrb[0].mxu0
    %345 = vdwg.mxu0
    %v346 = vtanh.pop %v343
    %v347 = vld [vmem:[%s5] sm:$0xff]
    %v348 = vld [vmem:[%s5 + $0x8] sm:$0xff]
    %v349 = vld [vmem:[%s5 + $0x10] sm:$0xff]
    %v350 = vld [vmem:[%s5 + $0x18] sm:$0xff]
    %v351 = vld [vmem:[%s5 + $0x20] sm:$0xff]
    %v352 = vld [vmem:[%s5 + $0x28] sm:$0xff]
    %v353 = vld [vmem:[%s5 + $0x30] sm:$0xff]
    %v354 = vld [vmem:[%s5 + $0x38] sm:$0xff]
    %v355 = vld [vmem:[%s5 + $0x40] sm:$0xff]
    %v356 = vld [vmem:[%s5 + $0x48] sm:$0xff]
    %v357 = vld [vmem:[%s5 + $0x50] sm:$0xf]
    %v358 = vld [vmem:[%s6] sm:$0x1]
    %v360 = vlaneseq
    %v361 = vshrl.u32 %v360, 7
    %v362 = vsub.s32 0, %v361
    %v363 = vrot.slane %v358, %v362
    %vm365 = vcmask 687104
    %v367 = vsel %vm365, %v346, 0
    %vm369 = vcmask 1043456
    %v371 = vsel %vm369, %v357, 0
    %373 = vmatprep.subr.mxu0 0.0
    %374 = vmatpush1.msra.mxu0 %v347
    %375 = vmatprep.subr.mxu0 0.0
    %376 = vmatpush1.msra.mxu0 %v348
    %377 = vmatprep.subr.mxu0 0.0
    %378 = vmatpush1.msra.mxu0 %v349
    %379 = vmatprep.subr.mxu0 0.0
    %380 = vmatpush1.msra.mxu0 %v350
    %381 = vmatprep.subr.mxu0 0.0
    %382 = vmatpush1.msra.mxu0 %v351
    %383 = vmatprep.subr.mxu0 0.0
    %384 = vmatpush1.msra.mxu0 %v352
    %385 = vmatprep.subr.mxu0 0.0
    %386 = vmatpush1.msra.mxu0 %v353
    %387 = vmatprep.subr.mxu0 0.0
    %388 = vmatpush1.msra.mxu0 %v354
    %389 = vmatprep.subr.mxu0 0.0
    %390 = vmatpush1.msra.mxu0 %v355
    %391 = vmatprep.subr.mxu0 0.0
    %392 = vmatpush1.msra.mxu0 %v356
    %393 = vmatprep.subr.mxu0 0.0
    %394 = vmatpush1.msra.mxu0 %v371
    %395 = vmatprep.subr.mxu0 0.0
    %396 = vmatpush1.msra.mxu0 0.0
    %397 = vmatprep.subr.mxu0 0.0
    %398 = vmatpush1.msra.mxu0 0.0
    %399 = vmatprep.subr.mxu0 0.0
    %400 = vmatpush1.msra.mxu0 0.0
    %401 = vmatprep.subr.mxu0 0.0
    %402 = vmatpush1.msra.mxu0 0.0
    %403 = vmatprep.subr.mxu0 0.0
    %404 = vmatpush1.msra.mxu0 0.0
    %405 = vmatprep.subr.mxu0 0.0
    %406 = vmatpush1.msra.mxu0 0.0
    %407 = vmatprep.subr.mxu0 0.0
    %408 = vmatpush1.msra.mxu0 0.0
    %409 = vmatprep.subr.mxu0 0.0
    %410 = vmatpush1.msra.mxu0 0.0
    %411 = vmatprep.subr.mxu0 0.0
    %412 = vmatpush1.msra.mxu0 0.0
    %413 = vmatprep.subr.mxu0 0.0
    %414 = vmatpush1.msra.mxu0 0.0
    %415 = vmatprep.subr.mxu0 0.0
    %416 = vmatpush1.msra.mxu0 0.0
    %417 = vmatprep.subr.mxu0 0.0
    %418 = vmatpush1.msra.mxu0 0.0
    %419 = vmatprep.subr.mxu0 0.0
    %420 = vmatpush1.msra.mxu0 0.0
    %421 = vmatprep.subr.mxu0 0.0
    %422 = vmatpush1.msra.mxu0 0.0
    %423 = vmatprep.subr.mxu0 0.0
    %424 = vmatpush1.msra.mxu0 0.0
    %425 = vmatprep.subr.mxu0 0.0
    %426 = vmatpush1.msra.mxu0 0.0
    %427 = vmatprep.subr.mxu0 0.0
    %428 = vmatpush1.msra.mxu0 0.0
    %429 = vmatprep.subr.mxu0 0.0
    %430 = vmatpush1.msra.mxu0 0.0
    %431 = vmatprep.subr.mxu0 0.0
    %432 = vmatpush1.msra.mxu0 0.0
    %433 = vmatprep.subr.mxu0 0.0
    %434 = vmatpush1.msra.mxu0 0.0
    %435 = vmatprep.subr.mxu0 0.0
    %436 = vmatpush1.msra.mxu0 0.0
    %437 = vmatprep.mubr.f32.mxu0 0.0
    %438 = vmatmul.mubr.f32.gmra.mrb[0].mxu0 %v367
    %v439 = vpop.f32.mrb[0].mxu0
    %v440 = vadd.f32 %v363, %v439
    %v441 = vpop.f32.mrb[0].mxu0
    %442 = vdwg.mxu0
    %vm443 = vcmask 74752
    %444 = vst.msk [vmem:[#allocation2] sm:$0x3] %vm443, %v440
    // Predicated region
    $region30: #{mode11_forward_pallas.5} parent=1 // pred_check
      _
    $region31: #{mode11_forward_pallas.5} parent=1 // pred_check_branch
      %446 = sbr.rel (0) target = $region33
    $region32: #{mode11_forward_pallas.5} parent=1 // pred_region
      %s448 = ssub.s32 32, 32
      %449 = vsyncadd [#allocation3], %s448
      %s451 = sshll.u32 [#allocation2], 4
      %s452 = int_to_ptr.vmem [resolvable:$true] %s451
      %454 = dma.vmem_to_hbm [thread:$0]  %s452, 32, %s7, [#allocation3]
    $region33: #{mode11_forward_pallas.5} parent=1 // pred_fallthru
      _
    // Predicated region
    $region34: #{mode11_forward_pallas.5} parent=1 // pred_check
      _
    $region35: #{mode11_forward_pallas.5} parent=1 // pred_check_branch
      %456 = sbr.rel (0) target = $region37
    $region36: #{mode11_forward_pallas.5} parent=1 // pred_region
      %457 = dma.done [#allocation3], 32
    $region37: #{mode11_forward_pallas.5} parent=1 // pred_fallthru
      _
    %458 = vsyncpa [#allocation3], 1

</llo_original>
